<compile_context>
chip_gen: v7x
topology: tpu7x:2x2x1
jax: 0.10.0
libtpu: 0.0.40
codegen_flags: <defaults>
</compile_context>

<pallas_src>
from functools import partial

import jax
import jax.numpy as jnp
from jax import lax
from jax.experimental import pallas as pl
from jax.experimental.pallas import tpu as pltpu


# ----------------------------- fused Pallas kernel ---------------------------

def _prebottleneck_kernel(x_ref, s1_ref, b1_ref, w1_ref, s2_ref, b2_ref,
                          w2_ref, s3_ref, b3_ref, w3_ref, o_ref, t_scr,
                          *, W, Hr):
    """One (batch, row-tile) step of
    bn1->relu->conv1(1x1)->bn2->relu->conv2(3x3,p=1)->bn3->relu->conv3(1x1)->+res.

    x_ref holds the full (1, H*W, Cin) bf16 block for this batch element (kept
    resident across row tiles); o_ref is the (1, Hr*W, Cout) bf16 output tile.
    t_scr is the (Hr+2, Wpad, P) bf16 conv2 staging scratch with a 1-px halo.
    """
    P = w1_ref.shape[1]
    r = pl.program_id(1)              # row-tile index
    n_row_tiles = pl.num_programs(1)
    hw_tile = Hr * W

    tile_aligned = (hw_tile % 8 == 0)
    row_aligned = (W % 8 == 0)

    def rows(start, nrows, aligned):
        # Slice `nrows` spatial rows (flattened) out of the resident x block.
        if aligned:
            start = pl.multiple_of(start, 8)
        return x_ref[0, pl.ds(start, nrows), :]

    def stage1(xr):
        # bn1 + relu in f32 on the VPU, conv1 (1x1 == matmul) on the MXU with
        # bf16 operands / f32 accumulation, then bn2 + relu in f32 -> bf16.
        a = jnp.maximum(xr.astype(jnp.float32) * s1_ref[...] + b1_ref[...], 0.0)
        t = jnp.dot(a.astype(jnp.bfloat16), w1_ref[...],
                    preferred_element_type=jnp.float32)
        return jnp.maximum(t * s2_ref[...] + b2_ref[...], 0.0).astype(jnp.bfloat16)

    # ---- stage 1 for the Hr interior rows of this tile ----------------------
    ti = stage1(rows(r * hw_tile, hw_tile, tile_aligned))
    t_scr[1:Hr + 1, 1:W + 1, :] = ti.reshape(Hr, W, P)

    # ---- zero ONLY the left/right halo columns (interior fully overwritten) -
    zcol = jnp.zeros((Hr + 2, 1, P), jnp.bfloat16)
    t_scr[:, 0:1, :] = zcol
    t_scr[:, W + 1:W + 2, :] = zcol

    zrow = jnp.zeros((1, W, P), jnp.bfloat16)

    # ---- top halo row: recompute from the neighbouring x row, or zero -------
    @pl.when(r > 0)
    def _():
        th = stage1(rows((r * Hr - 1) * W, W, row_aligned))
        t_scr[0:1, 1:W + 1, :] = th.reshape(1, W, P)

    @pl.when(r == 0)
    def _():
        t_scr[0:1, 1:W + 1, :] = zrow

    # ---- bottom halo row -----------------------------------------------------
    @pl.when(r < n_row_tiles - 1)
    def _():
        bh = stage1(rows((r + 1) * hw_tile, W, row_aligned))
        t_scr[Hr + 1:Hr + 2, 1:W + 1, :] = bh.reshape(1, W, P)

    @pl.when(r == n_row_tiles - 1)
    def _():
        t_scr[Hr + 1:Hr + 2, 1:W + 1, :] = zrow

    # ---- conv2 (3x3, pad=1, stride=1) ---------------------------------------
    if 9 * P <= 128:
        # Tiny channel count: fold the 9 taps into K = 9P (single MXU matmul).
        patches = jnp.concatenate(
            [t_scr[dy:dy + Hr, dx:dx + W, :].reshape(hw_tile, P)
             for dy in range(3) for dx in range(3)],
            axis=-1)
        z = jnp.dot(patches, w2_ref[...], preferred_element_type=jnp.float32)
    else:
        # Realistic channel widths: 9 accumulated dots, no im2col materialization
        # (strictly less data movement; same MXU push count for P >= 128).
        z = None
        for dy in range(3):
            for dx in range(3):
                tap = dy * 3 + dx
                a_tap = t_scr[dy:dy + Hr, dx:dx + W, :].reshape(hw_tile, P)
                part = jnp.dot(a_tap, w2_ref[tap * P:(tap + 1) * P, :],
                               preferred_element_type=jnp.float32)
                z = part if z is None else z + part

    # ---- bn3 + relu (f32), conv3 (1x1), residual add (f32) -------------------
    z = jnp.maximum(z * s3_ref[...] + b3_ref[...], 0.0).astype(jnp.bfloat16)
    out = jnp.dot(z, w3_ref[...], preferred_element_type=jnp.float32)
    # Re-read the residual from the VMEM-resident input block (cheap vld) rather
    # than keeping it live across all three matmuls.
    res = rows(r * hw_tile, hw_tile, tile_aligned).astype(jnp.float32)
    o_ref[0] = (out + res).astype(o_ref.dtype)


# ------------------------------- host wrappers --------------------------------

def _bn_fold(gamma, beta, mean, var, eps=1e-5):
    s = gamma / jnp.sqrt(var + eps)
    b = beta - mean * s
    return s.reshape(1, -1).astype(jnp.float32), b.reshape(1, -1).astype(jnp.float32)


def prepare_prebottleneck(params, eps=1e-5):
    """One-time prep (hoisted out of the per-call path): BN folding + weight
    reshape/transpose + bf16 cast into the matmul layouts the kernel expects."""
    s1, b1 = _bn_fold(*params["bn1"], eps)
    s2, b2 = _bn_fold(*params["bn2"], eps)
    s3, b3 = _bn_fold(*params["bn3"], eps)
    w1 = params["conv1"][:, :, 0, 0].T.astype(jnp.bfloat16)                  # (Cin, P)
    P = w1.shape[1]
    # (out, in, kh, kw) -> (kh, kw, in, out) -> (9P, P): tap index major,
    # matching the [dy, dx, channel] ordering used in the kernel.
    w2 = jnp.transpose(params["conv2"], (2, 3, 1, 0)).astype(jnp.bfloat16)
    w2 = w2.reshape(9 * P, P)                                                # (9P, P)
    w3 = params["conv3"][:, :, 0, 0].T.astype(jnp.bfloat16)                  # (P, 4P)
    return dict(s1=s1, b1=b1, w1=w1, s2=s2, b2=b2, w2=w2, s3=s3, b3=b3, w3=w3)


def _pick_row_tile(H, W):
    # At least two row tiles when H allows it (feeds both v7x TensorCores and
    # shrinks per-step VMEM); require a sublane-friendly Hr*W, else fall back to H.
    for hr in range(H // 2, 0, -1):
        if H % hr == 0 and (hr * W) % 8 == 0:
            return hr
    return H


def _clamp_vmem_limit(requested_bytes):
    cap = 48 << 20                        # safe under v7x's 64 MiB physical VMEM
    try:
        info = pltpu.get_tpu_info()
        cap = max(cap, (int(info.vmem_capacity_bytes) * 3) // 4)   # 96 MiB on v5e/v6e
    except Exception:
        pass
    return int(max(16 << 20, min(requested_bytes, cap)))


def pre_bottleneck_flat(x_flat, prep, H, W, row_tile=None):
    """Core fused op on (N, H*W, Cin) bf16 activations; returns (N, H*W, Cout) bf16."""
    N, HW, Cin = x_flat.shape
    assert HW == H * W
    x_flat = x_flat.astype(jnp.bfloat16)

    P = prep["w1"].shape[1]
    Cout = prep["w3"].shape[1]
    assert Cout == Cin, "downsample=None requires inplanes == planes * expansion"

    Hr = row_tile if row_tile is not None else _pick_row_tile(H, W)
    assert H % Hr == 0, "row_tile must divide H"
    assert (Hr * W) % 8 == 0 or Hr == H, "row tile must be sublane-friendly"
    R = H // Hr
    Wpad = ((W + 2 + 7) // 8) * 8          # sublane-pad the scratch width

    # VMEM budget derived from the actual footprint (double-buffered blocks +
    # weights + scratch + in-flight intermediates), clamped per-chip.
    bf16, f32 = 2, 4
    x_blk = H * W * Cin * bf16
    o_blk = Hr * W * Cout * bf16
    w_blk = (Cin * P + 9 * P * P + P * Cout) * bf16 + (2 * Cin + 4 * P) * f32
    scr_blk = (Hr + 2) * Wpad * P * bf16
    live = Hr * W * (Cin + 9 * P + 2 * Cout) * f32
    need = 2 * (x_blk + o_blk + w_blk) + scr_blk + live
    vmem_limit = _clamp_vmem_limit(2 * need + (8 << 20))

    kernel = partial(_prebottleneck_kernel, W=W, Hr=Hr)

    return pl.pallas_call(
        kernel,
        out_shape=jax.ShapeDtypeStruct((N, H * W, Cout), jnp.bfloat16),
        grid=(N, R),
        in_specs=[
            # Full batch-element block, resident across the row-tile axis (the
            # 1-row conv2 halo is recomputed from it in-kernel).
            pl.BlockSpec((1, H * W, Cin), lambda n, r: (n, 0, 0)),   # x (+residual)
            pl.BlockSpec((1, Cin), lambda n, r: (0, 0)),             # s1
            pl.BlockSpec((1, Cin), lambda n, r: (0, 0)),             # b1
            pl.BlockSpec((Cin, P), lambda n, r: (0, 0)),             # w1
            pl.BlockSpec((1, P), lambda n, r: (0, 0)),               # s2
            pl.BlockSpec((1, P), lambda n, r: (0, 0)),               # b2
            pl.BlockSpec((9 * P, P), lambda n, r: (0, 0)),           # w2 (taps folded)
            pl.BlockSpec((1, P), lambda n, r: (0, 0)),               # s3
            pl.BlockSpec((1, P), lambda n, r: (0, 0)),               # b3
            pl.BlockSpec((P, Cout), lambda n, r: (0, 0)),            # w3
        ],
        out_specs=pl.BlockSpec((1, Hr * W, Cout), lambda n, r: (n, r, 0)),
        scratch_shapes=[pltpu.VMEM((Hr + 2, Wpad, P), jnp.bfloat16)],
        compiler_params=pltpu.CompilerParams(
            dimension_semantics=("parallel", "parallel"),
            vmem_limit_bytes=vmem_limit,
        ),
    )(x_flat, prep["s1"], prep["b1"], prep["w1"], prep["s2"], prep["b2"],
      prep["w2"], prep["s3"], prep["b3"], prep["w3"])


def pre_bottleneck_pallas(x_nchw, prep, row_tile=None):
    """NCHW adapter (PyTorch convention).
    TODO(synk): in a full network keep NHWC/(N, H*W, C) end-to-end and drop these
    per-call transposes (each one is a full HBM read+write of the activations)."""
    N, Cin, H, W = x_nchw.shape
    x = jnp.transpose(x_nchw, (0, 2, 3, 1)).reshape(N, H * W, Cin)
    out = pre_bottleneck_flat(x.astype(jnp.bfloat16), prep, H, W, row_tile)
    return jnp.transpose(out.reshape(N, H, W, -1), (0, 3, 1, 2))


# ----------------------------- pure-JAX reference ----------------------------

def pre_bottleneck_ref(x, params, eps=1e-5):
    def bn(v, g, b, m, var):
        g, b, m, var = (a[None, :, None, None] for a in (g, b, m, var))
        return (v - m) / jnp.sqrt(var + eps) * g + b

    def conv(v, w, pad):
        return lax.conv_general_dilated(
            v, w, window_strides=(1, 1), padding=pad,
            dimension_numbers=("NCHW", "OIHW", "NCHW"))

    residual = x
    out = jax.nn.relu(bn(x, *params["bn1"]))
    out = conv(out, params["conv1"], "VALID")
    out = jax.nn.relu(bn(out, *params["bn2"]))
    out = conv(out, params["conv2"], ((1, 1), (1, 1)))
    out = jax.nn.relu(bn(out, *params["bn3"]))
    out = conv(out, params["conv3"], "VALID")
    return out + residual


# ------------------------------------ main -----------------------------------

if __name__ == "__main__":
    key = jax.random.PRNGKey(0)
    planes = 4
    inplanes = planes * 4          # 16 -> residual add works, downsample=None
    N, H, W = 2, 16, 16

    ks = list(jax.random.split(key, 16))

    def bn_params(kg, kb, km, kv, c):
        gamma = jax.random.uniform(kg, (c,), minval=0.5, maxval=1.5)
        beta = 0.1 * jax.random.normal(kb, (c,))
        mean = 0.1 * jax.random.normal(km, (c,))
        var = jax.random.uniform(kv, (c,), minval=0.5, maxval=1.5)
        return gamma, beta, mean, var

    params = {
        "bn1": bn_params(ks[0], ks[1], ks[2], ks[3], inplanes),
        "conv1": 0.1 * jax.random.normal(ks[4], (planes, inplanes, 1, 1)),
        "bn2": bn_params(ks[5], ks[6], ks[7], ks[8], planes),
        "conv2": 0.1 * jax.random.normal(ks[9], (planes, planes, 3, 3)),
        "bn3": bn_params(ks[10], ks[11], ks[12], ks[13], planes),
        "conv3": 0.1 * jax.random.normal(ks[14], (planes * 4, planes, 1, 1)),
    }

    x = jax.random.normal(ks[15], (N, inplanes, H, W), dtype=jnp.float32)
    # Kernel activations are bf16; round the input once so both paths see the
    # exact same values and the comparison only measures bf16-weight/matmul error.
    x = x.astype(jnp.bfloat16).astype(jnp.float32)

    prep = prepare_prebottleneck(params)      # one-time weight/BN prep (hoisted)

    # Row-tiled run (default picks 2 row tiles here -> grid (2, 2), halo recompute).
    out_tiled = jax.block_until_ready(pre_bottleneck_pallas(x, prep))
    # Single-tile run (row_tile == H) exercises the degenerate R == 1 path.
    out_full = jax.block_until_ready(pre_bottleneck_pallas(x, prep, row_tile=H))

    ref = pre_bottleneck_ref(x, params)

    assert out_tiled.shape == (N, planes * 4, H, W)
    assert out_full.shape == (N, planes * 4, H, W)
    # bf16 matmul operands / activations (f32 accumulation) -> relaxed tolerance.
    assert jnp.allclose(out_tiled.astype(jnp.float32), ref, atol=3e-2, rtol=3e-2), \
        "row-tiled kernel mismatch vs JAX reference"
    assert jnp.allclose(out_full.astype(jnp.float32), ref, atol=3e-2, rtol=3e-2), \
        "single-tile kernel mismatch vs JAX reference"

    print("KERNEL_OK")
</pallas_src>

<mosaic_0001>
module attributes {stable_mosaic.version = 11 : i64} {
  func.func @_prebottleneck_kernel(%arg0: i32, %arg1: i32, %arg2: memref<1x256x16xbf16, #tpu.memory_space<vmem>>, %arg3: memref<1x16xf32, #tpu.memory_space<vmem>>, %arg4: memref<1x16xf32, #tpu.memory_space<vmem>>, %arg5: memref<16x4xbf16, #tpu.memory_space<vmem>>, %arg6: memref<1x4xf32, #tpu.memory_space<vmem>>, %arg7: memref<1x4xf32, #tpu.memory_space<vmem>>, %arg8: memref<36x4xbf16, #tpu.memory_space<vmem>>, %arg9: memref<1x4xf32, #tpu.memory_space<vmem>>, %arg10: memref<1x4xf32, #tpu.memory_space<vmem>>, %arg11: memref<4x16xbf16, #tpu.memory_space<vmem>>, %arg12: memref<1x128x16xbf16, #tpu.memory_space<vmem>>, %arg13: memref<10x24x4xbf16, #tpu.memory_space<vmem>>) attributes {dimension_semantics = [#tpu.dimension_semantics<parallel>, #tpu.dimension_semantics<parallel>], iteration_bounds = array<i64: 2, 2>, scalar_prefetch = 0 : i64, scratch_operands = 1 : i64, tpu.core_type = #tpu.core_type<tc>, window_params = [{transform_indices = @transform_0, window_bounds = array<i64: 1, 256, 16>}, {pipeline_mode = #tpu.pipeline_mode<synchronous>, transform_indices = @transform_1, window_bounds = array<i64: 1, 16>}, {pipeline_mode = #tpu.pipeline_mode<synchronous>, transform_indices = @transform_2, window_bounds = array<i64: 1, 16>}, {pipeline_mode = #tpu.pipeline_mode<synchronous>, transform_indices = @transform_3, window_bounds = array<i64: 16, 4>}, {pipeline_mode = #tpu.pipeline_mode<synchronous>, transform_indices = @transform_4, window_bounds = array<i64: 1, 4>}, {pipeline_mode = #tpu.pipeline_mode<synchronous>, transform_indices = @transform_5, window_bounds = array<i64: 1, 4>}, {pipeline_mode = #tpu.pipeline_mode<synchronous>, transform_indices = @transform_6, window_bounds = array<i64: 36, 4>}, {pipeline_mode = #tpu.pipeline_mode<synchronous>, transform_indices = @transform_7, window_bounds = array<i64: 1, 4>}, {pipeline_mode = #tpu.pipeline_mode<synchronous>, transform_indices = @transform_8, window_bounds = array<i64: 1, 4>}, {pipeline_mode = #tpu.pipeline_mode<synchronous>, transform_indices = @transform_9, window_bounds = array<i64: 4, 16>}, {transform_indices = @transform_10, window_bounds = array<i64: 1, 128, 16>}]} {
    %c128_i32 = arith.constant 128 : i32
    %0 = arith.muli %arg1, %c128_i32 : i32
    %1 = tpu.assume_multiple %0, 8 : i32
    %c0 = arith.constant 0 : index
    %2 = arith.index_cast %1 : i32 to index
    %c0_0 = arith.constant 0 : index
    %3 = vector.load %arg2[%c0, %2, %c0_0] : memref<1x256x16xbf16, #tpu.memory_space<vmem>>, vector<1x128x16xbf16>
    %4 = vector.shape_cast %3 : vector<1x128x16xbf16> to vector<128x16xbf16>
    %5 = arith.extf %4 : vector<128x16xbf16> to vector<128x16xf32>
    %c0_1 = arith.constant 0 : index
    %c0_2 = arith.constant 0 : index
    %6 = vector.load %arg3[%c0_1, %c0_2] : memref<1x16xf32, #tpu.memory_space<vmem>>, vector<1x16xf32>
    %7 = vector.broadcast %6 : vector<1x16xf32> to vector<128x16xf32>
    %8 = arith.mulf %5, %7 : vector<128x16xf32>
    %c0_3 = arith.constant 0 : index
    %c0_4 = arith.constant 0 : index
    %9 = vector.load %arg4[%c0_3, %c0_4] : memref<1x16xf32, #tpu.memory_space<vmem>>, vector<1x16xf32>
    %10 = vector.broadcast %9 : vector<1x16xf32> to vector<128x16xf32>
    %11 = arith.addf %8, %10 : vector<128x16xf32>
    %cst = arith.constant 0.000000e+00 : f32
    %12 = vector.broadcast %cst : f32 to vector<128x16xf32>
    %13 = arith.maximumf %11, %12 : vector<128x16xf32>
    %14 = arith.truncf %13 : vector<128x16xf32> to vector<128x16xbf16>
    %c0_5 = arith.constant 0 : index
    %c0_6 = arith.constant 0 : index
    %15 = vector.load %arg5[%c0_5, %c0_6] : memref<16x4xbf16, #tpu.memory_space<vmem>>, vector<16x4xbf16>
    %cst_7 = arith.constant dense<0.000000e+00> : vector<128x4xf32>
    %16 = tpu.matmul %14, %15, %cst_7 {dimension_numbers = #tpu.dot_dimension_numbers<[1], [0], [0], [1], [0, 0, 1, 1], [], []>} : vector<128x16xbf16>, vector<16x4xbf16>, vector<128x4xf32> -> vector<128x4xf32>
    %c0_8 = arith.constant 0 : index
    %c0_9 = arith.constant 0 : index
    %17 = vector.load %arg6[%c0_8, %c0_9] : memref<1x4xf32, #tpu.memory_space<vmem>>, vector<1x4xf32>
    %18 = vector.broadcast %17 : vector<1x4xf32> to vector<128x4xf32>
    %19 = arith.mulf %16, %18 : vector<128x4xf32>
    %c0_10 = arith.constant 0 : index
    %c0_11 = arith.constant 0 : index
    %20 = vector.load %arg7[%c0_10, %c0_11] : memref<1x4xf32, #tpu.memory_space<vmem>>, vector<1x4xf32>
    %21 = vector.broadcast %20 : vector<1x4xf32> to vector<128x4xf32>
    %22 = arith.addf %19, %21 : vector<128x4xf32>
    %cst_12 = arith.constant 0.000000e+00 : f32
    %23 = vector.broadcast %cst_12 : f32 to vector<128x4xf32>
    %24 = arith.maximumf %22, %23 : vector<128x4xf32>
    %25 = arith.truncf %24 : vector<128x4xf32> to vector<128x4xbf16>
    %26 = vector.shape_cast %25 : vector<128x4xbf16> to vector<8x16x4xbf16>
    %c1 = arith.constant 1 : index
    %c1_13 = arith.constant 1 : index
    %c0_14 = arith.constant 0 : index
    %27 = vector.load %arg13[%c1, %c1_13, %c0_14] : memref<10x24x4xbf16, #tpu.memory_space<vmem>>, vector<8x16x4xbf16>
    tpu.vector_store %arg13[%c1, %c1_13, %c0_14], %26 {strides = array<i32>} : memref<10x24x4xbf16, #tpu.memory_space<vmem>>, vector<8x16x4xbf16>,
    %cst_15 = arith.constant 0.000000e+00 : bf16
    %28 = vector.broadcast %cst_15 : bf16 to vector<10x1x4xbf16>
    %c0_16 = arith.constant 0 : index
    %c0_17 = arith.constant 0 : index
    %c0_18 = arith.constant 0 : index
    %29 = vector.load %arg13[%c0_16, %c0_17, %c0_18] : memref<10x24x4xbf16, #tpu.memory_space<vmem>>, vector<10x1x4xbf16>
    tpu.vector_store %arg13[%c0_16, %c0_17, %c0_18], %28 {strides = array<i32>} : memref<10x24x4xbf16, #tpu.memory_space<vmem>>, vector<10x1x4xbf16>,
    %c0_19 = arith.constant 0 : index
    %c17 = arith.constant 17 : index
    %c0_20 = arith.constant 0 : index
    %30 = vector.load %arg13[%c0_19, %c17, %c0_20] : memref<10x24x4xbf16, #tpu.memory_space<vmem>>, vector<10x1x4xbf16>
    tpu.vector_store %arg13[%c0_19, %c17, %c0_20], %28 {strides = array<i32>} : memref<10x24x4xbf16, #tpu.memory_space<vmem>>, vector<10x1x4xbf16>,
    %cst_21 = arith.constant 0.000000e+00 : bf16
    %31 = vector.broadcast %cst_21 : bf16 to vector<1x16x4xbf16>
    %c0_i32 = arith.constant 0 : i32
    %32 = arith.cmpi sgt, %arg1, %c0_i32 : i32
    %33 = arith.extui %32 : i1 to i32
    %c0_i32_22 = arith.constant 0 : i32
    %34 = arith.cmpi ne, %33, %c0_i32_22 : i32
    scf.if %34 {
      %c8_i32 = arith.constant 8 : i32
      %87 = arith.muli %arg1, %c8_i32 : i32
      %c1_i32_71 = arith.constant 1 : i32
      %88 = arith.subi %87, %c1_i32_71 : i32
      %c16_i32 = arith.constant 16 : i32
      %89 = arith.muli %88, %c16_i32 : i32
      %90 = tpu.assume_multiple %89, 8 : i32
      %c0_72 = arith.constant 0 : index
      %91 = arith.index_cast %90 : i32 to index
      %c0_73 = arith.constant 0 : index
      %92 = vector.load %arg2[%c0_72, %91, %c0_73] : memref<1x256x16xbf16, #tpu.memory_space<vmem>>, vector<1x16x16xbf16>
      %93 = vector.shape_cast %92 : vector<1x16x16xbf16> to vector<16x16xbf16>
      %94 = arith.extf %93 : vector<16x16xbf16> to vector<16x16xf32>
      %c0_74 = arith.constant 0 : index
      %c0_75 = arith.constant 0 : index
      %95 = vector.load %arg3[%c0_74, %c0_75] : memref<1x16xf32, #tpu.memory_space<vmem>>, vector<1x16xf32>
      %96 = vector.broadcast %95 : vector<1x16xf32> to vector<16x16xf32>
      %97 = arith.mulf %94, %96 : vector<16x16xf32>
      %c0_76 = arith.constant 0 : index
      %c0_77 = arith.constant 0 : index
      %98 = vector.load %arg4[%c0_76, %c0_77] : memref<1x16xf32, #tpu.memory_space<vmem>>, vector<1x16xf32>
      %99 = vector.broadcast %98 : vector<1x16xf32> to vector<16x16xf32>
      %100 = arith.addf %97, %99 : vector<16x16xf32>
      %cst_78 = arith.constant 0.000000e+00 : f32
      %101 = vector.broadcast %cst_78 : f32 to vector<16x16xf32>
      %102 = arith.maximumf %100, %101 : vector<16x16xf32>
      %103 = arith.truncf %102 : vector<16x16xf32> to vector<16x16xbf16>
      %c0_79 = arith.constant 0 : index
      %c0_80 = arith.constant 0 : index
      %104 = vector.load %arg5[%c0_79, %c0_80] : memref<16x4xbf16, #tpu.memory_space<vmem>>, vector<16x4xbf16>
      %cst_81 = arith.constant dense<0.000000e+00> : vector<16x4xf32>
      %105 = tpu.matmul %103, %104, %cst_81 {dimension_numbers = #tpu.dot_dimension_numbers<[1], [0], [0], [1], [0, 0, 1, 1], [], []>} : vector<16x16xbf16>, vector<16x4xbf16>, vector<16x4xf32> -> vector<16x4xf32>
      %c0_82 = arith.constant 0 : index
      %c0_83 = arith.constant 0 : index
      %106 = vector.load %arg6[%c0_82, %c0_83] : memref<1x4xf32, #tpu.memory_space<vmem>>, vector<1x4xf32>
      %107 = vector.broadcast %106 : vector<1x4xf32> to vector<16x4xf32>
      %108 = arith.mulf %105, %107 : vector<16x4xf32>
      %c0_84 = arith.constant 0 : index
      %c0_85 = arith.constant 0 : index
      %109 = vector.load %arg7[%c0_84, %c0_85] : memref<1x4xf32, #tpu.memory_space<vmem>>, vector<1x4xf32>
      %110 = vector.broadcast %109 : vector<1x4xf32> to vector<16x4xf32>
      %111 = arith.addf %108, %110 : vector<16x4xf32>
      %cst_86 = arith.constant 0.000000e+00 : f32
      %112 = vector.broadcast %cst_86 : f32 to vector<16x4xf32>
      %113 = arith.maximumf %111, %112 : vector<16x4xf32>
      %114 = arith.truncf %113 : vector<16x4xf32> to vector<16x4xbf16>
      %115 = vector.shape_cast %114 : vector<16x4xbf16> to vector<1x16x4xbf16>
      %c0_87 = arith.constant 0 : index
      %c1_88 = arith.constant 1 : index
      %c0_89 = arith.constant 0 : index
      %116 = vector.load %arg13[%c0_87, %c1_88, %c0_89] : memref<10x24x4xbf16, #tpu.memory_space<vmem>>, vector<1x16x4xbf16>
      tpu.vector_store %arg13[%c0_87, %c1_88, %c0_89], %115 {strides = array<i32>} : memref<10x24x4xbf16, #tpu.memory_space<vmem>>, vector<1x16x4xbf16>,
    } else {
    }
    %c0_i32_23 = arith.constant 0 : i32
    %35 = arith.cmpi eq, %arg1, %c0_i32_23 : i32
    %36 = arith.extui %35 : i1 to i32
    %c0_i32_24 = arith.constant 0 : i32
    %37 = arith.cmpi ne, %36, %c0_i32_24 : i32
    scf.if %37 {
      %c0_71 = arith.constant 0 : index
      %c1_72 = arith.constant 1 : index
      %c0_73 = arith.constant 0 : index
      %87 = vector.load %arg13[%c0_71, %c1_72, %c0_73] : memref<10x24x4xbf16, #tpu.memory_space<vmem>>, vector<1x16x4xbf16>
      tpu.vector_store %arg13[%c0_71, %c1_72, %c0_73], %31 {strides = array<i32>} : memref<10x24x4xbf16, #tpu.memory_space<vmem>>, vector<1x16x4xbf16>,
    } else {
    }
    %c1_i32 = arith.constant 1 : i32
    %38 = arith.cmpi slt, %arg1, %c1_i32 : i32
    %39 = arith.extui %38 : i1 to i32
    %c0_i32_25 = arith.constant 0 : i32
    %40 = arith.cmpi ne, %39, %c0_i32_25 : i32
    scf.if %40 {
      %c1_i32_71 = arith.constant 1 : i32
      %87 = arith.addi %arg1, %c1_i32_71 : i32
      %c128_i32_72 = arith.constant 128 : i32
      %88 = arith.muli %87, %c128_i32_72 : i32
      %89 = tpu.assume_multiple %88, 8 : i32
      %c0_73 = arith.constant 0 : index
      %90 = arith.index_cast %89 : i32 to index
      %c0_74 = arith.constant 0 : index
      %91 = vector.load %arg2[%c0_73, %90, %c0_74] : memref<1x256x16xbf16, #tpu.memory_space<vmem>>, vector<1x16x16xbf16>
      %92 = vector.shape_cast %91 : vector<1x16x16xbf16> to vector<16x16xbf16>
      %93 = arith.extf %92 : vector<16x16xbf16> to vector<16x16xf32>
      %c0_75 = arith.constant 0 : index
      %c0_76 = arith.constant 0 : index
      %94 = vector.load %arg3[%c0_75, %c0_76] : memref<1x16xf32, #tpu.memory_space<vmem>>, vector<1x16xf32>
      %95 = vector.broadcast %94 : vector<1x16xf32> to vector<16x16xf32>
      %96 = arith.mulf %93, %95 : vector<16x16xf32>
      %c0_77 = arith.constant 0 : index
      %c0_78 = arith.constant 0 : index
      %97 = vector.load %arg4[%c0_77, %c0_78] : memref<1x16xf32, #tpu.memory_space<vmem>>, vector<1x16xf32>
      %98 = vector.broadcast %97 : vector<1x16xf32> to vector<16x16xf32>
      %99 = arith.addf %96, %98 : vector<16x16xf32>
      %cst_79 = arith.constant 0.000000e+00 : f32
      %100 = vector.broadcast %cst_79 : f32 to vector<16x16xf32>
      %101 = arith.maximumf %99, %100 : vector<16x16xf32>
      %102 = arith.truncf %101 : vector<16x16xf32> to vector<16x16xbf16>
      %c0_80 = arith.constant 0 : index
      %c0_81 = arith.constant 0 : index
      %103 = vector.load %arg5[%c0_80, %c0_81] : memref<16x4xbf16, #tpu.memory_space<vmem>>, vector<16x4xbf16>
      %cst_82 = arith.constant dense<0.000000e+00> : vector<16x4xf32>
      %104 = tpu.matmul %102, %103, %cst_82 {dimension_numbers = #tpu.dot_dimension_numbers<[1], [0], [0], [1], [0, 0, 1, 1], [], []>} : vector<16x16xbf16>, vector<16x4xbf16>, vector<16x4xf32> -> vector<16x4xf32>
      %c0_83 = arith.constant 0 : index
      %c0_84 = arith.constant 0 : index
      %105 = vector.load %arg6[%c0_83, %c0_84] : memref<1x4xf32, #tpu.memory_space<vmem>>, vector<1x4xf32>
      %106 = vector.broadcast %105 : vector<1x4xf32> to vector<16x4xf32>
      %107 = arith.mulf %104, %106 : vector<16x4xf32>
      %c0_85 = arith.constant 0 : index
      %c0_86 = arith.constant 0 : index
      %108 = vector.load %arg7[%c0_85, %c0_86] : memref<1x4xf32, #tpu.memory_space<vmem>>, vector<1x4xf32>
      %109 = vector.broadcast %108 : vector<1x4xf32> to vector<16x4xf32>
      %110 = arith.addf %107, %109 : vector<16x4xf32>
      %cst_87 = arith.constant 0.000000e+00 : f32
      %111 = vector.broadcast %cst_87 : f32 to vector<16x4xf32>
      %112 = arith.maximumf %110, %111 : vector<16x4xf32>
      %113 = arith.truncf %112 : vector<16x4xf32> to vector<16x4xbf16>
      %114 = vector.shape_cast %113 : vector<16x4xbf16> to vector<1x16x4xbf16>
      %c9 = arith.constant 9 : index
      %c1_88 = arith.constant 1 : index
      %c0_89 = arith.constant 0 : index
      %115 = vector.load %arg13[%c9, %c1_88, %c0_89] : memref<10x24x4xbf16, #tpu.memory_space<vmem>>, vector<1x16x4xbf16>
      tpu.vector_store %arg13[%c9, %c1_88, %c0_89], %114 {strides = array<i32>} : memref<10x24x4xbf16, #tpu.memory_space<vmem>>, vector<1x16x4xbf16>,
    } else {
    }
    %c1_i32_26 = arith.constant 1 : i32
    %41 = arith.cmpi eq, %arg1, %c1_i32_26 : i32
    %42 = arith.extui %41 : i1 to i32
    %c0_i32_27 = arith.constant 0 : i32
    %43 = arith.cmpi ne, %42, %c0_i32_27 : i32
    scf.if %43 {
      %c9 = arith.constant 9 : index
      %c1_71 = arith.constant 1 : index
      %c0_72 = arith.constant 0 : index
      %87 = vector.load %arg13[%c9, %c1_71, %c0_72] : memref<10x24x4xbf16, #tpu.memory_space<vmem>>, vector<1x16x4xbf16>
      tpu.vector_store %arg13[%c9, %c1_71, %c0_72], %31 {strides = array<i32>} : memref<10x24x4xbf16, #tpu.memory_space<vmem>>, vector<1x16x4xbf16>,
    } else {
    }
    %c0_28 = arith.constant 0 : index
    %c0_29 = arith.constant 0 : index
    %c0_30 = arith.constant 0 : index
    %44 = vector.load %arg13[%c0_28, %c0_29, %c0_30] : memref<10x24x4xbf16, #tpu.memory_space<vmem>>, vector<8x16x4xbf16>
    %45 = vector.shape_cast %44 : vector<8x16x4xbf16> to vector<128x4xbf16>
    %c0_31 = arith.constant 0 : index
    %c1_32 = arith.constant 1 : index
    %c0_33 = arith.constant 0 : index
    %46 = vector.load %arg13[%c0_31, %c1_32, %c0_33] : memref<10x24x4xbf16, #tpu.memory_space<vmem>>, vector<8x16x4xbf16>
    %47 = vector.shape_cast %46 : vector<8x16x4xbf16> to vector<128x4xbf16>
    %c0_34 = arith.constant 0 : index
    %c2 = arith.constant 2 : index
    %c0_35 = arith.constant 0 : index
    %48 = vector.load %arg13[%c0_34, %c2, %c0_35] : memref<10x24x4xbf16, #tpu.memory_space<vmem>>, vector<8x16x4xbf16>
    %49 = vector.shape_cast %48 : vector<8x16x4xbf16> to vector<128x4xbf16>
    %c1_36 = arith.constant 1 : index
    %c0_37 = arith.constant 0 : index
    %c0_38 = arith.constant 0 : index
    %50 = vector.load %arg13[%c1_36, %c0_37, %c0_38] : memref<10x24x4xbf16, #tpu.memory_space<vmem>>, vector<8x16x4xbf16>
    %51 = vector.shape_cast %50 : vector<8x16x4xbf16> to vector<128x4xbf16>
    %c1_39 = arith.constant 1 : index
    %c1_40 = arith.constant 1 : index
    %c0_41 = arith.constant 0 : index
    %52 = vector.load %arg13[%c1_39, %c1_40, %c0_41] : memref<10x24x4xbf16, #tpu.memory_space<vmem>>, vector<8x16x4xbf16>
    %53 = vector.shape_cast %52 : vector<8x16x4xbf16> to vector<128x4xbf16>
    %c1_42 = arith.constant 1 : index
    %c2_43 = arith.constant 2 : index
    %c0_44 = arith.constant 0 : index
    %54 = vector.load %arg13[%c1_42, %c2_43, %c0_44] : memref<10x24x4xbf16, #tpu.memory_space<vmem>>, vector<8x16x4xbf16>
    %55 = vector.shape_cast %54 : vector<8x16x4xbf16> to vector<128x4xbf16>
    %c2_45 = arith.constant 2 : index
    %c0_46 = arith.constant 0 : index
    %c0_47 = arith.constant 0 : index
    %56 = vector.load %arg13[%c2_45, %c0_46, %c0_47] : memref<10x24x4xbf16, #tpu.memory_space<vmem>>, vector<8x16x4xbf16>
    %57 = vector.shape_cast %56 : vector<8x16x4xbf16> to vector<128x4xbf16>
    %c2_48 = arith.constant 2 : index
    %c1_49 = arith.constant 1 : index
    %c0_50 = arith.constant 0 : index
    %58 = vector.load %arg13[%c2_48, %c1_49, %c0_50] : memref<10x24x4xbf16, #tpu.memory_space<vmem>>, vector<8x16x4xbf16>
    %59 = vector.shape_cast %58 : vector<8x16x4xbf16> to vector<128x4xbf16>
    %c2_51 = arith.constant 2 : index
    %c2_52 = arith.constant 2 : index
    %c0_53 = arith.constant 0 : index
    %60 = vector.load %arg13[%c2_51, %c2_52, %c0_53] : memref<10x24x4xbf16, #tpu.memory_space<vmem>>, vector<8x16x4xbf16>
    %61 = vector.shape_cast %60 : vector<8x16x4xbf16> to vector<128x4xbf16>
    %62 = tpu.concatenate %45, %47, %49, %51, %53, %55, %57, %59, %61 in 1 : vector<128x4xbf16>, vector<128x4xbf16>, vector<128x4xbf16>, vector<128x4xbf16>, vector<128x4xbf16>, vector<128x4xbf16>, vector<128x4xbf16>, vector<128x4xbf16>, vector<128x4xbf16> -> vector<128x36xbf16>
    %c0_54 = arith.constant 0 : index
    %c0_55 = arith.constant 0 : index
    %63 = vector.load %arg8[%c0_54, %c0_55] : memref<36x4xbf16, #tpu.memory_space<vmem>>, vector<36x4xbf16>
    %cst_56 = arith.constant dense<0.000000e+00> : vector<128x4xf32>
    %64 = tpu.matmul %62, %63, %cst_56 {dimension_numbers = #tpu.dot_dimension_numbers<[1], [0], [0], [1], [0, 0, 1, 1], [], []>} : vector<128x36xbf16>, vector<36x4xbf16>, vector<128x4xf32> -> vector<128x4xf32>
    %c0_57 = arith.constant 0 : index
    %c0_58 = arith.constant 0 : index
    %65 = vector.load %arg9[%c0_57, %c0_58] : memref<1x4xf32, #tpu.memory_space<vmem>>, vector<1x4xf32>
    %66 = vector.broadcast %65 : vector<1x4xf32> to vector<128x4xf32>
    %67 = arith.mulf %64, %66 : vector<128x4xf32>
    %c0_59 = arith.constant 0 : index
    %c0_60 = arith.constant 0 : index
    %68 = vector.load %arg10[%c0_59, %c0_60] : memref<1x4xf32, #tpu.memory_space<vmem>>, vector<1x4xf32>
    %69 = vector.broadcast %68 : vector<1x4xf32> to vector<128x4xf32>
    %70 = arith.addf %67, %69 : vector<128x4xf32>
    %cst_61 = arith.constant 0.000000e+00 : f32
    %71 = vector.broadcast %cst_61 : f32 to vector<128x4xf32>
    %72 = arith.maximumf %70, %71 : vector<128x4xf32>
    %73 = arith.truncf %72 : vector<128x4xf32> to vector<128x4xbf16>
    %c0_62 = arith.constant 0 : index
    %c0_63 = arith.constant 0 : index
    %74 = vector.load %arg11[%c0_62, %c0_63] : memref<4x16xbf16, #tpu.memory_space<vmem>>, vector<4x16xbf16>
    %cst_64 = arith.constant dense<0.000000e+00> : vector<128x16xf32>
    %75 = tpu.matmul %73, %74, %cst_64 {dimension_numbers = #tpu.dot_dimension_numbers<[1], [0], [0], [1], [0, 0, 1, 1], [], []>} : vector<128x4xbf16>, vector<4x16xbf16>, vector<128x16xf32> -> vector<128x16xf32>
    %c128_i32_65 = arith.constant 128 : i32
    %76 = arith.muli %arg1, %c128_i32_65 : i32
    %77 = tpu.assume_multiple %76, 8 : i32
    %c0_66 = arith.constant 0 : index
    %78 = arith.index_cast %77 : i32 to index
    %c0_67 = arith.constant 0 : index
    %79 = vector.load %arg2[%c0_66, %78, %c0_67] : memref<1x256x16xbf16, #tpu.memory_space<vmem>>, vector<1x128x16xbf16>
    %80 = vector.shape_cast %79 : vector<1x128x16xbf16> to vector<128x16xbf16>
    %81 = arith.extf %80 : vector<128x16xbf16> to vector<128x16xf32>
    %82 = arith.addf %75, %81 : vector<128x16xf32>
    %83 = arith.truncf %82 : vector<128x16xf32> to vector<128x16xbf16>
    %c0_68 = arith.constant 0 : index
    %c0_69 = arith.constant 0 : index
    %c0_70 = arith.constant 0 : index
    %84 = vector.load %arg12[%c0_68, %c0_69, %c0_70] : memref<1x128x16xbf16, #tpu.memory_space<vmem>>, vector<1x128x16xbf16>
    %85 = vector.shape_cast %84 : vector<1x128x16xbf16> to vector<128x16xbf16>
    %86 = vector.shape_cast %83 : vector<128x16xbf16> to vector<1x128x16xbf16>
    tpu.vector_store %arg12[%c0_68, %c0_69, %c0_70], %86 {strides = array<i32>} : memref<1x128x16xbf16, #tpu.memory_space<vmem>>, vector<1x128x16xbf16>,
    return
  }
  func.func @transform_0(%arg0: i32, %arg1: i32) -> (i32, i32, i32) {
    %c0_i32 = arith.constant 0 : i32
    %c0_i32_0 = arith.constant 0 : i32
    %c0_i32_1 = arith.constant 0 : i32
    return %arg0, %c0_i32, %c0_i32_0 : i32, i32, i32
  }
  func.func @transform_1(%arg0: i32, %arg1: i32) -> (i32, i32) {
    %c0_i32 = arith.constant 0 : i32
    %c0_i32_0 = arith.constant 0 : i32
    %c0_i32_1 = arith.constant 0 : i32
    return %c0_i32, %c0_i32_0 : i32, i32
  }
  func.func @transform_2(%arg0: i32, %arg1: i32) -> (i32, i32) {
    %c0_i32 = arith.constant 0 : i32
    %c0_i32_0 = arith.constant 0 : i32
    %c0_i32_1 = arith.constant 0 : i32
    return %c0_i32, %c0_i32_0 : i32, i32
  }
  func.func @transform_3(%arg0: i32, %arg1: i32) -> (i32, i32) {
    %c0_i32 = arith.constant 0 : i32
    %c0_i32_0 = arith.constant 0 : i32
    %c0_i32_1 = arith.constant 0 : i32
    return %c0_i32, %c0_i32_0 : i32, i32
  }
  func.func @transform_4(%arg0: i32, %arg1: i32) -> (i32, i32) {
    %c0_i32 = arith.constant 0 : i32
    %c0_i32_0 = arith.constant 0 : i32
    %c0_i32_1 = arith.constant 0 : i32
    return %c0_i32, %c0_i32_0 : i32, i32
  }
  func.func @transform_5(%arg0: i32, %arg1: i32) -> (i32, i32) {
    %c0_i32 = arith.constant 0 : i32
    %c0_i32_0 = arith.constant 0 : i32
    %c0_i32_1 = arith.constant 0 : i32
    return %c0_i32, %c0_i32_0 : i32, i32
  }
  func.func @transform_6(%arg0: i32, %arg1: i32) -> (i32, i32) {
    %c0_i32 = arith.constant 0 : i32
    %c0_i32_0 = arith.constant 0 : i32
    %c0_i32_1 = arith.constant 0 : i32
    return %c0_i32, %c0_i32_0 : i32, i32
  }
  func.func @transform_7(%arg0: i32, %arg1: i32) -> (i32, i32) {
    %c0_i32 = arith.constant 0 : i32
    %c0_i32_0 = arith.constant 0 : i32
    %c0_i32_1 = arith.constant 0 : i32
    return %c0_i32, %c0_i32_0 : i32, i32
  }
  func.func @transform_8(%arg0: i32, %arg1: i32) -> (i32, i32) {
    %c0_i32 = arith.constant 0 : i32
    %c0_i32_0 = arith.constant 0 : i32
    %c0_i32_1 = arith.constant 0 : i32
    return %c0_i32, %c0_i32_0 : i32, i32
  }
  func.func @transform_9(%arg0: i32, %arg1: i32) -> (i32, i32) {
    %c0_i32 = arith.constant 0 : i32
    %c0_i32_0 = arith.constant 0 : i32
    %c0_i32_1 = arith.constant 0 : i32
    return %c0_i32, %c0_i32_0 : i32, i32
  }
  func.func @transform_10(%arg0: i32, %arg1: i32) -> (i32, i32, i32) {
    %c0_i32 = arith.constant 0 : i32
    %c0_i32_0 = arith.constant 0 : i32
    return %arg0, %arg1, %c0_i32 : i32, i32, i32
  }
}

</mosaic_0001>

<llo_original>
// kernel: tpu_custom_call.1
$region0: #{tpu_custom_call.1}
  #allocation0 [shape = 'u32[]', space=smem, size = 0x4, offset = 0x4, fixed_abs, tag = 'smem constant byte address 0x4 - core index']
  #allocation1 [shape = 'u32[144,128]{1,0:T(1,128)}', space=vmem, size = 0x12000, scoped, tag = 'internal scratch']
  #allocation2 [shape = 'bf16[10,24,4]{2,1,0:T(8,128)(2,1)}', space=vmem, size = 0xf000, scoped, tag = 'scratch operand']
  %s0 = inlined_call_operand.vmem [shape: bf16[2,256,16], index: 0, kind: input, shape index: {}]
  %s1 = inlined_call_operand.vmem [shape: f32[1,16], index: 1, kind: input, shape index: {}]
  %s2 = inlined_call_operand.vmem [shape: f32[1,16], index: 2, kind: input, shape index: {}]
  %s3 = inlined_call_operand.vmem [shape: bf16[16,4], index: 3, kind: input, shape index: {}]
  %s4 = inlined_call_operand.vmem [shape: f32[1,4], index: 4, kind: input, shape index: {}]
  %s5 = inlined_call_operand.vmem [shape: f32[1,4], index: 5, kind: input, shape index: {}]
  %s6 = inlined_call_operand.vmem [shape: bf16[36,4], index: 6, kind: input, shape index: {}]
  %s7 = inlined_call_operand.vmem [shape: f32[1,4], index: 7, kind: input, shape index: {}]
  %s8 = inlined_call_operand.vmem [shape: f32[1,4], index: 8, kind: input, shape index: {}]
  %s9 = inlined_call_operand.vmem [shape: bf16[4,16], index: 9, kind: input, shape index: {}]
  %s10 = inlined_call_operand.vmem [shape: bf16[2,256,16], index: 10, kind: output, shape index: {}]
  %s11 = sld [smem:[#allocation0]]
  $region89: #{tpu_custom_call.1} parent=0
    _
  %s13 = ssub.s32 1, %s11
  %s14 = scalar_select 0, %s13, %s11
  loop: start=0, step=1, limit=6
  $region2: #{tpu_custom_call.1} parent=0 // loop_pre_header
    _
  $region3: #{tpu_custom_call.1} parent=0 // loop_header
    %s16 = sphi 0, %s20
    %p17 = scmp.ge.s32.totalorder %s16, 6
    %s23 = sphi 0, %s35
    %s24 = sphi 0, %s31
    %s25 = sphi 0, %s23
    %s26 = sphi 0, %s24
    %s27 = sphi 0, %s25
    %s28 = sphi 0, %s26
    %s38 = sphi 0, %s40
    %s41 = sphi 0, %s38
    %s42 = sphi 0, %s41
    %s58 = sphi 0, %s42
    %s62 = sphi 0, %s62
    %s64 = sphi 0, %s62
    %s65 = sphi 0, %s64
    %s79 = sphi 0, %s65
    %s83 = sphi 0, %s83
    %s85 = sphi 0, %s83
    %s86 = sphi 0, %s85
    %s100 = sphi 0, %s86
    %s104 = sphi 0, %s104
    %s106 = sphi 0, %s104
    %s107 = sphi 0, %s106
    %s121 = sphi 0, %s107
    %s125 = sphi 0, %s125
    %s127 = sphi 0, %s125
    %s128 = sphi 0, %s127
    %s142 = sphi 0, %s128
    %s146 = sphi 0, %s146
    %s148 = sphi 0, %s146
    %s149 = sphi 0, %s148
    %s163 = sphi 0, %s149
    %s167 = sphi 0, %s167
    %s169 = sphi 0, %s167
    %s170 = sphi 0, %s169
    %s184 = sphi 0, %s170
    %s188 = sphi 0, %s188
    %s190 = sphi 0, %s188
    %s191 = sphi 0, %s190
    %s205 = sphi 0, %s191
    %s209 = sphi 0, %s209
    %s211 = sphi 0, %s209
    %s212 = sphi 0, %s211
    %s226 = sphi 0, %s212
    %s230 = sphi 0, %s230
    %s232 = sphi 0, %s230
    %s233 = sphi 0, %s232
    %s247 = sphi 0, %s233
    %s255 = sphi 0, %s257
    %s258 = sphi 0, %s255
    %s259 = sphi 0, %s258
    %s275 = sphi 0, %s259
  $region4: #{tpu_custom_call.1} parent=0 // loop_header_branch
    %19 = sbr.rel (%p17) target = $region8
  $region5: #{tpu_custom_call.1} parent=0 // loop_body
    %s21 = ssub.s32 %s16, 1
    %s22 = ssub.s32 %s16, 2
    %s29 = sadd.s32 1, %s24
    %p30 = scmp.ge.s32.totalorder %s29, 2
    %s31 = scalar_select %p30, 0, %s29
    %s32 = sadd.s32 1, %s23
    %s33 = scalar_select %p30, %s32, %s23
    %p34 = scmp.ge.s32.totalorder %s33, 2
    %s35 = scalar_select %p34, 0, %s33
    %s36 = ssub.s32 %s23, %s35
    %p37 = scmp.eq.s32.totalorder %s36, 0
    %s39 = sadd.s32 %s38, 1
    %s40 = scalar_select %p37, %s38, %s39
    %p43 = pneg %p37
    %p44 = scmp.eq.s32.totalorder %s16, 3
    %p45 = por %p43, %p44
    %p46 = scmp.ne.s32.totalorder %s38, %s41
    %p47 = scmp.eq.s32.totalorder %s16, 0
    %p48 = por %p46, %p47
    %p49 = scmp.ne.s32.totalorder %s38, %s41
    %p50 = scmp.eq.s32.totalorder %s21, 3
    %p51 = por %p49, %p50
    %p52 = scmp.ne.s32.totalorder %s41, %s42
    %p53 = scmp.eq.s32.totalorder %s21, 0
    %p54 = por %p52, %p53
    %p55 = scmp.ne.s32.totalorder %s41, %s42
    %p56 = scmp.eq.s32.totalorder %s22, 3
    %p57 = por %p55, %p56
    %p59 = scmp.ne.s32.totalorder %s42, %s58
    %p60 = scmp.eq.s32.totalorder %s22, 0
    %p61 = por %p59, %p60
    %s63 = sadd.s32 %s62, 1
    %p66 = scmp.eq.s32.totalorder %s16, 3
    %p67 = scmp.ne.s32.totalorder %s62, %s64
    %p68 = scmp.eq.s32.totalorder %s16, 0
    %p69 = por %p67, %p68
    %p70 = scmp.ne.s32.totalorder %s62, %s64
    %p71 = scmp.eq.s32.totalorder %s21, 3
    %p72 = por %p70, %p71
    %p73 = scmp.ne.s32.totalorder %s64, %s65
    %p74 = scmp.eq.s32.totalorder %s21, 0
    %p75 = por %p73, %p74
    %p76 = scmp.ne.s32.totalorder %s64, %s65
    %p77 = scmp.eq.s32.totalorder %s22, 3
    %p78 = por %p76, %p77
    %p80 = scmp.ne.s32.totalorder %s65, %s79
    %p81 = scmp.eq.s32.totalorder %s22, 0
    %p82 = por %p80, %p81
    %s84 = sadd.s32 %s83, 1
    %p87 = scmp.eq.s32.totalorder %s16, 3
    %p88 = scmp.ne.s32.totalorder %s83, %s85
    %p89 = scmp.eq.s32.totalorder %s16, 0
    %p90 = por %p88, %p89
    %p91 = scmp.ne.s32.totalorder %s83, %s85
    %p92 = scmp.eq.s32.totalorder %s21, 3
    %p93 = por %p91, %p92
    %p94 = scmp.ne.s32.totalorder %s85, %s86
    %p95 = scmp.eq.s32.totalorder %s21, 0
    %p96 = por %p94, %p95
    %p97 = scmp.ne.s32.totalorder %s85, %s86
    %p98 = scmp.eq.s32.totalorder %s22, 3
    %p99 = por %p97, %p98
    %p101 = scmp.ne.s32.totalorder %s86, %s100
    %p102 = scmp.eq.s32.totalorder %s22, 0
    %p103 = por %p101, %p102
    %s105 = sadd.s32 %s104, 1
    %p108 = scmp.eq.s32.totalorder %s16, 3
    %p109 = scmp.ne.s32.totalorder %s104, %s106
    %p110 = scmp.eq.s32.totalorder %s16, 0
    %p111 = por %p109, %p110
    %p112 = scmp.ne.s32.totalorder %s104, %s106
    %p113 = scmp.eq.s32.totalorder %s21, 3
    %p114 = por %p112, %p113
    %p115 = scmp.ne.s32.totalorder %s106, %s107
    %p116 = scmp.eq.s32.totalorder %s21, 0
    %p117 = por %p115, %p116
    %p118 = scmp.ne.s32.totalorder %s106, %s107
    %p119 = scmp.eq.s32.totalorder %s22, 3
    %p120 = por %p118, %p119
    %p122 = scmp.ne.s32.totalorder %s107, %s121
    %p123 = scmp.eq.s32.totalorder %s22, 0
    %p124 = por %p122, %p123
    %s126 = sadd.s32 %s125, 1
    %p129 = scmp.eq.s32.totalorder %s16, 3
    %p130 = scmp.ne.s32.totalorder %s125, %s127
    %p131 = scmp.eq.s32.totalorder %s16, 0
    %p132 = por %p130, %p131
    %p133 = scmp.ne.s32.totalorder %s125, %s127
    %p134 = scmp.eq.s32.totalorder %s21, 3
    %p135 = por %p133, %p134
    %p136 = scmp.ne.s32.totalorder %s127, %s128
    %p137 = scmp.eq.s32.totalorder %s21, 0
    %p138 = por %p136, %p137
    %p139 = scmp.ne.s32.totalorder %s127, %s128
    %p140 = scmp.eq.s32.totalorder %s22, 3
    %p141 = por %p139, %p140
    %p143 = scmp.ne.s32.totalorder %s128, %s142
    %p144 = scmp.eq.s32.totalorder %s22, 0
    %p145 = por %p143, %p144
    %s147 = sadd.s32 %s146, 1
    %p150 = scmp.eq.s32.totalorder %s16, 3
    %p151 = scmp.ne.s32.totalorder %s146, %s148
    %p152 = scmp.eq.s32.totalorder %s16, 0
    %p153 = por %p151, %p152
    %p154 = scmp.ne.s32.totalorder %s146, %s148
    %p155 = scmp.eq.s32.totalorder %s21, 3
    %p156 = por %p154, %p155
    %p157 = scmp.ne.s32.totalorder %s148, %s149
    %p158 = scmp.eq.s32.totalorder %s21, 0
    %p159 = por %p157, %p158
    %p160 = scmp.ne.s32.totalorder %s148, %s149
    %p161 = scmp.eq.s32.totalorder %s22, 3
    %p162 = por %p160, %p161
    %p164 = scmp.ne.s32.totalorder %s149, %s163
    %p165 = scmp.eq.s32.totalorder %s22, 0
    %p166 = por %p164, %p165
    %s168 = sadd.s32 %s167, 1
    %p171 = scmp.eq.s32.totalorder %s16, 3
    %p172 = scmp.ne.s32.totalorder %s167, %s169
    %p173 = scmp.eq.s32.totalorder %s16, 0
    %p174 = por %p172, %p173
    %p175 = scmp.ne.s32.totalorder %s167, %s169
    %p176 = scmp.eq.s32.totalorder %s21, 3
    %p177 = por %p175, %p176
    %p178 = scmp.ne.s32.totalorder %s169, %s170
    %p179 = scmp.eq.s32.totalorder %s21, 0
    %p180 = por %p178, %p179
    %p181 = scmp.ne.s32.totalorder %s169, %s170
    %p182 = scmp.eq.s32.totalorder %s22, 3
    %p183 = por %p181, %p182
    %p185 = scmp.ne.s32.totalorder %s170, %s184
    %p186 = scmp.eq.s32.totalorder %s22, 0
    %p187 = por %p185, %p186
    %s189 = sadd.s32 %s188, 1
    %p192 = scmp.eq.s32.totalorder %s16, 3
    %p193 = scmp.ne.s32.totalorder %s188, %s190
    %p194 = scmp.eq.s32.totalorder %s16, 0
    %p195 = por %p193, %p194
    %p196 = scmp.ne.s32.totalorder %s188, %s190
    %p197 = scmp.eq.s32.totalorder %s21, 3
    %p198 = por %p196, %p197
    %p199 = scmp.ne.s32.totalorder %s190, %s191
    %p200 = scmp.eq.s32.totalorder %s21, 0
    %p201 = por %p199, %p200
    %p202 = scmp.ne.s32.totalorder %s190, %s191
    %p203 = scmp.eq.s32.totalorder %s22, 3
    %p204 = por %p202, %p203
    %p206 = scmp.ne.s32.totalorder %s191, %s205
    %p207 = scmp.eq.s32.totalorder %s22, 0
    %p208 = por %p206, %p207
    %s210 = sadd.s32 %s209, 1
    %p213 = scmp.eq.s32.totalorder %s16, 3
    %p214 = scmp.ne.s32.totalorder %s209, %s211
    %p215 = scmp.eq.s32.totalorder %s16, 0
    %p216 = por %p214, %p215
    %p217 = scmp.ne.s32.totalorder %s209, %s211
    %p218 = scmp.eq.s32.totalorder %s21, 3
    %p219 = por %p217, %p218
    %p220 = scmp.ne.s32.totalorder %s211, %s212
    %p221 = scmp.eq.s32.totalorder %s21, 0
    %p222 = por %p220, %p221
    %p223 = scmp.ne.s32.totalorder %s211, %s212
    %p224 = scmp.eq.s32.totalorder %s22, 3
    %p225 = por %p223, %p224
    %p227 = scmp.ne.s32.totalorder %s212, %s226
    %p228 = scmp.eq.s32.totalorder %s22, 0
    %p229 = por %p227, %p228
    %s231 = sadd.s32 %s230, 1
    %p234 = scmp.eq.s32.totalorder %s16, 3
    %p235 = scmp.ne.s32.totalorder %s230, %s232
    %p236 = scmp.eq.s32.totalorder %s16, 0
    %p237 = por %p235, %p236
    %p238 = scmp.ne.s32.totalorder %s230, %s232
    %p239 = scmp.eq.s32.totalorder %s21, 3
    %p240 = por %p238, %p239
    %p241 = scmp.ne.s32.totalorder %s232, %s233
    %p242 = scmp.eq.s32.totalorder %s21, 0
    %p243 = por %p241, %p242
    %p244 = scmp.ne.s32.totalorder %s232, %s233
    %p245 = scmp.eq.s32.totalorder %s22, 3
    %p246 = por %p244, %p245
    %p248 = scmp.ne.s32.totalorder %s233, %s247
    %p249 = scmp.eq.s32.totalorder %s22, 0
    %p250 = por %p248, %p249
    %s251 = ssub.s32 %s23, %s35
    %s252 = ssub.s32 %s24, %s31
    %s253 = sor.u32 %s251, %s252
    %p254 = scmp.eq.s32.totalorder %s253, 0
    %s256 = sadd.s32 %s255, 1
    %s257 = scalar_select %p254, %s255, %s256
    %p260 = pneg %p254
    %p261 = scmp.eq.s32.totalorder %s16, 3
    %p262 = por %p260, %p261
    %p263 = scmp.ne.s32.totalorder %s255, %s258
    %p264 = scmp.eq.s32.totalorder %s16, 0
    %p265 = por %p263, %p264
    %p266 = scmp.ne.s32.totalorder %s255, %s258
    %p267 = scmp.eq.s32.totalorder %s21, 3
    %p268 = por %p266, %p267
    %p269 = scmp.ne.s32.totalorder %s258, %s259
    %p270 = scmp.eq.s32.totalorder %s21, 0
    %p271 = por %p269, %p270
    %p272 = scmp.ne.s32.totalorder %s258, %s259
    %p273 = scmp.eq.s32.totalorder %s22, 3
    %p274 = por %p272, %p273
    %p276 = scmp.ne.s32.totalorder %s259, %s275
    %p277 = scmp.eq.s32.totalorder %s22, 0
    %p278 = por %p276, %p277
    %p279 = scmp.le.s32.totalorder 1, %s16
    %p280 = scmp.lt.s32.totalorder %s16, 5
    %p281 = pnand %p279, %p280
    %p282 = pneg %p281
    // Predicated region
    $region9: #{tpu_custom_call.1} parent=5 // pred_check
      _
    $region10: #{tpu_custom_call.1} parent=5 // pred_check_branch
      %284 = sbr.rel (%p281) target = $region12
    $region11: #{tpu_custom_call.1} parent=5 // pred_region
      %s285 = ssub.s32 %s16, 1
      // Predicated region
      $region13: #{tpu_custom_call.1} parent=11 // pred_check
        %p286 = pneg %p75
      $region14: #{tpu_custom_call.1} parent=11 // pred_check_branch
        %288 = sbr.rel (%p286) target = $region16
      $region15: #{tpu_custom_call.1} parent=11 // pred_region
        _
      $region16: #{tpu_custom_call.1} parent=11 // pred_fallthru
        _
      // Predicated region
      $region17: #{tpu_custom_call.1} parent=11 // pred_check
        %p289 = pneg %p96
      $region18: #{tpu_custom_call.1} parent=11 // pred_check_branch
        %291 = sbr.rel (%p289) target = $region20
      $region19: #{tpu_custom_call.1} parent=11 // pred_region
        _
      $region20: #{tpu_custom_call.1} parent=11 // pred_fallthru
        _
      // Predicated region
      $region21: #{tpu_custom_call.1} parent=11 // pred_check
        %p292 = pneg %p117
      $region22: #{tpu_custom_call.1} parent=11 // pred_check_branch
        %294 = sbr.rel (%p292) target = $region24
      $region23: #{tpu_custom_call.1} parent=11 // pred_region
        _
      $region24: #{tpu_custom_call.1} parent=11 // pred_fallthru
        _
      // Predicated region
      $region25: #{tpu_custom_call.1} parent=11 // pred_check
        %p295 = pneg %p138
      $region26: #{tpu_custom_call.1} parent=11 // pred_check_branch
        %297 = sbr.rel (%p295) target = $region28
      $region27: #{tpu_custom_call.1} parent=11 // pred_region
        _
      $region28: #{tpu_custom_call.1} parent=11 // pred_fallthru
        _
      // Predicated region
      $region29: #{tpu_custom_call.1} parent=11 // pred_check
        %p298 = pneg %p159
      $region30: #{tpu_custom_call.1} parent=11 // pred_check_branch
        %300 = sbr.rel (%p298) target = $region32
      $region31: #{tpu_custom_call.1} parent=11 // pred_region
        _
      $region32: #{tpu_custom_call.1} parent=11 // pred_fallthru
        _
      // Predicated region
      $region33: #{tpu_custom_call.1} parent=11 // pred_check
        %p301 = pneg %p180
      $region34: #{tpu_custom_call.1} parent=11 // pred_check_branch
        %303 = sbr.rel (%p301) target = $region36
      $region35: #{tpu_custom_call.1} parent=11 // pred_region
        _
      $region36: #{tpu_custom_call.1} parent=11 // pred_fallthru
        _
      // Predicated region
      $region37: #{tpu_custom_call.1} parent=11 // pred_check
        %p304 = pneg %p201
      $region38: #{tpu_custom_call.1} parent=11 // pred_check_branch
        %306 = sbr.rel (%p304) target = $region40
      $region39: #{tpu_custom_call.1} parent=11 // pred_region
        _
      $region40: #{tpu_custom_call.1} parent=11 // pred_fallthru
        _
      // Predicated region
      $region41: #{tpu_custom_call.1} parent=11 // pred_check
        %p307 = pneg %p222
      $region42: #{tpu_custom_call.1} parent=11 // pred_check_branch
        %309 = sbr.rel (%p307) target = $region44
      $region43: #{tpu_custom_call.1} parent=11 // pred_region
        _
      $region44: #{tpu_custom_call.1} parent=11 // pred_fallthru
        _
      // Predicated region
      $region45: #{tpu_custom_call.1} parent=11 // pred_check
        %p310 = pneg %p243
      $region46: #{tpu_custom_call.1} parent=11 // pred_check_branch
        %312 = sbr.rel (%p310) target = $region48
      $region47: #{tpu_custom_call.1} parent=11 // pred_region
        _
      $region48: #{tpu_custom_call.1} parent=11 // pred_fallthru
        _
    $region12: #{tpu_custom_call.1} parent=5 // pred_fallthru
      _
    %p313 = scmp.lt.s32.totalorder %s16, 4
    // Predicated region
    $region49: #{tpu_custom_call.1} parent=5 // pred_check
      %p314 = pneg %p313
    $region50: #{tpu_custom_call.1} parent=5 // pred_check_branch
      %316 = sbr.rel (%p314) target = $region52
    $region51: #{tpu_custom_call.1} parent=5 // pred_region
      // Predicated region
      $region53: #{tpu_custom_call.1} parent=51 // pred_check
        %p317 = pneg %p48
      $region54: #{tpu_custom_call.1} parent=51 // pred_check_branch
        %319 = sbr.rel (%p317) target = $region56
      $region55: #{tpu_custom_call.1} parent=51 // pred_region
        %p320 = scmp.lt.s32.totalorder %s23, 1
        %s321 = scalar_select %p320, %s23, 1
        %s322 = smul.addr %s321, 32
        %s323 = smul.addr %s322, 4
        %s324 = scalar_lea.vmem %s0, %s323
      $region56: #{tpu_custom_call.1} parent=51 // pred_fallthru
        _
    $region52: #{tpu_custom_call.1} parent=5 // pred_fallthru
      _
    %p325 = scmp.le.s32.totalorder 1, %s16
    %p326 = scmp.lt.s32.totalorder %s16, 5
    %p327 = pnand %p325, %p326
    %p328 = pneg %p327
    // Predicated region
    $region57: #{tpu_custom_call.1} parent=5 // pred_check
      _
    $region58: #{tpu_custom_call.1} parent=5 // pred_check_branch
      %330 = sbr.rel (%p327) target = $region60
    $region59: #{tpu_custom_call.1} parent=5 // pred_region
      %s331 = ssub.s32 %s16, 1
      %p332 = scmp.lt.s32.totalorder %s25, 1
      %s333 = scalar_select %p332, %s25, 1
      %s334 = smul.addr %s333, 32
      %s335 = smul.addr %s334, 4
      %s336 = scalar_lea.vmem %s0, %s335
      %p337 = pneg %p54
      %p338 = pneg %p51
      %p339 = pneg %p75
      %p340 = pneg %p72
      %p341 = pneg %p96
      %p342 = pneg %p93
      %p343 = pneg %p117
      %p344 = pneg %p114
      %p345 = pneg %p138
      %p346 = pneg %p135
      %p347 = pneg %p159
      %p348 = pneg %p156
      %p349 = pneg %p180
      %p350 = pneg %p177
      %p351 = pneg %p201
      %p352 = pneg %p198
      %p353 = pneg %p222
      %p354 = pneg %p219
      %p355 = pneg %p243
      %p356 = pneg %p240
      %p357 = pneg %p271
      %p358 = pneg %p268
      %s359 = smul.u32 16, %s26
      %p360 = scmp.lt.s32.totalorder %s25, 1
      %s361 = scalar_select %p360, %s25, 1
      %p362 = scmp.lt.s32.totalorder %s359, 31
      %s363 = scalar_select %p362, %s359, 31
      %s364 = smul.addr %s361, 32
      %s365 = sadd.s32 %s363, %s364
      %s366 = smul.addr %s365, 4
      %s367 = scalar_lea.vmem %s10, %s366
      %p368 = scmp.lt.s32.totalorder %s25, 1
      %s369 = scalar_select %p368, %s25, 1
      %s370 = smul.addr %s369, 32
      %s371 = smul.addr %s370, 4
      %s372 = scalar_lea.vmem %s0, %s371
      %s373 = smul.u32 16, %s26
      %p374 = scmp.lt.s32.totalorder %s25, 1
      %s375 = scalar_select %p374, %s25, 1
      %p376 = scmp.lt.s32.totalorder %s373, 31
      %s377 = scalar_select %p376, %s373, 31
      %s378 = smul.addr %s375, 32
      %s379 = sadd.s32 %s377, %s378
      %s380 = smul.addr %s379, 4
      %s381 = scalar_lea.vmem %s10, %s380
      %s382 = smul.u32 16, %s26
      %s384 = smul.u32 %s26, 128
      %s385 = sshra.s32 %s384, 3
      %s386 = sand.u32 %s384, 7
      %s387 = smul.addr %s385, 4
      %s388 = scalar_lea.vmem %s372, %s387
      %v389 = vld [vmem:[%s388] sm:$0xf]
      %v390 = vld [vmem:[%s388 + $0x4] sm:$0xf]
      %v391 = vld [vmem:[%s388 + $0x8] sm:$0xf]
      %v392 = vld [vmem:[%s388 + $0xc] sm:$0xf]
      %v393 = vld [vmem:[%s388 + $0x10] sm:$0xf]
      %v394 = vld [vmem:[%s388 + $0x14] sm:$0xf]
      %v395 = vld [vmem:[%s388 + $0x18] sm:$0xf]
      %v396 = vld [vmem:[%s388 + $0x1c] sm:$0xf]
      %v397 = vld [vmem:[%s388 + $0x20] sm:$0xf]
      %v398 = vld [vmem:[%s388 + $0x24] sm:$0xf]
      %v399 = vld [vmem:[%s388 + $0x28] sm:$0xf]
      %v400 = vld [vmem:[%s388 + $0x2c] sm:$0xf]
      %v401 = vld [vmem:[%s388 + $0x30] sm:$0xf]
      %v402 = vld [vmem:[%s388 + $0x34] sm:$0xf]
      %v403 = vld [vmem:[%s388 + $0x38] sm:$0xf]
      %v404 = vld [vmem:[%s388 + $0x3c] sm:$0xf]
      %v405 = vunpack.c.l.bf16 %v389
      %v406 = vunpack.c.l.bf16 %v390
      %v407 = vunpack.c.l.bf16 %v391
      %v408 = vunpack.c.l.bf16 %v392
      %v409 = vunpack.c.l.bf16 %v393
      %v410 = vunpack.c.l.bf16 %v394
      %v411 = vunpack.c.l.bf16 %v395
      %v412 = vunpack.c.l.bf16 %v396
      %v413 = vunpack.c.l.bf16 %v397
      %v414 = vunpack.c.l.bf16 %v398
      %v415 = vunpack.c.l.bf16 %v399
      %v416 = vunpack.c.l.bf16 %v400
      %v417 = vunpack.c.l.bf16 %v401
      %v418 = vunpack.c.l.bf16 %v402
      %v419 = vunpack.c.l.bf16 %v403
      %v420 = vunpack.c.l.bf16 %v404
      %v421 = vld [vmem:[%s1] sm:$0x1]
      %v423 = vlaneseq
      %v424 = vshrl.u32 %v423, 7
      %v425 = vsub.s32 0, %v424
      %v426 = vrot.slane %v421, %v425
      %v428 = vmul.f32 %v405, %v426
      %v429 = vmul.f32 %v406, %v426
      %v430 = vmul.f32 %v407, %v426
      %v431 = vmul.f32 %v408, %v426
      %v432 = vmul.f32 %v409, %v426
      %v433 = vmul.f32 %v410, %v426
      %v434 = vmul.f32 %v411, %v426
      %v435 = vmul.f32 %v412, %v426
      %v436 = vmul.f32 %v413, %v426
      %v437 = vmul.f32 %v414, %v426
      %v438 = vmul.f32 %v415, %v426
      %v439 = vmul.f32 %v416, %v426
      %v440 = vmul.f32 %v417, %v426
      %v441 = vmul.f32 %v418, %v426
      %v442 = vmul.f32 %v419, %v426
      %v443 = vmul.f32 %v420, %v426
      %v444 = vld [vmem:[%s2] sm:$0x1]
      %v446 = vlaneseq
      %v447 = vshrl.u32 %v446, 7
      %v448 = vsub.s32 0, %v447
      %v449 = vrot.slane %v444, %v448
      %v451 = vadd.f32 %v428, %v449
      %v452 = vadd.f32 %v429, %v449
      %v453 = vadd.f32 %v430, %v449
      %v454 = vadd.f32 %v431, %v449
      %v455 = vadd.f32 %v432, %v449
      %v456 = vadd.f32 %v433, %v449
      %v457 = vadd.f32 %v434, %v449
      %v458 = vadd.f32 %v435, %v449
      %v459 = vadd.f32 %v436, %v449
      %v460 = vadd.f32 %v437, %v449
      %v461 = vadd.f32 %v438, %v449
      %v462 = vadd.f32 %v439, %v449
      %v463 = vadd.f32 %v440, %v449
      %v464 = vadd.f32 %v441, %v449
      %v465 = vadd.f32 %v442, %v449
      %v466 = vadd.f32 %v443, %v449
      %v467 = vmax.f32 %v451, 0.0
      %v468 = vmax.f32 %v452, 0.0
      %v469 = vmax.f32 %v453, 0.0
      %v470 = vmax.f32 %v454, 0.0
      %v471 = vmax.f32 %v455, 0.0
      %v472 = vmax.f32 %v456, 0.0
      %v473 = vmax.f32 %v457, 0.0
      %v474 = vmax.f32 %v458, 0.0
      %v475 = vmax.f32 %v459, 0.0
      %v476 = vmax.f32 %v460, 0.0
      %v477 = vmax.f32 %v461, 0.0
      %v478 = vmax.f32 %v462, 0.0
      %v479 = vmax.f32 %v463, 0.0
      %v480 = vmax.f32 %v464, 0.0
      %v481 = vmax.f32 %v465, 0.0
      %v482 = vmax.f32 %v466, 0.0
      %v483 = vpack.c.bf16 %v468, %v467
      %v484 = vpack.c.bf16 %v470, %v469
      %v485 = vpack.c.bf16 %v472, %v471
      %v486 = vpack.c.bf16 %v474, %v473
      %v487 = vpack.c.bf16 %v476, %v475
      %v488 = vpack.c.bf16 %v478, %v477
      %v489 = vpack.c.bf16 %v480, %v479
      %v490 = vpack.c.bf16 %v482, %v481
      %v491 = vld [vmem:[%s3] sm:$0xf]
      %v492 = vld [vmem:[%s3 + $0x4] sm:$0xf]
      %v495 = vunpack.c.l.b16 %v491
      %v496 = vunpack.c.l.b16 %v492
      %v497 = vpack.c.b16 %v496, %v495
      %vm499 = vcmask 130048
      %v501 = vsel %vm499, %v483, 0
      %v504 = vsel %vm499, %v484, 0
      %v507 = vsel %vm499, %v485, 0
      %v510 = vsel %vm499, %v486, 0
      %v513 = vsel %vm499, %v487, 0
      %v516 = vsel %vm499, %v488, 0
      %v519 = vsel %vm499, %v489, 0
      %v522 = vsel %vm499, %v490, 0
      %524 = vmatprep.subr.bf16.mxu0 0
      %525 = vmatpush1.bf16.msra.mxu0 %v497
      %526 = vmatprep.subr.bf16.mxu0 0
      %527 = vmatpush1.bf16.msra.mxu0 0
      %528 = vmatprep.subr.bf16.mxu0 0
      %529 = vmatpush1.bf16.msra.mxu0 0
      %530 = vmatprep.subr.bf16.mxu0 0
      %531 = vmatpush1.bf16.msra.mxu0 0
      %532 = vmatprep.subr.bf16.mxu0 0
      %533 = vmatpush1.bf16.msra.mxu0 0
      %534 = vmatprep.subr.bf16.mxu0 0
      %535 = vmatpush1.bf16.msra.mxu0 0
      %536 = vmatprep.subr.bf16.mxu0 0
      %537 = vmatpush1.bf16.msra.mxu0 0
      %538 = vmatprep.subr.bf16.mxu0 0
      %539 = vmatpush1.bf16.msra.mxu0 0
      %540 = vmatprep.subr.bf16.mxu0 0
      %541 = vmatpush1.bf16.msra.mxu0 0
      %542 = vmatprep.subr.bf16.mxu0 0
      %543 = vmatpush1.bf16.msra.mxu0 0
      %544 = vmatprep.subr.bf16.mxu0 0
      %545 = vmatpush1.bf16.msra.mxu0 0
      %546 = vmatprep.subr.bf16.mxu0 0
      %547 = vmatpush1.bf16.msra.mxu0 0
      %548 = vmatprep.subr.bf16.mxu0 0
      %549 = vmatpush1.bf16.msra.mxu0 0
      %550 = vmatprep.subr.bf16.mxu0 0
      %551 = vmatpush1.bf16.msra.mxu0 0
      %552 = vmatprep.subr.bf16.mxu0 0
      %553 = vmatpush1.bf16.msra.mxu0 0
      %554 = vmatprep.subr.bf16.mxu0 0
      %555 = vmatpush1.bf16.msra.mxu0 0
      %556 = vmatprep.mubr.bf16.mxu0 0
      %557 = vmatmul.mubr.bf16.gmra.mrb[0].mxu0 %v501
      %v558 = vpop.f32.mrb[0].mxu0
      %v559 = vadd.f32 0.0, %v558
      %v560 = vpop.f32.mrb[0].mxu0
      %v561 = vpop.f32.mrb[0].mxu0
      %v562 = vadd.f32 0.0, %v561
      %v563 = vpop.f32.mrb[0].mxu0
      %564 = vmatprep.mubr.bf16.mxu0 0
      %565 = vmatmul.mubr.bf16.gmra.mrb[0].mxu0 %v504
      %v566 = vpop.f32.mrb[0].mxu0
      %v567 = vadd.f32 0.0, %v566
      %v568 = vpop.f32.mrb[0].mxu0
      %v569 = vpop.f32.mrb[0].mxu0
      %v570 = vadd.f32 0.0, %v569
      %v571 = vpop.f32.mrb[0].mxu0
      %572 = vmatprep.mubr.bf16.mxu0 0
      %573 = vmatmul.mubr.bf16.gmra.mrb[0].mxu0 %v507
      %v574 = vpop.f32.mrb[0].mxu0
      %v575 = vadd.f32 0.0, %v574
      %v576 = vpop.f32.mrb[0].mxu0
      %v577 = vpop.f32.mrb[0].mxu0
      %v578 = vadd.f32 0.0, %v577
      %v579 = vpop.f32.mrb[0].mxu0
      %580 = vmatprep.mubr.bf16.mxu0 0
      %581 = vmatmul.mubr.bf16.gmra.mrb[0].mxu0 %v510
      %v582 = vpop.f32.mrb[0].mxu0
      %v583 = vadd.f32 0.0, %v582
      %v584 = vpop.f32.mrb[0].mxu0
      %v585 = vpop.f32.mrb[0].mxu0
      %v586 = vadd.f32 0.0, %v585
      %v587 = vpop.f32.mrb[0].mxu0
      %588 = vmatprep.mubr.bf16.mxu0 0
      %589 = vmatmul.mubr.bf16.gmra.mrb[0].mxu0 %v513
      %v590 = vpop.f32.mrb[0].mxu0
      %v591 = vadd.f32 0.0, %v590
      %v592 = vpop.f32.mrb[0].mxu0
      %v593 = vpop.f32.mrb[0].mxu0
      %v594 = vadd.f32 0.0, %v593
      %v595 = vpop.f32.mrb[0].mxu0
      %596 = vmatprep.mubr.bf16.mxu0 0
      %597 = vmatmul.mubr.bf16.gmra.mrb[0].mxu0 %v516
      %v598 = vpop.f32.mrb[0].mxu0
      %v599 = vadd.f32 0.0, %v598
      %v600 = vpop.f32.mrb[0].mxu0
      %v601 = vpop.f32.mrb[0].mxu0
      %v602 = vadd.f32 0.0, %v601
      %v603 = vpop.f32.mrb[0].mxu0
      %604 = vmatprep.mubr.bf16.mxu0 0
      %605 = vmatmul.mubr.bf16.gmra.mrb[0].mxu0 %v519
      %v606 = vpop.f32.mrb[0].mxu0
      %v607 = vadd.f32 0.0, %v606
      %v608 = vpop.f32.mrb[0].mxu0
      %v609 = vpop.f32.mrb[0].mxu0
      %v610 = vadd.f32 0.0, %v609
      %v611 = vpop.f32.mrb[0].mxu0
      %612 = vmatprep.mubr.bf16.mxu0 0
      %613 = vmatmul.mubr.bf16.gmra.mrb[0].mxu0 %v522
      %v614 = vpop.f32.mrb[0].mxu0
      %v615 = vadd.f32 0.0, %v614
      %v616 = vpop.f32.mrb[0].mxu0
      %v617 = vpop.f32.mrb[0].mxu0
      %v618 = vadd.f32 0.0, %v617
      %v619 = vpop.f32.mrb[0].mxu0
      %620 = vdwg.mxu0
      %v621 = vld [vmem:[%s4] sm:$0x1]
      %v623 = vlaneseq
      %v624 = vshrl.u32 %v623, 7
      %v625 = vsub.s32 0, %v624
      %v626 = vrot.slane %v621, %v625
      %v628 = vmul.f32 %v559, %v626
      %v629 = vmul.f32 %v562, %v626
      %v630 = vmul.f32 %v567, %v626
      %v631 = vmul.f32 %v570, %v626
      %v632 = vmul.f32 %v575, %v626
      %v633 = vmul.f32 %v578, %v626
      %v634 = vmul.f32 %v583, %v626
      %v635 = vmul.f32 %v586, %v626
      %v636 = vmul.f32 %v591, %v626
      %v637 = vmul.f32 %v594, %v626
      %v638 = vmul.f32 %v599, %v626
      %v639 = vmul.f32 %v602, %v626
      %v640 = vmul.f32 %v607, %v626
      %v641 = vmul.f32 %v610, %v626
      %v642 = vmul.f32 %v615, %v626
      %v643 = vmul.f32 %v618, %v626
      %v644 = vld [vmem:[%s5] sm:$0x1]
      %v646 = vlaneseq
      %v647 = vshrl.u32 %v646, 7
      %v648 = vsub.s32 0, %v647
      %v649 = vrot.slane %v644, %v648
      %v651 = vadd.f32 %v628, %v649
      %v652 = vadd.f32 %v629, %v649
      %v653 = vadd.f32 %v630, %v649
      %v654 = vadd.f32 %v631, %v649
      %v655 = vadd.f32 %v632, %v649
      %v656 = vadd.f32 %v633, %v649
      %v657 = vadd.f32 %v634, %v649
      %v658 = vadd.f32 %v635, %v649
      %v659 = vadd.f32 %v636, %v649
      %v660 = vadd.f32 %v637, %v649
      %v661 = vadd.f32 %v638, %v649
      %v662 = vadd.f32 %v639, %v649
      %v663 = vadd.f32 %v640, %v649
      %v664 = vadd.f32 %v641, %v649
      %v665 = vadd.f32 %v642, %v649
      %v666 = vadd.f32 %v643, %v649
      %v667 = vmax.f32 %v651, 0.0
      %v668 = vmax.f32 %v652, 0.0
      %v669 = vmax.f32 %v653, 0.0
      %v670 = vmax.f32 %v654, 0.0
      %v671 = vmax.f32 %v655, 0.0
      %v672 = vmax.f32 %v656, 0.0
      %v673 = vmax.f32 %v657, 0.0
      %v674 = vmax.f32 %v658, 0.0
      %v675 = vmax.f32 %v659, 0.0
      %v676 = vmax.f32 %v660, 0.0
      %v677 = vmax.f32 %v661, 0.0
      %v678 = vmax.f32 %v662, 0.0
      %v679 = vmax.f32 %v663, 0.0
      %v680 = vmax.f32 %v664, 0.0
      %v681 = vmax.f32 %v665, 0.0
      %v682 = vmax.f32 %v666, 0.0
      %v683 = vpack.c.bf16 %v668, %v667
      %v684 = vpack.c.bf16 %v670, %v669
      %v685 = vpack.c.bf16 %v672, %v671
      %v686 = vpack.c.bf16 %v674, %v673
      %v687 = vpack.c.bf16 %v676, %v675
      %v688 = vpack.c.bf16 %v678, %v677
      %v689 = vpack.c.bf16 %v680, %v679
      %v690 = vpack.c.bf16 %v682, %v681
      %v699 = vunpack.c.l.b16 %v683
      %v700 = vunpack.c.h.b16 %v683
      %v701 = vunpack.c.l.b16 %v684
      %v702 = vunpack.c.h.b16 %v684
      %v703 = vunpack.c.l.b16 %v685
      %v704 = vunpack.c.h.b16 %v685
      %v705 = vunpack.c.l.b16 %v686
      %v706 = vunpack.c.h.b16 %v686
      %v707 = vunpack.c.l.b16 %v687
      %v708 = vunpack.c.h.b16 %v687
      %v709 = vunpack.c.l.b16 %v688
      %v710 = vunpack.c.h.b16 %v688
      %v711 = vunpack.c.l.b16 %v689
      %v712 = vunpack.c.h.b16 %v689
      %v713 = vunpack.c.l.b16 %v690
      %v714 = vunpack.c.h.b16 %v690
      %v715 = vpack.c.b16 %v699, %v699
      %v716 = vpack.c.b16 %v700, %v700
      %v717 = vpack.c.b16 %v701, %v701
      %v718 = vpack.c.b16 %v702, %v702
      %v719 = vpack.c.b16 %v703, %v703
      %v720 = vpack.c.b16 %v704, %v704
      %v721 = vpack.c.b16 %v705, %v705
      %v722 = vpack.c.b16 %v706, %v706
      %v723 = vpack.c.b16 %v707, %v707
      %v724 = vpack.c.b16 %v708, %v708
      %v725 = vpack.c.b16 %v709, %v709
      %v726 = vpack.c.b16 %v710, %v710
      %v727 = vpack.c.b16 %v711, %v711
      %v728 = vpack.c.b16 %v712, %v712
      %v729 = vpack.c.b16 %v713, %v713
      %v730 = vpack.c.b16 %v714, %v714
      %vm731 = vsmask.f32 256
      %vm732 = vsmask.f32 4368
      %vm733 = vmor %vm731, %vm732
      %v735 = vshrl.u32 %v715, 16
      %v737 = vrot.slane %v735, 7
      %v738 = vshll.u32 %v715, 16
      %v740 = vor.u32 %v737, %v738
      %v741 = vrot.slane %v737, 4
      %v743 = vshrl.u32 %v716, 16
      %v745 = vrot.slane %v743, 7
      %v746 = vshll.u32 %v716, 16
      %v748 = vor.u32 %v745, %v746
      %v749 = vsel %vm733, %v741, %v748
      %v750 = vrot.slane %v745, 4
      %v752 = vshrl.u32 %v717, 16
      %v754 = vrot.slane %v752, 7
      %v755 = vshll.u32 %v717, 16
      %v757 = vor.u32 %v754, %v755
      %v758 = vrot.slane %v754, 4
      %v760 = vshrl.u32 %v718, 16
      %v762 = vrot.slane %v760, 7
      %v763 = vshll.u32 %v718, 16
      %v765 = vor.u32 %v762, %v763
      %v766 = vsel %vm733, %v758, %v765
      %v767 = vrot.slane %v762, 4
      %v769 = vshrl.u32 %v719, 16
      %v771 = vrot.slane %v769, 7
      %v772 = vshll.u32 %v719, 16
      %v774 = vor.u32 %v771, %v772
      %v775 = vrot.slane %v771, 4
      %v777 = vshrl.u32 %v720, 16
      %v779 = vrot.slane %v777, 7
      %v780 = vshll.u32 %v720, 16
      %v782 = vor.u32 %v779, %v780
      %v783 = vsel %vm733, %v775, %v782
      %v784 = vrot.slane %v779, 4
      %v786 = vshrl.u32 %v721, 16
      %v788 = vrot.slane %v786, 7
      %v789 = vshll.u32 %v721, 16
      %v791 = vor.u32 %v788, %v789
      %v792 = vrot.slane %v788, 4
      %v794 = vshrl.u32 %v722, 16
      %v796 = vrot.slane %v794, 7
      %v797 = vshll.u32 %v722, 16
      %v799 = vor.u32 %v796, %v797
      %v800 = vsel %vm733, %v792, %v799
      %v801 = vrot.slane %v796, 4
      %v803 = vshrl.u32 %v723, 16
      %v805 = vrot.slane %v803, 7
      %v806 = vshll.u32 %v723, 16
      %v808 = vor.u32 %v805, %v806
      %v809 = vrot.slane %v805, 4
      %v811 = vshrl.u32 %v724, 16
      %v813 = vrot.slane %v811, 7
      %v814 = vshll.u32 %v724, 16
      %v816 = vor.u32 %v813, %v814
      %v817 = vsel %vm733, %v809, %v816
      %v818 = vrot.slane %v813, 4
      %v820 = vshrl.u32 %v725, 16
      %v822 = vrot.slane %v820, 7
      %v823 = vshll.u32 %v725, 16
      %v825 = vor.u32 %v822, %v823
      %v826 = vrot.slane %v822, 4
      %v828 = vshrl.u32 %v726, 16
      %v830 = vrot.slane %v828, 7
      %v831 = vshll.u32 %v726, 16
      %v833 = vor.u32 %v830, %v831
      %v834 = vsel %vm733, %v826, %v833
      %v835 = vrot.slane %v830, 4
      %v837 = vshrl.u32 %v727, 16
      %v839 = vrot.slane %v837, 7
      %v840 = vshll.u32 %v727, 16
      %v842 = vor.u32 %v839, %v840
      %v843 = vrot.slane %v839, 4
      %v845 = vshrl.u32 %v728, 16
      %v847 = vrot.slane %v845, 7
      %v848 = vshll.u32 %v728, 16
      %v850 = vor.u32 %v847, %v848
      %v851 = vsel %vm733, %v843, %v850
      %v852 = vrot.slane %v847, 4
      %v854 = vshrl.u32 %v729, 16
      %v856 = vrot.slane %v854, 7
      %v857 = vshll.u32 %v729, 16
      %v859 = vor.u32 %v856, %v857
      %v860 = vrot.slane %v856, 4
      %v862 = vshrl.u32 %v730, 16
      %v864 = vrot.slane %v862, 7
      %v865 = vshll.u32 %v730, 16
      %v867 = vor.u32 %v864, %v865
      %v868 = vsel %vm733, %v860, %v867
      %v869 = vrot.slane %v864, 4
      %s894 = scalar_lea.vmem [#allocation2], 12
      %vm895 = vcmask 27648
      %vm896 = vsmask.f32 7938
      %vm897 = vmand %vm895, %vm896
      %v898 = vld [vmem:[%s894] sm:$0xf]
      %v899 = vsel %vm897, %v740, %v898
      %900 = vst [vmem:[%s894] sm:$0xf] %v899
      %vm901 = vcmask 27648
      %902 = vst.msk [vmem:[%s894 + $0x4] sm:$0xf] %vm901, %v749
      %vm903 = vcmask 24576
      %vm904 = vmand %vm903, %vm731
      %v905 = vld [vmem:[%s894 + $0x8] sm:$0x1]
      %v906 = vsel %vm904, %v750, %v905
      %907 = vst [vmem:[%s894 + $0x8] sm:$0x1] %v906
      %v908 = vld [vmem:[%s894 + $0xc] sm:$0xf]
      %v909 = vsel %vm897, %v757, %v908
      %910 = vst [vmem:[%s894 + $0xc] sm:$0xf] %v909
      %911 = vst.msk [vmem:[%s894 + $0x10] sm:$0xf] %vm901, %v766
      %v912 = vld [vmem:[%s894 + $0x14] sm:$0x1]
      %v913 = vsel %vm904, %v767, %v912
      %914 = vst [vmem:[%s894 + $0x14] sm:$0x1] %v913
      %v915 = vld [vmem:[%s894 + $0x18] sm:$0xf]
      %v916 = vsel %vm897, %v774, %v915
      %917 = vst [vmem:[%s894 + $0x18] sm:$0xf] %v916
      %918 = vst.msk [vmem:[%s894 + $0x1c] sm:$0xf] %vm901, %v783
      %v919 = vld [vmem:[%s894 + $0x20] sm:$0x1]
      %v920 = vsel %vm904, %v784, %v919
      %921 = vst [vmem:[%s894 + $0x20] sm:$0x1] %v920
      %v922 = vld [vmem:[%s894 + $0x24] sm:$0xf]
      %v923 = vsel %vm897, %v791, %v922
      %924 = vst [vmem:[%s894 + $0x24] sm:$0xf] %v923
      %925 = vst.msk [vmem:[%s894 + $0x28] sm:$0xf] %vm901, %v800
      %v926 = vld [vmem:[%s894 + $0x2c] sm:$0x1]
      %v927 = vsel %vm904, %v801, %v926
      %928 = vst [vmem:[%s894 + $0x2c] sm:$0x1] %v927
      %v929 = vld [vmem:[%s894 + $0x30] sm:$0xf]
      %v930 = vsel %vm897, %v808, %v929
      %931 = vst [vmem:[%s894 + $0x30] sm:$0xf] %v930
      %932 = vst.msk [vmem:[%s894 + $0x34] sm:$0xf] %vm901, %v817
      %v933 = vld [vmem:[%s894 + $0x38] sm:$0x1]
      %v934 = vsel %vm904, %v818, %v933
      %935 = vst [vmem:[%s894 + $0x38] sm:$0x1] %v934
      %v936 = vld [vmem:[%s894 + $0x3c] sm:$0xf]
      %v937 = vsel %vm897, %v825, %v936
      %938 = vst [vmem:[%s894 + $0x3c] sm:$0xf] %v937
      %939 = vst.msk [vmem:[%s894 + $0x40] sm:$0xf] %vm901, %v834
      %v940 = vld [vmem:[%s894 + $0x44] sm:$0x1]
      %v941 = vsel %vm904, %v835, %v940
      %942 = vst [vmem:[%s894 + $0x44] sm:$0x1] %v941
      %v943 = vld [vmem:[%s894 + $0x48] sm:$0xf]
      %v944 = vsel %vm897, %v842, %v943
      %945 = vst [vmem:[%s894 + $0x48] sm:$0xf] %v944
      %946 = vst.msk [vmem:[%s894 + $0x4c] sm:$0xf] %vm901, %v851
      %v947 = vld [vmem:[%s894 + $0x50] sm:$0x1]
      %v948 = vsel %vm904, %v852, %v947
      %949 = vst [vmem:[%s894 + $0x50] sm:$0x1] %v948
      %v950 = vld [vmem:[%s894 + $0x54] sm:$0xf]
      %v951 = vsel %vm897, %v859, %v950
      %952 = vst [vmem:[%s894 + $0x54] sm:$0xf] %v951
      %953 = vst.msk [vmem:[%s894 + $0x58] sm:$0xf] %vm901, %v868
      %v954 = vld [vmem:[%s894 + $0x5c] sm:$0x1]
      %v955 = vsel %vm904, %v869, %v954
      %956 = vst [vmem:[%s894 + $0x5c] sm:$0x1] %v955
      %v957 = vld [vmem:[#allocation2] sm:$0x1]
      %v958 = vsel %vm904, 0, %v957
      %959 = vst [vmem:[#allocation2] sm:$0x1] %v958
      %v960 = vld [vmem:[#allocation2 + $0xc] sm:$0x1]
      %v961 = vsel %vm904, 0, %v960
      %962 = vst [vmem:[#allocation2 + $0xc] sm:$0x1] %v961
      %v963 = vld [vmem:[#allocation2 + $0x18] sm:$0x1]
      %v964 = vsel %vm904, 0, %v963
      %965 = vst [vmem:[#allocation2 + $0x18] sm:$0x1] %v964
      %v966 = vld [vmem:[#allocation2 + $0x24] sm:$0x1]
      %v967 = vsel %vm904, 0, %v966
      %968 = vst [vmem:[#allocation2 + $0x24] sm:$0x1] %v967
      %v969 = vld [vmem:[#allocation2 + $0x30] sm:$0x1]
      %v970 = vsel %vm904, 0, %v969
      %971 = vst [vmem:[#allocation2 + $0x30] sm:$0x1] %v970
      %v972 = vld [vmem:[#allocation2 + $0x3c] sm:$0x1]
      %v973 = vsel %vm904, 0, %v972
      %974 = vst [vmem:[#allocation2 + $0x3c] sm:$0x1] %v973
      %v975 = vld [vmem:[#allocation2 + $0x48] sm:$0x1]
      %v976 = vsel %vm904, 0, %v975
      %977 = vst [vmem:[#allocation2 + $0x48] sm:$0x1] %v976
      %v978 = vld [vmem:[#allocation2 + $0x54] sm:$0x1]
      %v979 = vsel %vm904, 0, %v978
      %980 = vst [vmem:[#allocation2 + $0x54] sm:$0x1] %v979
      %v981 = vld [vmem:[#allocation2 + $0x60] sm:$0x1]
      %v982 = vsel %vm904, 0, %v981
      %983 = vst [vmem:[#allocation2 + $0x60] sm:$0x1] %v982
      %v984 = vld [vmem:[#allocation2 + $0x6c] sm:$0x1]
      %v985 = vsel %vm904, 0, %v984
      %986 = vst [vmem:[#allocation2 + $0x6c] sm:$0x1] %v985
      %vm987 = vmand %vm903, %vm896
      %v988 = vld [vmem:[#allocation2 + $0x8] sm:$0x1]
      %v989 = vsel %vm987, 0, %v988
      %990 = vst [vmem:[#allocation2 + $0x8] sm:$0x1] %v989
      %v991 = vld [vmem:[#allocation2 + $0x14] sm:$0x1]
      %v992 = vsel %vm987, 0, %v991
      %993 = vst [vmem:[#allocation2 + $0x14] sm:$0x1] %v992
      %v994 = vld [vmem:[#allocation2 + $0x20] sm:$0x1]
      %v995 = vsel %vm987, 0, %v994
      %996 = vst [vmem:[#allocation2 + $0x20] sm:$0x1] %v995
      %v997 = vld [vmem:[#allocation2 + $0x2c] sm:$0x1]
      %v998 = vsel %vm987, 0, %v997
      %999 = vst [vmem:[#allocation2 + $0x2c] sm:$0x1] %v998
      %v1000 = vld [vmem:[#allocation2 + $0x38] sm:$0x1]
      %v1001 = vsel %vm987, 0, %v1000
      %1002 = vst [vmem:[#allocation2 + $0x38] sm:$0x1] %v1001
      %v1003 = vld [vmem:[#allocation2 + $0x44] sm:$0x1]
      %v1004 = vsel %vm987, 0, %v1003
      %1005 = vst [vmem:[#allocation2 + $0x44] sm:$0x1] %v1004
      %v1006 = vld [vmem:[#allocation2 + $0x50] sm:$0x1]
      %v1007 = vsel %vm987, 0, %v1006
      %1008 = vst [vmem:[#allocation2 + $0x50] sm:$0x1] %v1007
      %v1009 = vld [vmem:[#allocation2 + $0x5c] sm:$0x1]
      %v1010 = vsel %vm987, 0, %v1009
      %1011 = vst [vmem:[#allocation2 + $0x5c] sm:$0x1] %v1010
      %v1012 = vld [vmem:[#allocation2 + $0x68] sm:$0x1]
      %v1013 = vsel %vm987, 0, %v1012
      %1014 = vst [vmem:[#allocation2 + $0x68] sm:$0x1] %v1013
      %v1015 = vld [vmem:[#allocation2 + $0x74] sm:$0x1]
      %v1016 = vsel %vm987, 0, %v1015
      %1017 = vst [vmem:[#allocation2 + $0x74] sm:$0x1] %v1016
      %p1018 = scmp.gt.s32.totalorder %s26, 0
      // Predicated region
      $region61: #{tpu_custom_call.1} parent=59 // pred_check
        %p1019 = pneg %p1018
      $region62: #{tpu_custom_call.1} parent=59 // pred_check_branch
        %1021 = sbr.rel (%p1019) target = $region64
      $region63: #{tpu_custom_call.1} parent=59 // pred_region
        %s1022 = smul.u32 %s26, 8
        %s1023 = ssub.s32 %s1022, 1
        %s1024 = smul.u32 %s1023, 16
        %s1025 = sshra.s32 %s1024, 3
        %s1026 = sand.u32 %s1024, 7
        %s1027 = smul.addr %s1025, 4
        %s1028 = scalar_lea.vmem %s372, %s1027
        %v1029 = vld [vmem:[%s1028] sm:$0xf]
        %v1030 = vld [vmem:[%s1028 + $0x4] sm:$0xf]
        %v1031 = vunpack.c.l.bf16 %v1029
        %v1032 = vunpack.c.l.bf16 %v1030
        %v1033 = vld [vmem:[%s1] sm:$0x1]
        %v1035 = vlaneseq
        %v1036 = vshrl.u32 %v1035, 7
        %v1037 = vsub.s32 0, %v1036
        %v1038 = vrot.slane %v1033, %v1037
        %v1040 = vmul.f32 %v1031, %v1038
        %v1041 = vmul.f32 %v1032, %v1038
        %v1042 = vld [vmem:[%s2] sm:$0x1]
        %v1044 = vlaneseq
        %v1045 = vshrl.u32 %v1044, 7
        %v1046 = vsub.s32 0, %v1045
        %v1047 = vrot.slane %v1042, %v1046
        %v1049 = vadd.f32 %v1040, %v1047
        %v1050 = vadd.f32 %v1041, %v1047
        %v1051 = vmax.f32 %v1049, 0.0
        %v1052 = vmax.f32 %v1050, 0.0
        %v1053 = vpack.c.bf16 %v1052, %v1051
        %v1054 = vld [vmem:[%s3] sm:$0xf]
        %v1055 = vld [vmem:[%s3 + $0x4] sm:$0xf]
        %v1058 = vunpack.c.l.b16 %v1054
        %v1059 = vunpack.c.l.b16 %v1055
        %v1060 = vpack.c.b16 %v1059, %v1058
        %v1063 = vsel %vm499, %v1053, 0
        %1065 = vmatprep.subr.bf16.mxu0 0
        %1066 = vmatpush1.bf16.msra.mxu0 %v1060
        %1067 = vmatprep.subr.bf16.mxu0 0
        %1068 = vmatpush1.bf16.msra.mxu0 0
        %1069 = vmatprep.subr.bf16.mxu0 0
        %1070 = vmatpush1.bf16.msra.mxu0 0
        %1071 = vmatprep.subr.bf16.mxu0 0
        %1072 = vmatpush1.bf16.msra.mxu0 0
        %1073 = vmatprep.subr.bf16.mxu0 0
        %1074 = vmatpush1.bf16.msra.mxu0 0
        %1075 = vmatprep.subr.bf16.mxu0 0
        %1076 = vmatpush1.bf16.msra.mxu0 0
        %1077 = vmatprep.subr.bf16.mxu0 0
        %1078 = vmatpush1.bf16.msra.mxu0 0
        %1079 = vmatprep.subr.bf16.mxu0 0
        %1080 = vmatpush1.bf16.msra.mxu0 0
        %1081 = vmatprep.subr.bf16.mxu0 0
        %1082 = vmatpush1.bf16.msra.mxu0 0
        %1083 = vmatprep.subr.bf16.mxu0 0
        %1084 = vmatpush1.bf16.msra.mxu0 0
        %1085 = vmatprep.subr.bf16.mxu0 0
        %1086 = vmatpush1.bf16.msra.mxu0 0
        %1087 = vmatprep.subr.bf16.mxu0 0
        %1088 = vmatpush1.bf16.msra.mxu0 0
        %1089 = vmatprep.subr.bf16.mxu0 0
        %1090 = vmatpush1.bf16.msra.mxu0 0
        %1091 = vmatprep.subr.bf16.mxu0 0
        %1092 = vmatpush1.bf16.msra.mxu0 0
        %1093 = vmatprep.subr.bf16.mxu0 0
        %1094 = vmatpush1.bf16.msra.mxu0 0
        %1095 = vmatprep.subr.bf16.mxu0 0
        %1096 = vmatpush1.bf16.msra.mxu0 0
        %1097 = vmatprep.mubr.bf16.mxu0 0
        %1098 = vmatmul.mubr.bf16.gmra.mrb[0].mxu0 %v1063
        %v1099 = vpop.f32.mrb[0].mxu0
        %v1100 = vadd.f32 0.0, %v1099
        %v1101 = vpop.f32.mrb[0].mxu0
        %v1102 = vpop.f32.mrb[0].mxu0
        %v1103 = vadd.f32 0.0, %v1102
        %v1104 = vpop.f32.mrb[0].mxu0
        %1105 = vdwg.mxu0
        %v1106 = vld [vmem:[%s4] sm:$0x1]
        %v1108 = vlaneseq
        %v1109 = vshrl.u32 %v1108, 7
        %v1110 = vsub.s32 0, %v1109
        %v1111 = vrot.slane %v1106, %v1110
        %v1113 = vmul.f32 %v1100, %v1111
        %v1114 = vmul.f32 %v1103, %v1111
        %v1115 = vld [vmem:[%s5] sm:$0x1]
        %v1117 = vlaneseq
        %v1118 = vshrl.u32 %v1117, 7
        %v1119 = vsub.s32 0, %v1118
        %v1120 = vrot.slane %v1115, %v1119
        %v1122 = vadd.f32 %v1113, %v1120
        %v1123 = vadd.f32 %v1114, %v1120
        %v1124 = vmax.f32 %v1122, 0.0
        %v1125 = vmax.f32 %v1123, 0.0
        %v1126 = vpack.c.bf16 %v1125, %v1124
        %v1128 = vunpack.c.l.b16 %v1126
        %v1129 = vunpack.c.h.b16 %v1126
        %v1130 = vpack.c.b16 %v1128, %v1128
        %v1131 = vpack.c.b16 %v1129, %v1129
        %v1133 = vshrl.u32 %v1130, 16
        %v1135 = vrot.slane %v1133, 7
        %v1136 = vshll.u32 %v1130, 16
        %v1138 = vor.u32 %v1135, %v1136
        %v1139 = vrot.slane %v1135, 4
        %v1141 = vshrl.u32 %v1131, 16
        %v1143 = vrot.slane %v1141, 7
        %v1144 = vshll.u32 %v1131, 16
        %v1146 = vor.u32 %v1143, %v1144
        %v1147 = vsel %vm733, %v1139, %v1146
        %v1148 = vrot.slane %v1143, 4
        %v1152 = vld [vmem:[#allocation2] sm:$0xf]
        %v1153 = vsel %vm897, %v1138, %v1152
        %1154 = vst [vmem:[#allocation2] sm:$0xf] %v1153
        %1155 = vst.msk [vmem:[#allocation2 + $0x4] sm:$0xf] %vm901, %v1147
        %v1156 = vld [vmem:[#allocation2 + $0x8] sm:$0x1]
        %v1157 = vsel %vm904, %v1148, %v1156
        %1158 = vst [vmem:[#allocation2 + $0x8] sm:$0x1] %v1157
      $region64: #{tpu_custom_call.1} parent=59 // pred_fallthru
        _
      %p1159 = scmp.eq.s32.totalorder %s26, 0
      // Predicated region
      $region65: #{tpu_custom_call.1} parent=59 // pred_check
        %p1160 = pneg %p1159
      $region66: #{tpu_custom_call.1} parent=59 // pred_check_branch
        %1162 = sbr.rel (%p1160) target = $region68
      $region67: #{tpu_custom_call.1} parent=59 // pred_region
        %v1163 = vld [vmem:[#allocation2] sm:$0xf]
        %v1164 = vsel %vm897, 0, %v1163
        %1165 = vst [vmem:[#allocation2] sm:$0xf] %v1164
        %1166 = vst.msk [vmem:[#allocation2 + $0x4] sm:$0xf] %vm901, 0
        %v1167 = vld [vmem:[#allocation2 + $0x8] sm:$0x1]
        %v1168 = vsel %vm904, 0, %v1167
        %1169 = vst [vmem:[#allocation2 + $0x8] sm:$0x1] %v1168
      $region68: #{tpu_custom_call.1} parent=59 // pred_fallthru
        _
      %p1170 = scmp.lt.s32.totalorder %s26, 1
      // Predicated region
      $region69: #{tpu_custom_call.1} parent=59 // pred_check
        %p1171 = pneg %p1170
      $region70: #{tpu_custom_call.1} parent=59 // pred_check_branch
        %1173 = sbr.rel (%p1171) target = $region72
      $region71: #{tpu_custom_call.1} parent=59 // pred_region
        %s1174 = sadd.s32 %s26, 1
        %s1175 = smul.u32 %s1174, 128
        %s1176 = sshra.s32 %s1175, 3
        %s1177 = sand.u32 %s1175, 7
        %s1178 = smul.addr %s1176, 4
        %s1179 = scalar_lea.vmem %s372, %s1178
        %v1180 = vld [vmem:[%s1179] sm:$0xf]
        %v1181 = vld [vmem:[%s1179 + $0x4] sm:$0xf]
        %v1182 = vunpack.c.l.bf16 %v1180
        %v1183 = vunpack.c.l.bf16 %v1181
        %v1184 = vld [vmem:[%s1] sm:$0x1]
        %v1186 = vlaneseq
        %v1187 = vshrl.u32 %v1186, 7
        %v1188 = vsub.s32 0, %v1187
        %v1189 = vrot.slane %v1184, %v1188
        %v1191 = vmul.f32 %v1182, %v1189
        %v1192 = vmul.f32 %v1183, %v1189
        %v1193 = vld [vmem:[%s2] sm:$0x1]
        %v1195 = vlaneseq
        %v1196 = vshrl.u32 %v1195, 7
        %v1197 = vsub.s32 0, %v1196
        %v1198 = vrot.slane %v1193, %v1197
        %v1200 = vadd.f32 %v1191, %v1198
        %v1201 = vadd.f32 %v1192, %v1198
        %v1202 = vmax.f32 %v1200, 0.0
        %v1203 = vmax.f32 %v1201, 0.0
        %v1204 = vpack.c.bf16 %v1203, %v1202
        %v1205 = vld [vmem:[%s3] sm:$0xf]
        %v1206 = vld [vmem:[%s3 + $0x4] sm:$0xf]
        %v1209 = vunpack.c.l.b16 %v1205
        %v1210 = vunpack.c.l.b16 %v1206
        %v1211 = vpack.c.b16 %v1210, %v1209
        %v1214 = vsel %vm499, %v1204, 0
        %1216 = vmatprep.subr.bf16.mxu0 0
        %1217 = vmatpush1.bf16.msra.mxu0 %v1211
        %1218 = vmatprep.subr.bf16.mxu0 0
        %1219 = vmatpush1.bf16.msra.mxu0 0
        %1220 = vmatprep.subr.bf16.mxu0 0
        %1221 = vmatpush1.bf16.msra.mxu0 0
        %1222 = vmatprep.subr.bf16.mxu0 0
        %1223 = vmatpush1.bf16.msra.mxu0 0
        %1224 = vmatprep.subr.bf16.mxu0 0
        %1225 = vmatpush1.bf16.msra.mxu0 0
        %1226 = vmatprep.subr.bf16.mxu0 0
        %1227 = vmatpush1.bf16.msra.mxu0 0
        %1228 = vmatprep.subr.bf16.mxu0 0
        %1229 = vmatpush1.bf16.msra.mxu0 0
        %1230 = vmatprep.subr.bf16.mxu0 0
        %1231 = vmatpush1.bf16.msra.mxu0 0
        %1232 = vmatprep.subr.bf16.mxu0 0
        %1233 = vmatpush1.bf16.msra.mxu0 0
        %1234 = vmatprep.subr.bf16.mxu0 0
        %1235 = vmatpush1.bf16.msra.mxu0 0
        %1236 = vmatprep.subr.bf16.mxu0 0
        %1237 = vmatpush1.bf16.msra.mxu0 0
        %1238 = vmatprep.subr.bf16.mxu0 0
        %1239 = vmatpush1.bf16.msra.mxu0 0
        %1240 = vmatprep.subr.bf16.mxu0 0
        %1241 = vmatpush1.bf16.msra.mxu0 0
        %1242 = vmatprep.subr.bf16.mxu0 0
        %1243 = vmatpush1.bf16.msra.mxu0 0
        %1244 = vmatprep.subr.bf16.mxu0 0
        %1245 = vmatpush1.bf16.msra.mxu0 0
        %1246 = vmatprep.subr.bf16.mxu0 0
        %1247 = vmatpush1.bf16.msra.mxu0 0
        %1248 = vmatprep.mubr.bf16.mxu0 0
        %1249 = vmatmul.mubr.bf16.gmra.mrb[0].mxu0 %v1214
        %v1250 = vpop.f32.mrb[0].mxu0
        %v1251 = vadd.f32 0.0, %v1250
        %v1252 = vpop.f32.mrb[0].mxu0
        %v1253 = vpop.f32.mrb[0].mxu0
        %v1254 = vadd.f32 0.0, %v1253
        %v1255 = vpop.f32.mrb[0].mxu0
        %1256 = vdwg.mxu0
        %v1257 = vld [vmem:[%s4] sm:$0x1]
        %v1259 = vlaneseq
        %v1260 = vshrl.u32 %v1259, 7
        %v1261 = vsub.s32 0, %v1260
        %v1262 = vrot.slane %v1257, %v1261
        %v1264 = vmul.f32 %v1251, %v1262
        %v1265 = vmul.f32 %v1254, %v1262
        %v1266 = vld [vmem:[%s5] sm:$0x1]
        %v1268 = vlaneseq
        %v1269 = vshrl.u32 %v1268, 7
        %v1270 = vsub.s32 0, %v1269
        %v1271 = vrot.slane %v1266, %v1270
        %v1273 = vadd.f32 %v1264, %v1271
        %v1274 = vadd.f32 %v1265, %v1271
        %v1275 = vmax.f32 %v1273, 0.0
        %v1276 = vmax.f32 %v1274, 0.0
        %v1277 = vpack.c.bf16 %v1276, %v1275
        %v1279 = vunpack.c.l.b16 %v1277
        %v1280 = vunpack.c.h.b16 %v1277
        %v1281 = vpack.c.b16 %v1279, %v1279
        %v1282 = vpack.c.b16 %v1280, %v1280
        %v1284 = vshrl.u32 %v1281, 16
        %v1286 = vrot.slane %v1284, 7
        %v1287 = vshll.u32 %v1281, 16
        %v1289 = vor.u32 %v1286, %v1287
        %v1290 = vrot.slane %v1286, 4
        %v1292 = vshrl.u32 %v1282, 16
        %v1294 = vrot.slane %v1292, 7
        %v1295 = vshll.u32 %v1282, 16
        %v1297 = vor.u32 %v1294, %v1295
        %v1298 = vsel %vm733, %v1290, %v1297
        %v1299 = vrot.slane %v1294, 4
        %s1303 = scalar_lea.vmem [#allocation2], 108
        %v1304 = vld [vmem:[%s1303] sm:$0xf]
        %v1305 = vsel %vm897, %v1289, %v1304
        %1306 = vst [vmem:[%s1303] sm:$0xf] %v1305
        %1307 = vst.msk [vmem:[%s1303 + $0x4] sm:$0xf] %vm901, %v1298
        %v1308 = vld [vmem:[%s1303 + $0x8] sm:$0x1]
        %v1309 = vsel %vm904, %v1299, %v1308
        %1310 = vst [vmem:[%s1303 + $0x8] sm:$0x1] %v1309
      $region72: #{tpu_custom_call.1} parent=59 // pred_fallthru
        _
      %p1311 = scmp.eq.s32.totalorder %s26, 1
      // Predicated region
      $region73: #{tpu_custom_call.1} parent=59 // pred_check
        %p1312 = pneg %p1311
      $region74: #{tpu_custom_call.1} parent=59 // pred_check_branch
        %1314 = sbr.rel (%p1312) target = $region76
      $region75: #{tpu_custom_call.1} parent=59 // pred_region
        %s1315 = scalar_lea.vmem [#allocation2], 108
        %v1316 = vld [vmem:[%s1315] sm:$0xf]
        %v1317 = vsel %vm897, 0, %v1316
        %1318 = vst [vmem:[%s1315] sm:$0xf] %v1317
        %1319 = vst.msk [vmem:[%s1315 + $0x4] sm:$0xf] %vm901, 0
        %v1320 = vld [vmem:[%s1315 + $0x8] sm:$0x1]
        %v1321 = vsel %vm904, 0, %v1320
        %1322 = vst [vmem:[%s1315 + $0x8] sm:$0x1] %v1321
      $region76: #{tpu_custom_call.1} parent=59 // pred_fallthru
        _
      %v1323 = vld [vmem:[#allocation2] sm:$0xf]
      %v1324 = vld [vmem:[#allocation2 + $0x4] sm:$0xf]
      %v1325 = vld [vmem:[#allocation2 + $0xc] sm:$0xf]
      %v1326 = vld [vmem:[#allocation2 + $0x10] sm:$0xf]
      %v1327 = vld [vmem:[#allocation2 + $0x18] sm:$0xf]
      %v1328 = vld [vmem:[#allocation2 + $0x1c] sm:$0xf]
      %v1329 = vld [vmem:[#allocation2 + $0x24] sm:$0xf]
      %v1330 = vld [vmem:[#allocation2 + $0x28] sm:$0xf]
      %v1331 = vld [vmem:[#allocation2 + $0x30] sm:$0xf]
      %v1332 = vld [vmem:[#allocation2 + $0x34] sm:$0xf]
      %v1333 = vld [vmem:[#allocation2 + $0x3c] sm:$0xf]
      %v1334 = vld [vmem:[#allocation2 + $0x40] sm:$0xf]
      %v1335 = vld [vmem:[#allocation2 + $0x48] sm:$0xf]
      %v1336 = vld [vmem:[#allocation2 + $0x4c] sm:$0xf]
      %v1337 = vld [vmem:[#allocation2 + $0x54] sm:$0xf]
      %v1338 = vld [vmem:[#allocation2 + $0x58] sm:$0xf]
      %v1339 = vld [vmem:[#allocation2 + $0x8] sm:$0x1]
      %v1340 = vld [vmem:[#allocation2 + $0x14] sm:$0x1]
      %v1341 = vld [vmem:[#allocation2 + $0x20] sm:$0x1]
      %v1342 = vld [vmem:[#allocation2 + $0x2c] sm:$0x1]
      %v1343 = vld [vmem:[#allocation2 + $0x38] sm:$0x1]
      %v1344 = vld [vmem:[#allocation2 + $0x44] sm:$0x1]
      %v1345 = vld [vmem:[#allocation2 + $0x50] sm:$0x1]
      %v1346 = vld [vmem:[#allocation2 + $0x5c] sm:$0x1]
      %vm1347 = vsmask.f32 3328
      %vm1348 = vsmask.f32 7440
      %vm1349 = vmor %vm1347, %vm1348
      %v1351 = vshrl.u32 %v1323, 16
      %v1353 = vrot.slane %v1351, 4
      %v1354 = vshll.u32 %v1323, 16
      %v1356 = vrot.slane %v1354, 5
      %v1357 = vor.u32 %v1353, %v1356
      %v1358 = vrot.slane %v1357, 4
      %v1360 = vshll.u32 %v1324, 16
      %v1362 = vrot.slane %v1360, 5
      %v1363 = vsel %vm1349, %v1358, %v1362
      %v1364 = vshrl.u32 %v1324, 16
      %v1366 = vrot.slane %v1364, 4
      %v1367 = vor.u32 %v1366, %v1362
      %v1368 = vrot.slane %v1367, 4
      %v1370 = vshll.u32 %v1339, 16
      %v1372 = vrot.slane %v1370, 5
      %v1373 = vsel %vm1349, %v1368, %v1372
      %v1375 = vshrl.u32 %v1325, 16
      %v1377 = vrot.slane %v1375, 4
      %v1378 = vshll.u32 %v1325, 16
      %v1380 = vrot.slane %v1378, 5
      %v1381 = vor.u32 %v1377, %v1380
      %v1382 = vrot.slane %v1381, 4
      %v1384 = vshll.u32 %v1326, 16
      %v1386 = vrot.slane %v1384, 5
      %v1387 = vsel %vm1349, %v1382, %v1386
      %v1388 = vshrl.u32 %v1326, 16
      %v1390 = vrot.slane %v1388, 4
      %v1391 = vor.u32 %v1390, %v1386
      %v1392 = vrot.slane %v1391, 4
      %v1394 = vshll.u32 %v1340, 16
      %v1396 = vrot.slane %v1394, 5
      %v1397 = vsel %vm1349, %v1392, %v1396
      %v1399 = vshrl.u32 %v1327, 16
      %v1401 = vrot.slane %v1399, 4
      %v1402 = vshll.u32 %v1327, 16
      %v1404 = vrot.slane %v1402, 5
      %v1405 = vor.u32 %v1401, %v1404
      %v1406 = vrot.slane %v1405, 4
      %v1408 = vshll.u32 %v1328, 16
      %v1410 = vrot.slane %v1408, 5
      %v1411 = vsel %vm1349, %v1406, %v1410
      %v1412 = vshrl.u32 %v1328, 16
      %v1414 = vrot.slane %v1412, 4
      %v1415 = vor.u32 %v1414, %v1410
      %v1416 = vrot.slane %v1415, 4
      %v1418 = vshll.u32 %v1341, 16
      %v1420 = vrot.slane %v1418, 5
      %v1421 = vsel %vm1349, %v1416, %v1420
      %v1423 = vshrl.u32 %v1329, 16
      %v1425 = vrot.slane %v1423, 4
      %v1426 = vshll.u32 %v1329, 16
      %v1428 = vrot.slane %v1426, 5
      %v1429 = vor.u32 %v1425, %v1428
      %v1430 = vrot.slane %v1429, 4
      %v1432 = vshll.u32 %v1330, 16
      %v1434 = vrot.slane %v1432, 5
      %v1435 = vsel %vm1349, %v1430, %v1434
      %v1436 = vshrl.u32 %v1330, 16
      %v1438 = vrot.slane %v1436, 4
      %v1439 = vor.u32 %v1438, %v1434
      %v1440 = vrot.slane %v1439, 4
      %v1442 = vshll.u32 %v1342, 16
      %v1444 = vrot.slane %v1442, 5
      %v1445 = vsel %vm1349, %v1440, %v1444
      %v1447 = vshrl.u32 %v1331, 16
      %v1449 = vrot.slane %v1447, 4
      %v1450 = vshll.u32 %v1331, 16
      %v1452 = vrot.slane %v1450, 5
      %v1453 = vor.u32 %v1449, %v1452
      %v1454 = vrot.slane %v1453, 4
      %v1456 = vshll.u32 %v1332, 16
      %v1458 = vrot.slane %v1456, 5
      %v1459 = vsel %vm1349, %v1454, %v1458
      %v1460 = vshrl.u32 %v1332, 16
      %v1462 = vrot.slane %v1460, 4
      %v1463 = vor.u32 %v1462, %v1458
      %v1464 = vrot.slane %v1463, 4
      %v1466 = vshll.u32 %v1343, 16
      %v1468 = vrot.slane %v1466, 5
      %v1469 = vsel %vm1349, %v1464, %v1468
      %v1471 = vshrl.u32 %v1333, 16
      %v1473 = vrot.slane %v1471, 4
      %v1474 = vshll.u32 %v1333, 16
      %v1476 = vrot.slane %v1474, 5
      %v1477 = vor.u32 %v1473, %v1476
      %v1478 = vrot.slane %v1477, 4
      %v1480 = vshll.u32 %v1334, 16
      %v1482 = vrot.slane %v1480, 5
      %v1483 = vsel %vm1349, %v1478, %v1482
      %v1484 = vshrl.u32 %v1334, 16
      %v1486 = vrot.slane %v1484, 4
      %v1487 = vor.u32 %v1486, %v1482
      %v1488 = vrot.slane %v1487, 4
      %v1490 = vshll.u32 %v1344, 16
      %v1492 = vrot.slane %v1490, 5
      %v1493 = vsel %vm1349, %v1488, %v1492
      %v1495 = vshrl.u32 %v1335, 16
      %v1497 = vrot.slane %v1495, 4
      %v1498 = vshll.u32 %v1335, 16
      %v1500 = vrot.slane %v1498, 5
      %v1501 = vor.u32 %v1497, %v1500
      %v1502 = vrot.slane %v1501, 4
      %v1504 = vshll.u32 %v1336, 16
      %v1506 = vrot.slane %v1504, 5
      %v1507 = vsel %vm1349, %v1502, %v1506
      %v1508 = vshrl.u32 %v1336, 16
      %v1510 = vrot.slane %v1508, 4
      %v1511 = vor.u32 %v1510, %v1506
      %v1512 = vrot.slane %v1511, 4
      %v1514 = vshll.u32 %v1345, 16
      %v1516 = vrot.slane %v1514, 5
      %v1517 = vsel %vm1349, %v1512, %v1516
      %v1519 = vshrl.u32 %v1337, 16
      %v1521 = vrot.slane %v1519, 4
      %v1522 = vshll.u32 %v1337, 16
      %v1524 = vrot.slane %v1522, 5
      %v1525 = vor.u32 %v1521, %v1524
      %v1526 = vrot.slane %v1525, 4
      %v1528 = vshll.u32 %v1338, 16
      %v1530 = vrot.slane %v1528, 5
      %v1531 = vsel %vm1349, %v1526, %v1530
      %v1532 = vshrl.u32 %v1338, 16
      %v1534 = vrot.slane %v1532, 4
      %v1535 = vor.u32 %v1534, %v1530
      %v1536 = vrot.slane %v1535, 4
      %v1538 = vshll.u32 %v1346, 16
      %v1540 = vrot.slane %v1538, 5
      %v1541 = vsel %vm1349, %v1536, %v1540
      %v1542 = vld [vmem:[#allocation2] sm:$0xe]
      %v1543 = vld [vmem:[#allocation2 + $0xc] sm:$0xe]
      %v1544 = vld [vmem:[#allocation2 + $0x18] sm:$0xe]
      %v1545 = vld [vmem:[#allocation2 + $0x24] sm:$0xe]
      %v1546 = vld [vmem:[#allocation2 + $0x30] sm:$0xe]
      %v1547 = vld [vmem:[#allocation2 + $0x3c] sm:$0xe]
      %v1548 = vld [vmem:[#allocation2 + $0x48] sm:$0xe]
      %v1549 = vld [vmem:[#allocation2 + $0x54] sm:$0xe]
      %vm1574 = vcmask 1042432
      %vm1575 = vcmask 1046532
      %vm1576 = vmor %vm1574, %vm1575
      %v1577 = vrot.slane %v1542, 5
      %v1578 = vrot.slane %v1577, 4
      %v1579 = vrot.slane %v1324, 5
      %v1580 = vsel %vm1576, %v1578, %v1579
      %v1581 = vrot.slane %v1579, 4
      %v1582 = vrot.slane %v1339, 5
      %v1583 = vsel %vm1576, %v1581, %v1582
      %v1584 = vrot.slane %v1543, 5
      %v1585 = vrot.slane %v1584, 4
      %v1586 = vrot.slane %v1326, 5
      %v1587 = vsel %vm1576, %v1585, %v1586
      %v1588 = vrot.slane %v1586, 4
      %v1589 = vrot.slane %v1340, 5
      %v1590 = vsel %vm1576, %v1588, %v1589
      %v1591 = vrot.slane %v1544, 5
      %v1592 = vrot.slane %v1591, 4
      %v1593 = vrot.slane %v1328, 5
      %v1594 = vsel %vm1576, %v1592, %v1593
      %v1595 = vrot.slane %v1593, 4
      %v1596 = vrot.slane %v1341, 5
      %v1597 = vsel %vm1576, %v1595, %v1596
      %v1598 = vrot.slane %v1545, 5
      %v1599 = vrot.slane %v1598, 4
      %v1600 = vrot.slane %v1330, 5
      %v1601 = vsel %vm1576, %v1599, %v1600
      %v1602 = vrot.slane %v1600, 4
      %v1603 = vrot.slane %v1342, 5
      %v1604 = vsel %vm1576, %v1602, %v1603
      %v1605 = vrot.slane %v1546, 5
      %v1606 = vrot.slane %v1605, 4
      %v1607 = vrot.slane %v1332, 5
      %v1608 = vsel %vm1576, %v1606, %v1607
      %v1609 = vrot.slane %v1607, 4
      %v1610 = vrot.slane %v1343, 5
      %v1611 = vsel %vm1576, %v1609, %v1610
      %v1612 = vrot.slane %v1547, 5
      %v1613 = vrot.slane %v1612, 4
      %v1614 = vrot.slane %v1334, 5
      %v1615 = vsel %vm1576, %v1613, %v1614
      %v1616 = vrot.slane %v1614, 4
      %v1617 = vrot.slane %v1344, 5
      %v1618 = vsel %vm1576, %v1616, %v1617
      %v1619 = vrot.slane %v1548, 5
      %v1620 = vrot.slane %v1619, 4
      %v1621 = vrot.slane %v1336, 5
      %v1622 = vsel %vm1576, %v1620, %v1621
      %v1623 = vrot.slane %v1621, 4
      %v1624 = vrot.slane %v1345, 5
      %v1625 = vsel %vm1576, %v1623, %v1624
      %v1626 = vrot.slane %v1549, 5
      %v1627 = vrot.slane %v1626, 4
      %v1628 = vrot.slane %v1338, 5
      %v1629 = vsel %vm1576, %v1627, %v1628
      %v1630 = vrot.slane %v1628, 4
      %v1631 = vrot.slane %v1346, 5
      %v1632 = vsel %vm1576, %v1630, %v1631
      %v1633 = vld [vmem:[%s894] sm:$0xf]
      %v1634 = vld [vmem:[%s894 + $0x4] sm:$0xf]
      %v1635 = vld [vmem:[%s894 + $0xc] sm:$0xf]
      %v1636 = vld [vmem:[%s894 + $0x10] sm:$0xf]
      %v1637 = vld [vmem:[%s894 + $0x18] sm:$0xf]
      %v1638 = vld [vmem:[%s894 + $0x1c] sm:$0xf]
      %v1639 = vld [vmem:[%s894 + $0x24] sm:$0xf]
      %v1640 = vld [vmem:[%s894 + $0x28] sm:$0xf]
      %v1641 = vld [vmem:[%s894 + $0x30] sm:$0xf]
      %v1642 = vld [vmem:[%s894 + $0x34] sm:$0xf]
      %v1643 = vld [vmem:[%s894 + $0x3c] sm:$0xf]
      %v1644 = vld [vmem:[%s894 + $0x40] sm:$0xf]
      %v1645 = vld [vmem:[%s894 + $0x48] sm:$0xf]
      %v1646 = vld [vmem:[%s894 + $0x4c] sm:$0xf]
      %v1647 = vld [vmem:[%s894 + $0x54] sm:$0xf]
      %v1648 = vld [vmem:[%s894 + $0x58] sm:$0xf]
      %v1649 = vld [vmem:[%s894 + $0x8] sm:$0x1]
      %v1650 = vld [vmem:[%s894 + $0x14] sm:$0x1]
      %v1651 = vld [vmem:[%s894 + $0x20] sm:$0x1]
      %v1652 = vld [vmem:[%s894 + $0x2c] sm:$0x1]
      %v1653 = vld [vmem:[%s894 + $0x38] sm:$0x1]
      %v1654 = vld [vmem:[%s894 + $0x44] sm:$0x1]
      %v1655 = vld [vmem:[%s894 + $0x50] sm:$0x1]
      %v1656 = vld [vmem:[%s894 + $0x5c] sm:$0x1]
      %v1658 = vshrl.u32 %v1633, 16
      %v1660 = vrot.slane %v1658, 4
      %v1661 = vshll.u32 %v1633, 16
      %v1663 = vrot.slane %v1661, 5
      %v1664 = vor.u32 %v1660, %v1663
      %v1665 = vrot.slane %v1664, 4
      %v1667 = vshll.u32 %v1634, 16
      %v1669 = vrot.slane %v1667, 5
      %v1670 = vsel %vm1349, %v1665, %v1669
      %v1671 = vshrl.u32 %v1634, 16
      %v1673 = vrot.slane %v1671, 4
      %v1674 = vor.u32 %v1673, %v1669
      %v1675 = vrot.slane %v1674, 4
      %v1677 = vshll.u32 %v1649, 16
      %v1679 = vrot.slane %v1677, 5
      %v1680 = vsel %vm1349, %v1675, %v1679
      %v1682 = vshrl.u32 %v1635, 16
      %v1684 = vrot.slane %v1682, 4
      %v1685 = vshll.u32 %v1635, 16
      %v1687 = vrot.slane %v1685, 5
      %v1688 = vor.u32 %v1684, %v1687
      %v1689 = vrot.slane %v1688, 4
      %v1691 = vshll.u32 %v1636, 16
      %v1693 = vrot.slane %v1691, 5
      %v1694 = vsel %vm1349, %v1689, %v1693
      %v1695 = vshrl.u32 %v1636, 16
      %v1697 = vrot.slane %v1695, 4
      %v1698 = vor.u32 %v1697, %v1693
      %v1699 = vrot.slane %v1698, 4
      %v1701 = vshll.u32 %v1650, 16
      %v1703 = vrot.slane %v1701, 5
      %v1704 = vsel %vm1349, %v1699, %v1703
      %v1706 = vshrl.u32 %v1637, 16
      %v1708 = vrot.slane %v1706, 4
      %v1709 = vshll.u32 %v1637, 16
      %v1711 = vrot.slane %v1709, 5
      %v1712 = vor.u32 %v1708, %v1711
      %v1713 = vrot.slane %v1712, 4
      %v1715 = vshll.u32 %v1638, 16
      %v1717 = vrot.slane %v1715, 5
      %v1718 = vsel %vm1349, %v1713, %v1717
      %v1719 = vshrl.u32 %v1638, 16
      %v1721 = vrot.slane %v1719, 4
      %v1722 = vor.u32 %v1721, %v1717
      %v1723 = vrot.slane %v1722, 4
      %v1725 = vshll.u32 %v1651, 16
      %v1727 = vrot.slane %v1725, 5
      %v1728 = vsel %vm1349, %v1723, %v1727
      %v1730 = vshrl.u32 %v1639, 16
      %v1732 = vrot.slane %v1730, 4
      %v1733 = vshll.u32 %v1639, 16
      %v1735 = vrot.slane %v1733, 5
      %v1736 = vor.u32 %v1732, %v1735
      %v1737 = vrot.slane %v1736, 4
      %v1739 = vshll.u32 %v1640, 16
      %v1741 = vrot.slane %v1739, 5
      %v1742 = vsel %vm1349, %v1737, %v1741
      %v1743 = vshrl.u32 %v1640, 16
      %v1745 = vrot.slane %v1743, 4
      %v1746 = vor.u32 %v1745, %v1741
      %v1747 = vrot.slane %v1746, 4
      %v1749 = vshll.u32 %v1652, 16
      %v1751 = vrot.slane %v1749, 5
      %v1752 = vsel %vm1349, %v1747, %v1751
      %v1754 = vshrl.u32 %v1641, 16
      %v1756 = vrot.slane %v1754, 4
      %v1757 = vshll.u32 %v1641, 16
      %v1759 = vrot.slane %v1757, 5
      %v1760 = vor.u32 %v1756, %v1759
      %v1761 = vrot.slane %v1760, 4
      %v1763 = vshll.u32 %v1642, 16
      %v1765 = vrot.slane %v1763, 5
      %v1766 = vsel %vm1349, %v1761, %v1765
      %v1767 = vshrl.u32 %v1642, 16
      %v1769 = vrot.slane %v1767, 4
      %v1770 = vor.u32 %v1769, %v1765
      %v1771 = vrot.slane %v1770, 4
      %v1773 = vshll.u32 %v1653, 16
      %v1775 = vrot.slane %v1773, 5
      %v1776 = vsel %vm1349, %v1771, %v1775
      %v1778 = vshrl.u32 %v1643, 16
      %v1780 = vrot.slane %v1778, 4
      %v1781 = vshll.u32 %v1643, 16
      %v1783 = vrot.slane %v1781, 5
      %v1784 = vor.u32 %v1780, %v1783
      %v1785 = vrot.slane %v1784, 4
      %v1787 = vshll.u32 %v1644, 16
      %v1789 = vrot.slane %v1787, 5
      %v1790 = vsel %vm1349, %v1785, %v1789
      %v1791 = vshrl.u32 %v1644, 16
      %v1793 = vrot.slane %v1791, 4
      %v1794 = vor.u32 %v1793, %v1789
      %v1795 = vrot.slane %v1794, 4
      %v1797 = vshll.u32 %v1654, 16
      %v1799 = vrot.slane %v1797, 5
      %v1800 = vsel %vm1349, %v1795, %v1799
      %v1802 = vshrl.u32 %v1645, 16
      %v1804 = vrot.slane %v1802, 4
      %v1805 = vshll.u32 %v1645, 16
      %v1807 = vrot.slane %v1805, 5
      %v1808 = vor.u32 %v1804, %v1807
      %v1809 = vrot.slane %v1808, 4
      %v1811 = vshll.u32 %v1646, 16
      %v1813 = vrot.slane %v1811, 5
      %v1814 = vsel %vm1349, %v1809, %v1813
      %v1815 = vshrl.u32 %v1646, 16
      %v1817 = vrot.slane %v1815, 4
      %v1818 = vor.u32 %v1817, %v1813
      %v1819 = vrot.slane %v1818, 4
      %v1821 = vshll.u32 %v1655, 16
      %v1823 = vrot.slane %v1821, 5
      %v1824 = vsel %vm1349, %v1819, %v1823
      %v1826 = vshrl.u32 %v1647, 16
      %v1828 = vrot.slane %v1826, 4
      %v1829 = vshll.u32 %v1647, 16
      %v1831 = vrot.slane %v1829, 5
      %v1832 = vor.u32 %v1828, %v1831
      %v1833 = vrot.slane %v1832, 4
      %v1835 = vshll.u32 %v1648, 16
      %v1837 = vrot.slane %v1835, 5
      %v1838 = vsel %vm1349, %v1833, %v1837
      %v1839 = vshrl.u32 %v1648, 16
      %v1841 = vrot.slane %v1839, 4
      %v1842 = vor.u32 %v1841, %v1837
      %v1843 = vrot.slane %v1842, 4
      %v1845 = vshll.u32 %v1656, 16
      %v1847 = vrot.slane %v1845, 5
      %v1848 = vsel %vm1349, %v1843, %v1847
      %v1849 = vld [vmem:[%s894] sm:$0xe]
      %v1850 = vld [vmem:[%s894 + $0xc] sm:$0xe]
      %v1851 = vld [vmem:[%s894 + $0x18] sm:$0xe]
      %v1852 = vld [vmem:[%s894 + $0x24] sm:$0xe]
      %v1853 = vld [vmem:[%s894 + $0x30] sm:$0xe]
      %v1854 = vld [vmem:[%s894 + $0x3c] sm:$0xe]
      %v1855 = vld [vmem:[%s894 + $0x48] sm:$0xe]
      %v1856 = vld [vmem:[%s894 + $0x54] sm:$0xe]
      %v1881 = vrot.slane %v1849, 5
      %v1882 = vrot.slane %v1881, 4
      %v1883 = vrot.slane %v1634, 5
      %v1884 = vsel %vm1576, %v1882, %v1883
      %v1885 = vrot.slane %v1883, 4
      %v1886 = vrot.slane %v1649, 5
      %v1887 = vsel %vm1576, %v1885, %v1886
      %v1888 = vrot.slane %v1850, 5
      %v1889 = vrot.slane %v1888, 4
      %v1890 = vrot.slane %v1636, 5
      %v1891 = vsel %vm1576, %v1889, %v1890
      %v1892 = vrot.slane %v1890, 4
      %v1893 = vrot.slane %v1650, 5
      %v1894 = vsel %vm1576, %v1892, %v1893
      %v1895 = vrot.slane %v1851, 5
      %v1896 = vrot.slane %v1895, 4
      %v1897 = vrot.slane %v1638, 5
      %v1898 = vsel %vm1576, %v1896, %v1897
      %v1899 = vrot.slane %v1897, 4
      %v1900 = vrot.slane %v1651, 5
      %v1901 = vsel %vm1576, %v1899, %v1900
      %v1902 = vrot.slane %v1852, 5
      %v1903 = vrot.slane %v1902, 4
      %v1904 = vrot.slane %v1640, 5
      %v1905 = vsel %vm1576, %v1903, %v1904
      %v1906 = vrot.slane %v1904, 4
      %v1907 = vrot.slane %v1652, 5
      %v1908 = vsel %vm1576, %v1906, %v1907
      %v1909 = vrot.slane %v1853, 5
      %v1910 = vrot.slane %v1909, 4
      %v1911 = vrot.slane %v1642, 5
      %v1912 = vsel %vm1576, %v1910, %v1911
      %v1913 = vrot.slane %v1911, 4
      %v1914 = vrot.slane %v1653, 5
      %v1915 = vsel %vm1576, %v1913, %v1914
      %v1916 = vrot.slane %v1854, 5
      %v1917 = vrot.slane %v1916, 4
      %v1918 = vrot.slane %v1644, 5
      %v1919 = vsel %vm1576, %v1917, %v1918
      %v1920 = vrot.slane %v1918, 4
      %v1921 = vrot.slane %v1654, 5
      %v1922 = vsel %vm1576, %v1920, %v1921
      %v1923 = vrot.slane %v1855, 5
      %v1924 = vrot.slane %v1923, 4
      %v1925 = vrot.slane %v1646, 5
      %v1926 = vsel %vm1576, %v1924, %v1925
      %v1927 = vrot.slane %v1925, 4
      %v1928 = vrot.slane %v1655, 5
      %v1929 = vsel %vm1576, %v1927, %v1928
      %v1930 = vrot.slane %v1856, 5
      %v1931 = vrot.slane %v1930, 4
      %v1932 = vrot.slane %v1648, 5
      %v1933 = vsel %vm1576, %v1931, %v1932
      %v1934 = vrot.slane %v1932, 4
      %v1935 = vrot.slane %v1656, 5
      %v1936 = vsel %vm1576, %v1934, %v1935
      %s1937 = scalar_lea.vmem [#allocation2], 24
      %v1938 = vld [vmem:[%s1937] sm:$0xf]
      %v1939 = vld [vmem:[%s1937 + $0x4] sm:$0xf]
      %v1940 = vld [vmem:[%s1937 + $0xc] sm:$0xf]
      %v1941 = vld [vmem:[%s1937 + $0x10] sm:$0xf]
      %v1942 = vld [vmem:[%s1937 + $0x18] sm:$0xf]
      %v1943 = vld [vmem:[%s1937 + $0x1c] sm:$0xf]
      %v1944 = vld [vmem:[%s1937 + $0x24] sm:$0xf]
      %v1945 = vld [vmem:[%s1937 + $0x28] sm:$0xf]
      %v1946 = vld [vmem:[%s1937 + $0x30] sm:$0xf]
      %v1947 = vld [vmem:[%s1937 + $0x34] sm:$0xf]
      %v1948 = vld [vmem:[%s1937 + $0x3c] sm:$0xf]
      %v1949 = vld [vmem:[%s1937 + $0x40] sm:$0xf]
      %v1950 = vld [vmem:[%s1937 + $0x48] sm:$0xf]
      %v1951 = vld [vmem:[%s1937 + $0x4c] sm:$0xf]
      %v1952 = vld [vmem:[%s1937 + $0x54] sm:$0xf]
      %v1953 = vld [vmem:[%s1937 + $0x58] sm:$0xf]
      %v1954 = vld [vmem:[%s1937 + $0x8] sm:$0x1]
      %v1955 = vld [vmem:[%s1937 + $0x14] sm:$0x1]
      %v1956 = vld [vmem:[%s1937 + $0x20] sm:$0x1]
      %v1957 = vld [vmem:[%s1937 + $0x2c] sm:$0x1]
      %v1958 = vld [vmem:[%s1937 + $0x38] sm:$0x1]
      %v1959 = vld [vmem:[%s1937 + $0x44] sm:$0x1]
      %v1960 = vld [vmem:[%s1937 + $0x50] sm:$0x1]
      %v1961 = vld [vmem:[%s1937 + $0x5c] sm:$0x1]
      %v1963 = vshrl.u32 %v1938, 16
      %v1965 = vrot.slane %v1963, 4
      %v1966 = vshll.u32 %v1938, 16
      %v1968 = vrot.slane %v1966, 5
      %v1969 = vor.u32 %v1965, %v1968
      %v1970 = vrot.slane %v1969, 4
      %v1972 = vshll.u32 %v1939, 16
      %v1974 = vrot.slane %v1972, 5
      %v1975 = vsel %vm1349, %v1970, %v1974
      %v1976 = vshrl.u32 %v1939, 16
      %v1978 = vrot.slane %v1976, 4
      %v1979 = vor.u32 %v1978, %v1974
      %v1980 = vrot.slane %v1979, 4
      %v1982 = vshll.u32 %v1954, 16
      %v1984 = vrot.slane %v1982, 5
      %v1985 = vsel %vm1349, %v1980, %v1984
      %v1987 = vshrl.u32 %v1940, 16
      %v1989 = vrot.slane %v1987, 4
      %v1990 = vshll.u32 %v1940, 16
      %v1992 = vrot.slane %v1990, 5
      %v1993 = vor.u32 %v1989, %v1992
      %v1994 = vrot.slane %v1993, 4
      %v1996 = vshll.u32 %v1941, 16
      %v1998 = vrot.slane %v1996, 5
      %v1999 = vsel %vm1349, %v1994, %v1998
      %v2000 = vshrl.u32 %v1941, 16
      %v2002 = vrot.slane %v2000, 4
      %v2003 = vor.u32 %v2002, %v1998
      %v2004 = vrot.slane %v2003, 4
      %v2006 = vshll.u32 %v1955, 16
      %v2008 = vrot.slane %v2006, 5
      %v2009 = vsel %vm1349, %v2004, %v2008
      %v2011 = vshrl.u32 %v1942, 16
      %v2013 = vrot.slane %v2011, 4
      %v2014 = vshll.u32 %v1942, 16
      %v2016 = vrot.slane %v2014, 5
      %v2017 = vor.u32 %v2013, %v2016
      %v2018 = vrot.slane %v2017, 4
      %v2020 = vshll.u32 %v1943, 16
      %v2022 = vrot.slane %v2020, 5
      %v2023 = vsel %vm1349, %v2018, %v2022
      %v2024 = vshrl.u32 %v1943, 16
      %v2026 = vrot.slane %v2024, 4
      %v2027 = vor.u32 %v2026, %v2022
      %v2028 = vrot.slane %v2027, 4
      %v2030 = vshll.u32 %v1956, 16
      %v2032 = vrot.slane %v2030, 5
      %v2033 = vsel %vm1349, %v2028, %v2032
      %v2035 = vshrl.u32 %v1944, 16
      %v2037 = vrot.slane %v2035, 4
      %v2038 = vshll.u32 %v1944, 16
      %v2040 = vrot.slane %v2038, 5
      %v2041 = vor.u32 %v2037, %v2040
      %v2042 = vrot.slane %v2041, 4
      %v2044 = vshll.u32 %v1945, 16
      %v2046 = vrot.slane %v2044, 5
      %v2047 = vsel %vm1349, %v2042, %v2046
      %v2048 = vshrl.u32 %v1945, 16
      %v2050 = vrot.slane %v2048, 4
      %v2051 = vor.u32 %v2050, %v2046
      %v2052 = vrot.slane %v2051, 4
      %v2054 = vshll.u32 %v1957, 16
      %v2056 = vrot.slane %v2054, 5
      %v2057 = vsel %vm1349, %v2052, %v2056
      %v2059 = vshrl.u32 %v1946, 16
      %v2061 = vrot.slane %v2059, 4
      %v2062 = vshll.u32 %v1946, 16
      %v2064 = vrot.slane %v2062, 5
      %v2065 = vor.u32 %v2061, %v2064
      %v2066 = vrot.slane %v2065, 4
      %v2068 = vshll.u32 %v1947, 16
      %v2070 = vrot.slane %v2068, 5
      %v2071 = vsel %vm1349, %v2066, %v2070
      %v2072 = vshrl.u32 %v1947, 16
      %v2074 = vrot.slane %v2072, 4
      %v2075 = vor.u32 %v2074, %v2070
      %v2076 = vrot.slane %v2075, 4
      %v2078 = vshll.u32 %v1958, 16
      %v2080 = vrot.slane %v2078, 5
      %v2081 = vsel %vm1349, %v2076, %v2080
      %v2083 = vshrl.u32 %v1948, 16
      %v2085 = vrot.slane %v2083, 4
      %v2086 = vshll.u32 %v1948, 16
      %v2088 = vrot.slane %v2086, 5
      %v2089 = vor.u32 %v2085, %v2088
      %v2090 = vrot.slane %v2089, 4
      %v2092 = vshll.u32 %v1949, 16
      %v2094 = vrot.slane %v2092, 5
      %v2095 = vsel %vm1349, %v2090, %v2094
      %v2096 = vshrl.u32 %v1949, 16
      %v2098 = vrot.slane %v2096, 4
      %v2099 = vor.u32 %v2098, %v2094
      %v2100 = vrot.slane %v2099, 4
      %v2102 = vshll.u32 %v1959, 16
      %v2104 = vrot.slane %v2102, 5
      %v2105 = vsel %vm1349, %v2100, %v2104
      %v2107 = vshrl.u32 %v1950, 16
      %v2109 = vrot.slane %v2107, 4
      %v2110 = vshll.u32 %v1950, 16
      %v2112 = vrot.slane %v2110, 5
      %v2113 = vor.u32 %v2109, %v2112
      %v2114 = vrot.slane %v2113, 4
      %v2116 = vshll.u32 %v1951, 16
      %v2118 = vrot.slane %v2116, 5
      %v2119 = vsel %vm1349, %v2114, %v2118
      %v2120 = vshrl.u32 %v1951, 16
      %v2122 = vrot.slane %v2120, 4
      %v2123 = vor.u32 %v2122, %v2118
      %v2124 = vrot.slane %v2123, 4
      %v2126 = vshll.u32 %v1960, 16
      %v2128 = vrot.slane %v2126, 5
      %v2129 = vsel %vm1349, %v2124, %v2128
      %v2131 = vshrl.u32 %v1952, 16
      %v2133 = vrot.slane %v2131, 4
      %v2134 = vshll.u32 %v1952, 16
      %v2136 = vrot.slane %v2134, 5
      %v2137 = vor.u32 %v2133, %v2136
      %v2138 = vrot.slane %v2137, 4
      %v2140 = vshll.u32 %v1953, 16
      %v2142 = vrot.slane %v2140, 5
      %v2143 = vsel %vm1349, %v2138, %v2142
      %v2144 = vshrl.u32 %v1953, 16
      %v2146 = vrot.slane %v2144, 4
      %v2147 = vor.u32 %v2146, %v2142
      %v2148 = vrot.slane %v2147, 4
      %v2150 = vshll.u32 %v1961, 16
      %v2152 = vrot.slane %v2150, 5
      %v2153 = vsel %vm1349, %v2148, %v2152
      %v2154 = vld [vmem:[%s1937] sm:$0xe]
      %v2155 = vld [vmem:[%s1937 + $0xc] sm:$0xe]
      %v2156 = vld [vmem:[%s1937 + $0x18] sm:$0xe]
      %v2157 = vld [vmem:[%s1937 + $0x24] sm:$0xe]
      %v2158 = vld [vmem:[%s1937 + $0x30] sm:$0xe]
      %v2159 = vld [vmem:[%s1937 + $0x3c] sm:$0xe]
      %v2160 = vld [vmem:[%s1937 + $0x48] sm:$0xe]
      %v2161 = vld [vmem:[%s1937 + $0x54] sm:$0xe]
      %v2186 = vrot.slane %v2154, 5
      %v2187 = vrot.slane %v2186, 4
      %v2188 = vrot.slane %v1939, 5
      %v2189 = vsel %vm1576, %v2187, %v2188
      %v2190 = vrot.slane %v2188, 4
      %v2191 = vrot.slane %v1954, 5
      %v2192 = vsel %vm1576, %v2190, %v2191
      %v2193 = vrot.slane %v2155, 5
      %v2194 = vrot.slane %v2193, 4
      %v2195 = vrot.slane %v1941, 5
      %v2196 = vsel %vm1576, %v2194, %v2195
      %v2197 = vrot.slane %v2195, 4
      %v2198 = vrot.slane %v1955, 5
      %v2199 = vsel %vm1576, %v2197, %v2198
      %v2200 = vrot.slane %v2156, 5
      %v2201 = vrot.slane %v2200, 4
      %v2202 = vrot.slane %v1943, 5
      %v2203 = vsel %vm1576, %v2201, %v2202
      %v2204 = vrot.slane %v2202, 4
      %v2205 = vrot.slane %v1956, 5
      %v2206 = vsel %vm1576, %v2204, %v2205
      %v2207 = vrot.slane %v2157, 5
      %v2208 = vrot.slane %v2207, 4
      %v2209 = vrot.slane %v1945, 5
      %v2210 = vsel %vm1576, %v2208, %v2209
      %v2211 = vrot.slane %v2209, 4
      %v2212 = vrot.slane %v1957, 5
      %v2213 = vsel %vm1576, %v2211, %v2212
      %v2214 = vrot.slane %v2158, 5
      %v2215 = vrot.slane %v2214, 4
      %v2216 = vrot.slane %v1947, 5
      %v2217 = vsel %vm1576, %v2215, %v2216
      %v2218 = vrot.slane %v2216, 4
      %v2219 = vrot.slane %v1958, 5
      %v2220 = vsel %vm1576, %v2218, %v2219
      %v2221 = vrot.slane %v2159, 5
      %v2222 = vrot.slane %v2221, 4
      %v2223 = vrot.slane %v1949, 5
      %v2224 = vsel %vm1576, %v2222, %v2223
      %v2225 = vrot.slane %v2223, 4
      %v2226 = vrot.slane %v1959, 5
      %v2227 = vsel %vm1576, %v2225, %v2226
      %v2228 = vrot.slane %v2160, 5
      %v2229 = vrot.slane %v2228, 4
      %v2230 = vrot.slane %v1951, 5
      %v2231 = vsel %vm1576, %v2229, %v2230
      %v2232 = vrot.slane %v2230, 4
      %v2233 = vrot.slane %v1960, 5
      %v2234 = vsel %vm1576, %v2232, %v2233
      %v2235 = vrot.slane %v2161, 5
      %v2236 = vrot.slane %v2235, 4
      %v2237 = vrot.slane %v1953, 5
      %v2238 = vsel %vm1576, %v2236, %v2237
      %v2239 = vrot.slane %v2237, 4
      %v2240 = vrot.slane %v1961, 5
      %v2241 = vsel %vm1576, %v2239, %v2240
      %v2250 = vunpack.c.l.b16 %v1323
      %v2251 = vunpack.c.l.b16 %v1324
      %v2252 = vunpack.c.l.b16 %v1325
      %v2253 = vunpack.c.l.b16 %v1326
      %v2254 = vunpack.c.l.b16 %v1327
      %v2255 = vunpack.c.l.b16 %v1328
      %v2256 = vunpack.c.l.b16 %v1329
      %v2257 = vunpack.c.l.b16 %v1330
      %v2258 = vunpack.c.l.b16 %v1331
      %v2259 = vunpack.c.l.b16 %v1332
      %v2260 = vunpack.c.l.b16 %v1333
      %v2261 = vunpack.c.l.b16 %v1334
      %v2262 = vunpack.c.l.b16 %v1335
      %v2263 = vunpack.c.l.b16 %v1336
      %v2264 = vunpack.c.l.b16 %v1337
      %v2265 = vunpack.c.l.b16 %v1338
      %v2266 = vpack.c.b16 %v2251, %v2250
      %v2267 = vpack.c.b16 %v2253, %v2252
      %v2268 = vpack.c.b16 %v2255, %v2254
      %v2269 = vpack.c.b16 %v2257, %v2256
      %v2270 = vpack.c.b16 %v2259, %v2258
      %v2271 = vpack.c.b16 %v2261, %v2260
      %v2272 = vpack.c.b16 %v2263, %v2262
      %v2273 = vpack.c.b16 %v2265, %v2264
      %v2274 = vunpack.c.l.b16 %v1363
      %v2275 = vunpack.c.l.b16 %v1373
      %v2276 = vunpack.c.l.b16 %v1387
      %v2277 = vunpack.c.l.b16 %v1397
      %v2278 = vunpack.c.l.b16 %v1411
      %v2279 = vunpack.c.l.b16 %v1421
      %v2280 = vunpack.c.l.b16 %v1435
      %v2281 = vunpack.c.l.b16 %v1445
      %v2282 = vunpack.c.l.b16 %v1459
      %v2283 = vunpack.c.l.b16 %v1469
      %v2284 = vunpack.c.l.b16 %v1483
      %v2285 = vunpack.c.l.b16 %v1493
      %v2286 = vunpack.c.l.b16 %v1507
      %v2287 = vunpack.c.l.b16 %v1517
      %v2288 = vunpack.c.l.b16 %v1531
      %v2289 = vunpack.c.l.b16 %v1541
      %v2290 = vpack.c.b16 %v2275, %v2274
      %v2291 = vpack.c.b16 %v2277, %v2276
      %v2292 = vpack.c.b16 %v2279, %v2278
      %v2293 = vpack.c.b16 %v2281, %v2280
      %v2294 = vpack.c.b16 %v2283, %v2282
      %v2295 = vpack.c.b16 %v2285, %v2284
      %v2296 = vpack.c.b16 %v2287, %v2286
      %v2297 = vpack.c.b16 %v2289, %v2288
      %2298 = vrot.lane.b32.xlu0 %v2290, 4
      %v2299 = vpop.permute.xlu0 %2298
      %2300 = vrot.lane.b32.xlu0 %v2291, 4
      %v2301 = vpop.permute.xlu0 %2300
      %2302 = vrot.lane.b32.xlu0 %v2292, 4
      %v2303 = vpop.permute.xlu0 %2302
      %2304 = vrot.lane.b32.xlu0 %v2293, 4
      %v2305 = vpop.permute.xlu0 %2304
      %2306 = vrot.lane.b32.xlu0 %v2294, 4
      %v2307 = vpop.permute.xlu0 %2306
      %2308 = vrot.lane.b32.xlu0 %v2295, 4
      %v2309 = vpop.permute.xlu0 %2308
      %2310 = vrot.lane.b32.xlu0 %v2296, 4
      %v2311 = vpop.permute.xlu0 %2310
      %2312 = vrot.lane.b32.xlu0 %v2297, 4
      %v2313 = vpop.permute.xlu0 %2312
      %v2314 = vunpack.c.l.b16 %v1580
      %v2315 = vunpack.c.l.b16 %v1583
      %v2316 = vunpack.c.l.b16 %v1587
      %v2317 = vunpack.c.l.b16 %v1590
      %v2318 = vunpack.c.l.b16 %v1594
      %v2319 = vunpack.c.l.b16 %v1597
      %v2320 = vunpack.c.l.b16 %v1601
      %v2321 = vunpack.c.l.b16 %v1604
      %v2322 = vunpack.c.l.b16 %v1608
      %v2323 = vunpack.c.l.b16 %v1611
      %v2324 = vunpack.c.l.b16 %v1615
      %v2325 = vunpack.c.l.b16 %v1618
      %v2326 = vunpack.c.l.b16 %v1622
      %v2327 = vunpack.c.l.b16 %v1625
      %v2328 = vunpack.c.l.b16 %v1629
      %v2329 = vunpack.c.l.b16 %v1632
      %v2330 = vpack.c.b16 %v2315, %v2314
      %v2331 = vpack.c.b16 %v2317, %v2316
      %v2332 = vpack.c.b16 %v2319, %v2318
      %v2333 = vpack.c.b16 %v2321, %v2320
      %v2334 = vpack.c.b16 %v2323, %v2322
      %v2335 = vpack.c.b16 %v2325, %v2324
      %v2336 = vpack.c.b16 %v2327, %v2326
      %v2337 = vpack.c.b16 %v2329, %v2328
      %2338 = vrot.lane.b32.xlu0 %v2330, 8
      %v2339 = vpop.permute.xlu0 %2338
      %2340 = vrot.lane.b32.xlu0 %v2331, 8
      %v2341 = vpop.permute.xlu0 %2340
      %2342 = vrot.lane.b32.xlu0 %v2332, 8
      %v2343 = vpop.permute.xlu0 %2342
      %2344 = vrot.lane.b32.xlu0 %v2333, 8
      %v2345 = vpop.permute.xlu0 %2344
      %2346 = vrot.lane.b32.xlu0 %v2334, 8
      %v2347 = vpop.permute.xlu0 %2346
      %2348 = vrot.lane.b32.xlu0 %v2335, 8
      %v2349 = vpop.permute.xlu0 %2348
      %2350 = vrot.lane.b32.xlu0 %v2336, 8
      %v2351 = vpop.permute.xlu0 %2350
      %2352 = vrot.lane.b32.xlu0 %v2337, 8
      %v2353 = vpop.permute.xlu0 %2352
      %v2362 = vunpack.c.l.b16 %v1633
      %v2363 = vunpack.c.l.b16 %v1634
      %v2364 = vunpack.c.l.b16 %v1635
      %v2365 = vunpack.c.l.b16 %v1636
      %v2366 = vunpack.c.l.b16 %v1637
      %v2367 = vunpack.c.l.b16 %v1638
      %v2368 = vunpack.c.l.b16 %v1639
      %v2369 = vunpack.c.l.b16 %v1640
      %v2370 = vunpack.c.l.b16 %v1641
      %v2371 = vunpack.c.l.b16 %v1642
      %v2372 = vunpack.c.l.b16 %v1643
      %v2373 = vunpack.c.l.b16 %v1644
      %v2374 = vunpack.c.l.b16 %v1645
      %v2375 = vunpack.c.l.b16 %v1646
      %v2376 = vunpack.c.l.b16 %v1647
      %v2377 = vunpack.c.l.b16 %v1648
      %v2378 = vpack.c.b16 %v2363, %v2362
      %v2379 = vpack.c.b16 %v2365, %v2364
      %v2380 = vpack.c.b16 %v2367, %v2366
      %v2381 = vpack.c.b16 %v2369, %v2368
      %v2382 = vpack.c.b16 %v2371, %v2370
      %v2383 = vpack.c.b16 %v2373, %v2372
      %v2384 = vpack.c.b16 %v2375, %v2374
      %v2385 = vpack.c.b16 %v2377, %v2376
      %2386 = vrot.lane.b32.xlu0 %v2378, 12
      %v2387 = vpop.permute.xlu0 %2386
      %2388 = vrot.lane.b32.xlu0 %v2379, 12
      %v2389 = vpop.permute.xlu0 %2388
      %2390 = vrot.lane.b32.xlu0 %v2380, 12
      %v2391 = vpop.permute.xlu0 %2390
      %2392 = vrot.lane.b32.xlu0 %v2381, 12
      %v2393 = vpop.permute.xlu0 %2392
      %2394 = vrot.lane.b32.xlu0 %v2382, 12
      %v2395 = vpop.permute.xlu0 %2394
      %2396 = vrot.lane.b32.xlu0 %v2383, 12
      %v2397 = vpop.permute.xlu0 %2396
      %2398 = vrot.lane.b32.xlu0 %v2384, 12
      %v2399 = vpop.permute.xlu0 %2398
      %2400 = vrot.lane.b32.xlu0 %v2385, 12
      %v2401 = vpop.permute.xlu0 %2400
      %v2402 = vunpack.c.l.b16 %v1670
      %v2403 = vunpack.c.l.b16 %v1680
      %v2404 = vunpack.c.l.b16 %v1694
      %v2405 = vunpack.c.l.b16 %v1704
      %v2406 = vunpack.c.l.b16 %v1718
      %v2407 = vunpack.c.l.b16 %v1728
      %v2408 = vunpack.c.l.b16 %v1742
      %v2409 = vunpack.c.l.b16 %v1752
      %v2410 = vunpack.c.l.b16 %v1766
      %v2411 = vunpack.c.l.b16 %v1776
      %v2412 = vunpack.c.l.b16 %v1790
      %v2413 = vunpack.c.l.b16 %v1800
      %v2414 = vunpack.c.l.b16 %v1814
      %v2415 = vunpack.c.l.b16 %v1824
      %v2416 = vunpack.c.l.b16 %v1838
      %v2417 = vunpack.c.l.b16 %v1848
      %v2418 = vpack.c.b16 %v2403, %v2402
      %v2419 = vpack.c.b16 %v2405, %v2404
      %v2420 = vpack.c.b16 %v2407, %v2406
      %v2421 = vpack.c.b16 %v2409, %v2408
      %v2422 = vpack.c.b16 %v2411, %v2410
      %v2423 = vpack.c.b16 %v2413, %v2412
      %v2424 = vpack.c.b16 %v2415, %v2414
      %v2425 = vpack.c.b16 %v2417, %v2416
      %2426 = vrot.lane.b32.xlu0 %v2418, 16
      %v2427 = vpop.permute.xlu0 %2426
      %2428 = vrot.lane.b32.xlu0 %v2419, 16
      %v2429 = vpop.permute.xlu0 %2428
      %2430 = vrot.lane.b32.xlu0 %v2420, 16
      %v2431 = vpop.permute.xlu0 %2430
      %2432 = vrot.lane.b32.xlu0 %v2421, 16
      %v2433 = vpop.permute.xlu0 %2432
      %2434 = vrot.lane.b32.xlu0 %v2422, 16
      %v2435 = vpop.permute.xlu0 %2434
      %2436 = vrot.lane.b32.xlu0 %v2423, 16
      %v2437 = vpop.permute.xlu0 %2436
      %2438 = vrot.lane.b32.xlu0 %v2424, 16
      %v2439 = vpop.permute.xlu0 %2438
      %2440 = vrot.lane.b32.xlu0 %v2425, 16
      %v2441 = vpop.permute.xlu0 %2440
      %v2442 = vunpack.c.l.b16 %v1884
      %v2443 = vunpack.c.l.b16 %v1887
      %v2444 = vunpack.c.l.b16 %v1891
      %v2445 = vunpack.c.l.b16 %v1894
      %v2446 = vunpack.c.l.b16 %v1898
      %v2447 = vunpack.c.l.b16 %v1901
      %v2448 = vunpack.c.l.b16 %v1905
      %v2449 = vunpack.c.l.b16 %v1908
      %v2450 = vunpack.c.l.b16 %v1912
      %v2451 = vunpack.c.l.b16 %v1915
      %v2452 = vunpack.c.l.b16 %v1919
      %v2453 = vunpack.c.l.b16 %v1922
      %v2454 = vunpack.c.l.b16 %v1926
      %v2455 = vunpack.c.l.b16 %v1929
      %v2456 = vunpack.c.l.b16 %v1933
      %v2457 = vunpack.c.l.b16 %v1936
      %v2458 = vpack.c.b16 %v2443, %v2442
      %v2459 = vpack.c.b16 %v2445, %v2444
      %v2460 = vpack.c.b16 %v2447, %v2446
      %v2461 = vpack.c.b16 %v2449, %v2448
      %v2462 = vpack.c.b16 %v2451, %v2450
      %v2463 = vpack.c.b16 %v2453, %v2452
      %v2464 = vpack.c.b16 %v2455, %v2454
      %v2465 = vpack.c.b16 %v2457, %v2456
      %2466 = vrot.lane.b32.xlu0 %v2458, 20
      %v2467 = vpop.permute.xlu0 %2466
      %2468 = vrot.lane.b32.xlu0 %v2459, 20
      %v2469 = vpop.permute.xlu0 %2468
      %2470 = vrot.lane.b32.xlu0 %v2460, 20
      %v2471 = vpop.permute.xlu0 %2470
      %2472 = vrot.lane.b32.xlu0 %v2461, 20
      %v2473 = vpop.permute.xlu0 %2472
      %2474 = vrot.lane.b32.xlu0 %v2462, 20
      %v2475 = vpop.permute.xlu0 %2474
      %2476 = vrot.lane.b32.xlu0 %v2463, 20
      %v2477 = vpop.permute.xlu0 %2476
      %2478 = vrot.lane.b32.xlu0 %v2464, 20
      %v2479 = vpop.permute.xlu0 %2478
      %2480 = vrot.lane.b32.xlu0 %v2465, 20
      %v2481 = vpop.permute.xlu0 %2480
      %v2490 = vunpack.c.l.b16 %v1938
      %v2491 = vunpack.c.l.b16 %v1939
      %v2492 = vunpack.c.l.b16 %v1940
      %v2493 = vunpack.c.l.b16 %v1941
      %v2494 = vunpack.c.l.b16 %v1942
      %v2495 = vunpack.c.l.b16 %v1943
      %v2496 = vunpack.c.l.b16 %v1944
      %v2497 = vunpack.c.l.b16 %v1945
      %v2498 = vunpack.c.l.b16 %v1946
      %v2499 = vunpack.c.l.b16 %v1947
      %v2500 = vunpack.c.l.b16 %v1948
      %v2501 = vunpack.c.l.b16 %v1949
      %v2502 = vunpack.c.l.b16 %v1950
      %v2503 = vunpack.c.l.b16 %v1951
      %v2504 = vunpack.c.l.b16 %v1952
      %v2505 = vunpack.c.l.b16 %v1953
      %v2506 = vpack.c.b16 %v2491, %v2490
      %v2507 = vpack.c.b16 %v2493, %v2492
      %v2508 = vpack.c.b16 %v2495, %v2494
      %v2509 = vpack.c.b16 %v2497, %v2496
      %v2510 = vpack.c.b16 %v2499, %v2498
      %v2511 = vpack.c.b16 %v2501, %v2500
      %v2512 = vpack.c.b16 %v2503, %v2502
      %v2513 = vpack.c.b16 %v2505, %v2504
      %2514 = vrot.lane.b32.xlu0 %v2506, 24
      %v2515 = vpop.permute.xlu0 %2514
      %2516 = vrot.lane.b32.xlu0 %v2507, 24
      %v2517 = vpop.permute.xlu0 %2516
      %2518 = vrot.lane.b32.xlu0 %v2508, 24
      %v2519 = vpop.permute.xlu0 %2518
      %2520 = vrot.lane.b32.xlu0 %v2509, 24
      %v2521 = vpop.permute.xlu0 %2520
      %2522 = vrot.lane.b32.xlu0 %v2510, 24
      %v2523 = vpop.permute.xlu0 %2522
      %2524 = vrot.lane.b32.xlu0 %v2511, 24
      %v2525 = vpop.permute.xlu0 %2524
      %2526 = vrot.lane.b32.xlu0 %v2512, 24
      %v2527 = vpop.permute.xlu0 %2526
      %2528 = vrot.lane.b32.xlu0 %v2513, 24
      %v2529 = vpop.permute.xlu0 %2528
      %v2530 = vunpack.c.l.b16 %v1975
      %v2531 = vunpack.c.l.b16 %v1985
      %v2532 = vunpack.c.l.b16 %v1999
      %v2533 = vunpack.c.l.b16 %v2009
      %v2534 = vunpack.c.l.b16 %v2023
      %v2535 = vunpack.c.l.b16 %v2033
      %v2536 = vunpack.c.l.b16 %v2047
      %v2537 = vunpack.c.l.b16 %v2057
      %v2538 = vunpack.c.l.b16 %v2071
      %v2539 = vunpack.c.l.b16 %v2081
      %v2540 = vunpack.c.l.b16 %v2095
      %v2541 = vunpack.c.l.b16 %v2105
      %v2542 = vunpack.c.l.b16 %v2119
      %v2543 = vunpack.c.l.b16 %v2129
      %v2544 = vunpack.c.l.b16 %v2143
      %v2545 = vunpack.c.l.b16 %v2153
      %v2546 = vpack.c.b16 %v2531, %v2530
      %v2547 = vpack.c.b16 %v2533, %v2532
      %v2548 = vpack.c.b16 %v2535, %v2534
      %v2549 = vpack.c.b16 %v2537, %v2536
      %v2550 = vpack.c.b16 %v2539, %v2538
      %v2551 = vpack.c.b16 %v2541, %v2540
      %v2552 = vpack.c.b16 %v2543, %v2542
      %v2553 = vpack.c.b16 %v2545, %v2544
      %2554 = vrot.lane.b32.xlu0 %v2546, 28
      %v2555 = vpop.permute.xlu0 %2554
      %2556 = vrot.lane.b32.xlu0 %v2547, 28
      %v2557 = vpop.permute.xlu0 %2556
      %2558 = vrot.lane.b32.xlu0 %v2548, 28
      %v2559 = vpop.permute.xlu0 %2558
      %2560 = vrot.lane.b32.xlu0 %v2549, 28
      %v2561 = vpop.permute.xlu0 %2560
      %2562 = vrot.lane.b32.xlu0 %v2550, 28
      %v2563 = vpop.permute.xlu0 %2562
      %2564 = vrot.lane.b32.xlu0 %v2551, 28
      %v2565 = vpop.permute.xlu0 %2564
      %2566 = vrot.lane.b32.xlu0 %v2552, 28
      %v2567 = vpop.permute.xlu0 %2566
      %2568 = vrot.lane.b32.xlu0 %v2553, 28
      %v2569 = vpop.permute.xlu0 %2568
      %v2570 = vunpack.c.l.b16 %v2189
      %v2571 = vunpack.c.l.b16 %v2192
      %v2572 = vunpack.c.l.b16 %v2196
      %v2573 = vunpack.c.l.b16 %v2199
      %v2574 = vunpack.c.l.b16 %v2203
      %v2575 = vunpack.c.l.b16 %v2206
      %v2576 = vunpack.c.l.b16 %v2210
      %v2577 = vunpack.c.l.b16 %v2213
      %v2578 = vunpack.c.l.b16 %v2217
      %v2579 = vunpack.c.l.b16 %v2220
      %v2580 = vunpack.c.l.b16 %v2224
      %v2581 = vunpack.c.l.b16 %v2227
      %v2582 = vunpack.c.l.b16 %v2231
      %v2583 = vunpack.c.l.b16 %v2234
      %v2584 = vunpack.c.l.b16 %v2238
      %v2585 = vunpack.c.l.b16 %v2241
      %v2586 = vpack.c.b16 %v2571, %v2570
      %v2587 = vpack.c.b16 %v2573, %v2572
      %v2588 = vpack.c.b16 %v2575, %v2574
      %v2589 = vpack.c.b16 %v2577, %v2576
      %v2590 = vpack.c.b16 %v2579, %v2578
      %v2591 = vpack.c.b16 %v2581, %v2580
      %v2592 = vpack.c.b16 %v2583, %v2582
      %v2593 = vpack.c.b16 %v2585, %v2584
      %2594 = vrot.lane.b32.xlu0 %v2586, 32
      %v2595 = vpop.permute.xlu0 %2594
      %2596 = vrot.lane.b32.xlu0 %v2587, 32
      %v2597 = vpop.permute.xlu0 %2596
      %2598 = vrot.lane.b32.xlu0 %v2588, 32
      %v2599 = vpop.permute.xlu0 %2598
      %2600 = vrot.lane.b32.xlu0 %v2589, 32
      %v2601 = vpop.permute.xlu0 %2600
      %2602 = vrot.lane.b32.xlu0 %v2590, 32
      %v2603 = vpop.permute.xlu0 %2602
      %2604 = vrot.lane.b32.xlu0 %v2591, 32
      %v2605 = vpop.permute.xlu0 %2604
      %2606 = vrot.lane.b32.xlu0 %v2592, 32
      %v2607 = vpop.permute.xlu0 %2606
      %2608 = vrot.lane.b32.xlu0 %v2593, 32
      %v2609 = vpop.permute.xlu0 %2608
      %vm2610 = vcmask 31744
      %v2613 = vsel %vm2610, %v2266, %v2299
      %v2616 = vsel %vm2610, %v2267, %v2301
      %v2619 = vsel %vm2610, %v2268, %v2303
      %v2622 = vsel %vm2610, %v2269, %v2305
      %v2625 = vsel %vm2610, %v2270, %v2307
      %v2628 = vsel %vm2610, %v2271, %v2309
      %v2631 = vsel %vm2610, %v2272, %v2311
      %v2634 = vsel %vm2610, %v2273, %v2313
      %vm2635 = vcmask 64512
      %v2637 = vsel %vm2635, %v2613, %v2339
      %v2639 = vsel %vm2635, %v2616, %v2341
      %v2641 = vsel %vm2635, %v2619, %v2343
      %v2643 = vsel %vm2635, %v2622, %v2345
      %v2645 = vsel %vm2635, %v2625, %v2347
      %v2647 = vsel %vm2635, %v2628, %v2349
      %v2649 = vsel %vm2635, %v2631, %v2351
      %v2651 = vsel %vm2635, %v2634, %v2353
      %vm2652 = vcmask 97280
      %v2654 = vsel %vm2652, %v2637, %v2387
      %v2656 = vsel %vm2652, %v2639, %v2389
      %v2658 = vsel %vm2652, %v2641, %v2391
      %v2660 = vsel %vm2652, %v2643, %v2393
      %v2662 = vsel %vm2652, %v2645, %v2395
      %v2664 = vsel %vm2652, %v2647, %v2397
      %v2666 = vsel %vm2652, %v2649, %v2399
      %v2668 = vsel %vm2652, %v2651, %v2401
      %v2670 = vsel %vm499, %v2654, %v2427
      %v2672 = vsel %vm499, %v2656, %v2429
      %v2674 = vsel %vm499, %v2658, %v2431
      %v2676 = vsel %vm499, %v2660, %v2433
      %v2678 = vsel %vm499, %v2662, %v2435
      %v2680 = vsel %vm499, %v2664, %v2437
      %v2682 = vsel %vm499, %v2666, %v2439
      %v2684 = vsel %vm499, %v2668, %v2441
      %vm2685 = vcmask 162816
      %v2687 = vsel %vm2685, %v2670, %v2467
      %v2689 = vsel %vm2685, %v2672, %v2469
      %v2691 = vsel %vm2685, %v2674, %v2471
      %v2693 = vsel %vm2685, %v2676, %v2473
      %v2695 = vsel %vm2685, %v2678, %v2475
      %v2697 = vsel %vm2685, %v2680, %v2477
      %v2699 = vsel %vm2685, %v2682, %v2479
      %v2701 = vsel %vm2685, %v2684, %v2481
      %vm2702 = vcmask 195584
      %v2704 = vsel %vm2702, %v2687, %v2515
      %v2706 = vsel %vm2702, %v2689, %v2517
      %v2708 = vsel %vm2702, %v2691, %v2519
      %v2710 = vsel %vm2702, %v2693, %v2521
      %v2712 = vsel %vm2702, %v2695, %v2523
      %v2714 = vsel %vm2702, %v2697, %v2525
      %v2716 = vsel %vm2702, %v2699, %v2527
      %v2718 = vsel %vm2702, %v2701, %v2529
      %vm2719 = vcmask 228352
      %v2721 = vsel %vm2719, %v2704, %v2555
      %v2723 = vsel %vm2719, %v2706, %v2557
      %v2725 = vsel %vm2719, %v2708, %v2559
      %v2727 = vsel %vm2719, %v2710, %v2561
      %v2729 = vsel %vm2719, %v2712, %v2563
      %v2731 = vsel %vm2719, %v2714, %v2565
      %v2733 = vsel %vm2719, %v2716, %v2567
      %v2735 = vsel %vm2719, %v2718, %v2569
      %vm2736 = vcmask 261120
      %v2738 = vsel %vm2736, %v2721, %v2595
      %v2740 = vsel %vm2736, %v2723, %v2597
      %v2742 = vsel %vm2736, %v2725, %v2599
      %v2744 = vsel %vm2736, %v2727, %v2601
      %v2746 = vsel %vm2736, %v2729, %v2603
      %v2748 = vsel %vm2736, %v2731, %v2605
      %v2750 = vsel %vm2736, %v2733, %v2607
      %v2752 = vsel %vm2736, %v2735, %v2609
      %v2753 = vld [vmem:[%s6] sm:$0xf]
      %v2754 = vld [vmem:[%s6 + $0x4] sm:$0xf]
      %v2755 = vld [vmem:[%s6 + $0x8] sm:$0xf]
      %v2756 = vld [vmem:[%s6 + $0xc] sm:$0xf]
      %v2757 = vld [vmem:[%s6 + $0x10] sm:$0x3]
      %v2763 = vunpack.c.l.b16 %v2753
      %v2764 = vunpack.c.l.b16 %v2754
      %v2765 = vunpack.c.l.b16 %v2755
      %v2766 = vunpack.c.l.b16 %v2756
      %v2767 = vunpack.c.l.b16 %v2757
      %v2768 = vpack.c.b16 %v2764, %v2763
      %v2769 = vpack.c.b16 %v2766, %v2765
      %v2770 = vpack.c.b16 %v2767, %v2767
      %vm2773 = vcmask 293888
      %v2774 = vsel %vm2773, %v2738, 0
      %v2776 = vsel %vm2773, %v2740, 0
      %v2778 = vsel %vm2773, %v2742, 0
      %v2780 = vsel %vm2773, %v2744, 0
      %v2782 = vsel %vm2773, %v2746, 0
      %v2784 = vsel %vm2773, %v2748, 0
      %v2786 = vsel %vm2773, %v2750, 0
      %v2788 = vsel %vm2773, %v2752, 0
      %vm2790 = vcmask 1041408
      %v2792 = vsel %vm2790, %v2770, 0
      %2794 = vmatprep.subr.bf16.mxu0 0
      %2795 = vmatpush1.bf16.msra.mxu0 %v2768
      %2796 = vmatprep.subr.bf16.mxu0 0
      %2797 = vmatpush1.bf16.msra.mxu0 %v2769
      %2798 = vmatprep.subr.bf16.mxu0 0
      %2799 = vmatpush1.bf16.msra.mxu0 %v2792
      %2800 = vmatprep.subr.bf16.mxu0 0
      %2801 = vmatpush1.bf16.msra.mxu0 0
      %2802 = vmatprep.subr.bf16.mxu0 0
      %2803 = vmatpush1.bf16.msra.mxu0 0
      %2804 = vmatprep.subr.bf16.mxu0 0
      %2805 = vmatpush1.bf16.msra.mxu0 0
      %2806 = vmatprep.subr.bf16.mxu0 0
      %2807 = vmatpush1.bf16.msra.mxu0 0
      %2808 = vmatprep.subr.bf16.mxu0 0
      %2809 = vmatpush1.bf16.msra.mxu0 0
      %2810 = vmatprep.subr.bf16.mxu0 0
      %2811 = vmatpush1.bf16.msra.mxu0 0
      %2812 = vmatprep.subr.bf16.mxu0 0
      %2813 = vmatpush1.bf16.msra.mxu0 0
      %2814 = vmatprep.subr.bf16.mxu0 0
      %2815 = vmatpush1.bf16.msra.mxu0 0
      %2816 = vmatprep.subr.bf16.mxu0 0
      %2817 = vmatpush1.bf16.msra.mxu0 0
      %2818 = vmatprep.subr.bf16.mxu0 0
      %2819 = vmatpush1.bf16.msra.mxu0 0
      %2820 = vmatprep.subr.bf16.mxu0 0
      %2821 = vmatpush1.bf16.msra.mxu0 0
      %2822 = vmatprep.subr.bf16.mxu0 0
      %2823 = vmatpush1.bf16.msra.mxu0 0
      %2824 = vmatprep.subr.bf16.mxu0 0
      %2825 = vmatpush1.bf16.msra.mxu0 0
      %2826 = vmatprep.mubr.bf16.mxu0 0
      %2827 = vmatmul.mubr.bf16.gmra.mrb[0].mxu0 %v2774
      %v2828 = vpop.f32.mrb[0].mxu0
      %v2829 = vadd.f32 0.0, %v2828
      %v2830 = vpop.f32.mrb[0].mxu0
      %v2831 = vpop.f32.mrb[0].mxu0
      %v2832 = vadd.f32 0.0, %v2831
      %v2833 = vpop.f32.mrb[0].mxu0
      %2834 = vmatprep.mubr.bf16.mxu0 0
      %2835 = vmatmul.mubr.bf16.gmra.mrb[0].mxu0 %v2776
      %v2836 = vpop.f32.mrb[0].mxu0
      %v2837 = vadd.f32 0.0, %v2836
      %v2838 = vpop.f32.mrb[0].mxu0
      %v2839 = vpop.f32.mrb[0].mxu0
      %v2840 = vadd.f32 0.0, %v2839
      %v2841 = vpop.f32.mrb[0].mxu0
      %2842 = vmatprep.mubr.bf16.mxu0 0
      %2843 = vmatmul.mubr.bf16.gmra.mrb[0].mxu0 %v2778
      %v2844 = vpop.f32.mrb[0].mxu0
      %v2845 = vadd.f32 0.0, %v2844
      %v2846 = vpop.f32.mrb[0].mxu0
      %v2847 = vpop.f32.mrb[0].mxu0
      %v2848 = vadd.f32 0.0, %v2847
      %v2849 = vpop.f32.mrb[0].mxu0
      %2850 = vmatprep.mubr.bf16.mxu0 0
      %2851 = vmatmul.mubr.bf16.gmra.mrb[0].mxu0 %v2780
      %v2852 = vpop.f32.mrb[0].mxu0
      %v2853 = vadd.f32 0.0, %v2852
      %v2854 = vpop.f32.mrb[0].mxu0
      %v2855 = vpop.f32.mrb[0].mxu0
      %v2856 = vadd.f32 0.0, %v2855
      %v2857 = vpop.f32.mrb[0].mxu0
      %2858 = vmatprep.mubr.bf16.mxu0 0
      %2859 = vmatmul.mubr.bf16.gmra.mrb[0].mxu0 %v2782
      %v2860 = vpop.f32.mrb[0].mxu0
      %v2861 = vadd.f32 0.0, %v2860
      %v2862 = vpop.f32.mrb[0].mxu0
      %v2863 = vpop.f32.mrb[0].mxu0
      %v2864 = vadd.f32 0.0, %v2863
      %v2865 = vpop.f32.mrb[0].mxu0
      %2866 = vmatprep.mubr.bf16.mxu0 0
      %2867 = vmatmul.mubr.bf16.gmra.mrb[0].mxu0 %v2784
      %v2868 = vpop.f32.mrb[0].mxu0
      %v2869 = vadd.f32 0.0, %v2868
      %v2870 = vpop.f32.mrb[0].mxu0
      %v2871 = vpop.f32.mrb[0].mxu0
      %v2872 = vadd.f32 0.0, %v2871
      %v2873 = vpop.f32.mrb[0].mxu0
      %2874 = vmatprep.mubr.bf16.mxu0 0
      %2875 = vmatmul.mubr.bf16.gmra.mrb[0].mxu0 %v2786
      %v2876 = vpop.f32.mrb[0].mxu0
      %v2877 = vadd.f32 0.0, %v2876
      %v2878 = vpop.f32.mrb[0].mxu0
      %v2879 = vpop.f32.mrb[0].mxu0
      %v2880 = vadd.f32 0.0, %v2879
      %v2881 = vpop.f32.mrb[0].mxu0
      %2882 = vmatprep.mubr.bf16.mxu0 0
      %2883 = vmatmul.mubr.bf16.gmra.mrb[0].mxu0 %v2788
      %v2884 = vpop.f32.mrb[0].mxu0
      %v2885 = vadd.f32 0.0, %v2884
      %v2886 = vpop.f32.mrb[0].mxu0
      %v2887 = vpop.f32.mrb[0].mxu0
      %v2888 = vadd.f32 0.0, %v2887
      %v2889 = vpop.f32.mrb[0].mxu0
      %2890 = vdwg.mxu0
      %v2891 = vld [vmem:[%s7] sm:$0x1]
      %v2893 = vlaneseq
      %v2894 = vshrl.u32 %v2893, 7
      %v2895 = vsub.s32 0, %v2894
      %v2896 = vrot.slane %v2891, %v2895
      %v2898 = vmul.f32 %v2829, %v2896
      %v2899 = vmul.f32 %v2832, %v2896
      %v2900 = vmul.f32 %v2837, %v2896
      %v2901 = vmul.f32 %v2840, %v2896
      %v2902 = vmul.f32 %v2845, %v2896
      %v2903 = vmul.f32 %v2848, %v2896
      %v2904 = vmul.f32 %v2853, %v2896
      %v2905 = vmul.f32 %v2856, %v2896
      %v2906 = vmul.f32 %v2861, %v2896
      %v2907 = vmul.f32 %v2864, %v2896
      %v2908 = vmul.f32 %v2869, %v2896
      %v2909 = vmul.f32 %v2872, %v2896
      %v2910 = vmul.f32 %v2877, %v2896
      %v2911 = vmul.f32 %v2880, %v2896
      %v2912 = vmul.f32 %v2885, %v2896
      %v2913 = vmul.f32 %v2888, %v2896
      %v2914 = vld [vmem:[%s8] sm:$0x1]
      %v2916 = vlaneseq
      %v2917 = vshrl.u32 %v2916, 7
      %v2918 = vsub.s32 0, %v2917
      %v2919 = vrot.slane %v2914, %v2918
      %v2921 = vadd.f32 %v2898, %v2919
      %v2922 = vadd.f32 %v2899, %v2919
      %v2923 = vadd.f32 %v2900, %v2919
      %v2924 = vadd.f32 %v2901, %v2919
      %v2925 = vadd.f32 %v2902, %v2919
      %v2926 = vadd.f32 %v2903, %v2919
      %v2927 = vadd.f32 %v2904, %v2919
      %v2928 = vadd.f32 %v2905, %v2919
      %v2929 = vadd.f32 %v2906, %v2919
      %v2930 = vadd.f32 %v2907, %v2919
      %v2931 = vadd.f32 %v2908, %v2919
      %v2932 = vadd.f32 %v2909, %v2919
      %v2933 = vadd.f32 %v2910, %v2919
      %v2934 = vadd.f32 %v2911, %v2919
      %v2935 = vadd.f32 %v2912, %v2919
      %v2936 = vadd.f32 %v2913, %v2919
      %v2937 = vmax.f32 %v2921, 0.0
      %v2938 = vmax.f32 %v2922, 0.0
      %v2939 = vmax.f32 %v2923, 0.0
      %v2940 = vmax.f32 %v2924, 0.0
      %v2941 = vmax.f32 %v2925, 0.0
      %v2942 = vmax.f32 %v2926, 0.0
      %v2943 = vmax.f32 %v2927, 0.0
      %v2944 = vmax.f32 %v2928, 0.0
      %v2945 = vmax.f32 %v2929, 0.0
      %v2946 = vmax.f32 %v2930, 0.0
      %v2947 = vmax.f32 %v2931, 0.0
      %v2948 = vmax.f32 %v2932, 0.0
      %v2949 = vmax.f32 %v2933, 0.0
      %v2950 = vmax.f32 %v2934, 0.0
      %v2951 = vmax.f32 %v2935, 0.0
      %v2952 = vmax.f32 %v2936, 0.0
      %v2953 = vpack.c.bf16 %v2938, %v2937
      %v2954 = vpack.c.bf16 %v2940, %v2939
      %v2955 = vpack.c.bf16 %v2942, %v2941
      %v2956 = vpack.c.bf16 %v2944, %v2943
      %v2957 = vpack.c.bf16 %v2946, %v2945
      %v2958 = vpack.c.bf16 %v2948, %v2947
      %v2959 = vpack.c.bf16 %v2950, %v2949
      %v2960 = vpack.c.bf16 %v2952, %v2951
      %v2961 = vld [vmem:[%s9] sm:$0x3]
      %v2962 = vld [vmem:[%s388] sm:$0xf]
      %v2963 = vld [vmem:[%s388 + $0x4] sm:$0xf]
      %v2964 = vld [vmem:[%s388 + $0x8] sm:$0xf]
      %v2965 = vld [vmem:[%s388 + $0xc] sm:$0xf]
      %v2966 = vld [vmem:[%s388 + $0x10] sm:$0xf]
      %v2967 = vld [vmem:[%s388 + $0x14] sm:$0xf]
      %v2968 = vld [vmem:[%s388 + $0x18] sm:$0xf]
      %v2969 = vld [vmem:[%s388 + $0x1c] sm:$0xf]
      %v2970 = vld [vmem:[%s388 + $0x20] sm:$0xf]
      %v2971 = vld [vmem:[%s388 + $0x24] sm:$0xf]
      %v2972 = vld [vmem:[%s388 + $0x28] sm:$0xf]
      %v2973 = vld [vmem:[%s388 + $0x2c] sm:$0xf]
      %v2974 = vld [vmem:[%s388 + $0x30] sm:$0xf]
      %v2975 = vld [vmem:[%s388 + $0x34] sm:$0xf]
      %v2976 = vld [vmem:[%s388 + $0x38] sm:$0xf]
      %v2977 = vld [vmem:[%s388 + $0x3c] sm:$0xf]
      %v2978 = vunpack.c.l.bf16 %v2962
      %v2979 = vunpack.c.l.bf16 %v2963
      %v2980 = vunpack.c.l.bf16 %v2964
      %v2981 = vunpack.c.l.bf16 %v2965
      %v2982 = vunpack.c.l.bf16 %v2966
      %v2983 = vunpack.c.l.bf16 %v2967
      %v2984 = vunpack.c.l.bf16 %v2968
      %v2985 = vunpack.c.l.bf16 %v2969
      %v2986 = vunpack.c.l.bf16 %v2970
      %v2987 = vunpack.c.l.bf16 %v2971
      %v2988 = vunpack.c.l.bf16 %v2972
      %v2989 = vunpack.c.l.bf16 %v2973
      %v2990 = vunpack.c.l.bf16 %v2974
      %v2991 = vunpack.c.l.bf16 %v2975
      %v2992 = vunpack.c.l.bf16 %v2976
      %v2993 = vunpack.c.l.bf16 %v2977
      %v2995 = vsel %vm2610, %v2953, 0
      %v2998 = vsel %vm2610, %v2954, 0
      %v3001 = vsel %vm2610, %v2955, 0
      %v3004 = vsel %vm2610, %v2956, 0
      %v3007 = vsel %vm2610, %v2957, 0
      %v3010 = vsel %vm2610, %v2958, 0
      %v3013 = vsel %vm2610, %v2959, 0
      %v3016 = vsel %vm2610, %v2960, 0
      %v3019 = vsel %vm2790, %v2961, 0
      %3021 = vmatprep.subr.bf16.mxu0 0
      %3022 = vmatpush1.bf16.msra.mxu0 %v3019
      %3023 = vmatprep.subr.bf16.mxu0 0
      %3024 = vmatpush1.bf16.msra.mxu0 0
      %3025 = vmatprep.subr.bf16.mxu0 0
      %3026 = vmatpush1.bf16.msra.mxu0 0
      %3027 = vmatprep.subr.bf16.mxu0 0
      %3028 = vmatpush1.bf16.msra.mxu0 0
      %3029 = vmatprep.subr.bf16.mxu0 0
      %3030 = vmatpush1.bf16.msra.mxu0 0
      %3031 = vmatprep.subr.bf16.mxu0 0
      %3032 = vmatpush1.bf16.msra.mxu0 0
      %3033 = vmatprep.subr.bf16.mxu0 0
      %3034 = vmatpush1.bf16.msra.mxu0 0
      %3035 = vmatprep.subr.bf16.mxu0 0
      %3036 = vmatpush1.bf16.msra.mxu0 0
      %3037 = vmatprep.subr.bf16.mxu0 0
      %3038 = vmatpush1.bf16.msra.mxu0 0
      %3039 = vmatprep.subr.bf16.mxu0 0
      %3040 = vmatpush1.bf16.msra.mxu0 0
      %3041 = vmatprep.subr.bf16.mxu0 0
      %3042 = vmatpush1.bf16.msra.mxu0 0
      %3043 = vmatprep.subr.bf16.mxu0 0
      %3044 = vmatpush1.bf16.msra.mxu0 0
      %3045 = vmatprep.subr.bf16.mxu0 0
      %3046 = vmatpush1.bf16.msra.mxu0 0
      %3047 = vmatprep.subr.bf16.mxu0 0
      %3048 = vmatpush1.bf16.msra.mxu0 0
      %3049 = vmatprep.subr.bf16.mxu0 0
      %3050 = vmatpush1.bf16.msra.mxu0 0
      %3051 = vmatprep.subr.bf16.mxu0 0
      %3052 = vmatpush1.bf16.msra.mxu0 0
      %3053 = vmatprep.mubr.bf16.mxu0 0
      %3054 = vmatmul.mubr.bf16.gmra.mrb[0].mxu0 %v2995
      %v3055 = vpop.f32.mrb[0].mxu0
      %v3056 = vadd.f32 %v2978, %v3055
      %v3057 = vpop.f32.mrb[0].mxu0
      %v3058 = vpop.f32.mrb[0].mxu0
      %v3059 = vadd.f32 %v2979, %v3058
      %v3060 = vpop.f32.mrb[0].mxu0
      %3061 = vmatprep.mubr.bf16.mxu0 0
      %3062 = vmatmul.mubr.bf16.gmra.mrb[0].mxu0 %v2998
      %v3063 = vpop.f32.mrb[0].mxu0
      %v3064 = vadd.f32 %v2980, %v3063
      %v3065 = vpop.f32.mrb[0].mxu0
      %v3066 = vpop.f32.mrb[0].mxu0
      %v3067 = vadd.f32 %v2981, %v3066
      %v3068 = vpop.f32.mrb[0].mxu0
      %3069 = vmatprep.mubr.bf16.mxu0 0
      %3070 = vmatmul.mubr.bf16.gmra.mrb[0].mxu0 %v3001
      %v3071 = vpop.f32.mrb[0].mxu0
      %v3072 = vadd.f32 %v2982, %v3071
      %v3073 = vpop.f32.mrb[0].mxu0
      %v3074 = vpop.f32.mrb[0].mxu0
      %v3075 = vadd.f32 %v2983, %v3074
      %v3076 = vpop.f32.mrb[0].mxu0
      %3077 = vmatprep.mubr.bf16.mxu0 0
      %3078 = vmatmul.mubr.bf16.gmra.mrb[0].mxu0 %v3004
      %v3079 = vpop.f32.mrb[0].mxu0
      %v3080 = vadd.f32 %v2984, %v3079
      %v3081 = vpop.f32.mrb[0].mxu0
      %v3082 = vpop.f32.mrb[0].mxu0
      %v3083 = vadd.f32 %v2985, %v3082
      %v3084 = vpop.f32.mrb[0].mxu0
      %3085 = vmatprep.mubr.bf16.mxu0 0
      %3086 = vmatmul.mubr.bf16.gmra.mrb[0].mxu0 %v3007
      %v3087 = vpop.f32.mrb[0].mxu0
      %v3088 = vadd.f32 %v2986, %v3087
      %v3089 = vpop.f32.mrb[0].mxu0
      %v3090 = vpop.f32.mrb[0].mxu0
      %v3091 = vadd.f32 %v2987, %v3090
      %v3092 = vpop.f32.mrb[0].mxu0
      %3093 = vmatprep.mubr.bf16.mxu0 0
      %3094 = vmatmul.mubr.bf16.gmra.mrb[0].mxu0 %v3010
      %v3095 = vpop.f32.mrb[0].mxu0
      %v3096 = vadd.f32 %v2988, %v3095
      %v3097 = vpop.f32.mrb[0].mxu0
      %v3098 = vpop.f32.mrb[0].mxu0
      %v3099 = vadd.f32 %v2989, %v3098
      %v3100 = vpop.f32.mrb[0].mxu0
      %3101 = vmatprep.mubr.bf16.mxu0 0
      %3102 = vmatmul.mubr.bf16.gmra.mrb[0].mxu0 %v3013
      %v3103 = vpop.f32.mrb[0].mxu0
      %v3104 = vadd.f32 %v2990, %v3103
      %v3105 = vpop.f32.mrb[0].mxu0
      %v3106 = vpop.f32.mrb[0].mxu0
      %v3107 = vadd.f32 %v2991, %v3106
      %v3108 = vpop.f32.mrb[0].mxu0
      %3109 = vmatprep.mubr.bf16.mxu0 0
      %3110 = vmatmul.mubr.bf16.gmra.mrb[0].mxu0 %v3016
      %v3111 = vpop.f32.mrb[0].mxu0
      %v3112 = vadd.f32 %v2992, %v3111
      %v3113 = vpop.f32.mrb[0].mxu0
      %v3114 = vpop.f32.mrb[0].mxu0
      %v3115 = vadd.f32 %v2993, %v3114
      %v3116 = vpop.f32.mrb[0].mxu0
      %3117 = vdwg.mxu0
      %v3118 = vpack.c.bf16 %v3059, %v3056
      %v3119 = vpack.c.bf16 %v3067, %v3064
      %v3120 = vpack.c.bf16 %v3075, %v3072
      %v3121 = vpack.c.bf16 %v3083, %v3080
      %v3122 = vpack.c.bf16 %v3091, %v3088
      %v3123 = vpack.c.bf16 %v3099, %v3096
      %v3124 = vpack.c.bf16 %v3107, %v3104
      %v3125 = vpack.c.bf16 %v3115, %v3112
      %v3134 = vunpack.c.l.b16 %v3118
      %v3135 = vunpack.c.h.b16 %v3118
      %v3136 = vunpack.c.l.b16 %v3119
      %v3137 = vunpack.c.h.b16 %v3119
      %v3138 = vunpack.c.l.b16 %v3120
      %v3139 = vunpack.c.h.b16 %v3120
      %v3140 = vunpack.c.l.b16 %v3121
      %v3141 = vunpack.c.h.b16 %v3121
      %v3142 = vunpack.c.l.b16 %v3122
      %v3143 = vunpack.c.h.b16 %v3122
      %v3144 = vunpack.c.l.b16 %v3123
      %v3145 = vunpack.c.h.b16 %v3123
      %v3146 = vunpack.c.l.b16 %v3124
      %v3147 = vunpack.c.h.b16 %v3124
      %v3148 = vunpack.c.l.b16 %v3125
      %v3149 = vunpack.c.h.b16 %v3125
      %v3150 = vpack.c.b16 %v3134, %v3134
      %v3151 = vpack.c.b16 %v3135, %v3135
      %v3152 = vpack.c.b16 %v3136, %v3136
      %v3153 = vpack.c.b16 %v3137, %v3137
      %v3154 = vpack.c.b16 %v3138, %v3138
      %v3155 = vpack.c.b16 %v3139, %v3139
      %v3156 = vpack.c.b16 %v3140, %v3140
      %v3157 = vpack.c.b16 %v3141, %v3141
      %v3158 = vpack.c.b16 %v3142, %v3142
      %v3159 = vpack.c.b16 %v3143, %v3143
      %v3160 = vpack.c.b16 %v3144, %v3144
      %v3161 = vpack.c.b16 %v3145, %v3145
      %v3162 = vpack.c.b16 %v3146, %v3146
      %v3163 = vpack.c.b16 %v3147, %v3147
      %v3164 = vpack.c.b16 %v3148, %v3148
      %v3165 = vpack.c.b16 %v3149, %v3149
      %vm3182 = vcmask 125952
      %3183 = vst.msk [vmem:[%s381] sm:$0xf] %vm3182, %v3150
      %3184 = vst.msk [vmem:[%s381 + $0x4] sm:$0xf] %vm3182, %v3151
      %3185 = vst.msk [vmem:[%s381 + $0x8] sm:$0xf] %vm3182, %v3152
      %3186 = vst.msk [vmem:[%s381 + $0xc] sm:$0xf] %vm3182, %v3153
      %3187 = vst.msk [vmem:[%s381 + $0x10] sm:$0xf] %vm3182, %v3154
      %3188 = vst.msk [vmem:[%s381 + $0x14] sm:$0xf] %vm3182, %v3155
      %3189 = vst.msk [vmem:[%s381 + $0x18] sm:$0xf] %vm3182, %v3156
      %3190 = vst.msk [vmem:[%s381 + $0x1c] sm:$0xf] %vm3182, %v3157
      %3191 = vst.msk [vmem:[%s381 + $0x20] sm:$0xf] %vm3182, %v3158
      %3192 = vst.msk [vmem:[%s381 + $0x24] sm:$0xf] %vm3182, %v3159
      %3193 = vst.msk [vmem:[%s381 + $0x28] sm:$0xf] %vm3182, %v3160
      %3194 = vst.msk [vmem:[%s381 + $0x2c] sm:$0xf] %vm3182, %v3161
      %3195 = vst.msk [vmem:[%s381 + $0x30] sm:$0xf] %vm3182, %v3162
      %3196 = vst.msk [vmem:[%s381 + $0x34] sm:$0xf] %vm3182, %v3163
      %3197 = vst.msk [vmem:[%s381 + $0x38] sm:$0xf] %vm3182, %v3164
      %3198 = vst.msk [vmem:[%s381 + $0x3c] sm:$0xf] %vm3182, %v3165
      %s3199 = smul.u32 16, %s26
      %p3200 = scmp.lt.s32.totalorder %s25, 1
      %s3201 = scalar_select %p3200, %s25, 1
      %p3202 = scmp.lt.s32.totalorder %s3199, 31
      %s3203 = scalar_select %p3202, %s3199, 31
      %s3204 = smul.addr %s3201, 32
      %s3205 = sadd.s32 %s3203, %s3204
      %s3206 = smul.addr %s3205, 4
      %s3207 = scalar_lea.vmem %s10, %s3206
      // Predicated region
      $region77: #{tpu_custom_call.1} parent=59 // pred_check
        %p3208 = pneg %p268
      $region78: #{tpu_custom_call.1} parent=59 // pred_check_branch
        %3210 = sbr.rel (%p3208) target = $region80
      $region79: #{tpu_custom_call.1} parent=59 // pred_region
        %s3211 = smul.u32 16, %s26
      $region80: #{tpu_custom_call.1} parent=59 // pred_fallthru
        _
    $region60: #{tpu_custom_call.1} parent=5 // pred_fallthru
      _
    %p3212 = scmp.le.s32.totalorder 2, %s16
    // Predicated region
    $region81: #{tpu_custom_call.1} parent=5 // pred_check
      %p3213 = pneg %p3212
    $region82: #{tpu_custom_call.1} parent=5 // pred_check_branch
      %3215 = sbr.rel (%p3213) target = $region84
    $region83: #{tpu_custom_call.1} parent=5 // pred_region
      %s3216 = ssub.s32 %s16, 2
      // Predicated region
      $region85: #{tpu_custom_call.1} parent=83 // pred_check
        %p3217 = pneg %p274
      $region86: #{tpu_custom_call.1} parent=83 // pred_check_branch
        %3219 = sbr.rel (%p3217) target = $region88
      $region87: #{tpu_custom_call.1} parent=83 // pred_region
        %s3220 = smul.u32 16, %s28
        %p3221 = scmp.lt.s32.totalorder %s27, 1
        %s3222 = scalar_select %p3221, %s27, 1
        %p3223 = scmp.lt.s32.totalorder %s3220, 31
        %s3224 = scalar_select %p3223, %s3220, 31
        %s3225 = smul.addr %s3222, 32
        %s3226 = sadd.s32 %s3224, %s3225
        %s3227 = smul.addr %s3226, 4
        %s3228 = scalar_lea.vmem %s10, %s3227
      $region88: #{tpu_custom_call.1} parent=83 // pred_fallthru
        _
    $region84: #{tpu_custom_call.1} parent=5 // pred_fallthru
      _
  $region6: #{tpu_custom_call.1} parent=0 // loop_footer
    %s20 = sadd.s32 1, %s16
  $region7: #{tpu_custom_call.1} parent=0 // loop_footer_branch
    %15 = sbr.rel target = $region3
  $region8: #{tpu_custom_call.1} parent=0 // loop_exit
    _

</llo_original>
